<compile_context>
chip_gen: v7x
topology: tpu7x:2x2x1
jax: 0.10.0
libtpu: 0.0.40
codegen_flags: <defaults>
</compile_context>

<pallas_src>
import jax
import jax.numpy as jnp
import numpy as np
from jax import lax
from jax.experimental import pallas as pl
from jax.experimental.pallas import tpu as pltpu


# -----------------------------------------------------------------------------
# Fused forward kernel for ONE image (grid = (N,)).
# -----------------------------------------------------------------------------
def cnn_kernel(x_ref, w1_ref, b1_ref, w2_ref, b2_ref, wf_ref, bf_ref, o_ref,
               h1_ref, pb1_ref, pb2_ref):
    # x_ref : (1, 36, 36, 1)  spatially pre-padded input   [H lead, W sub, C lane]
    # w1_ref: (25, 64)        conv1 taps  (dh*5+dw, cout)
    # b1_ref: (1, 64)
    # w2_ref: (5, 320, 32)    conv2 taps  (dh, dw*64+cin, cout)   K folded over (dw,cin)
    # b2_ref: (1, 32)
    # wf_ref: (2048, 36)      FC weights permuted to NHWC flatten order
    # bf_ref: (1, 36)
    # o_ref : (1, 1, 36)      softmax output for this image
    # h1_ref: (20, 32, 64)    pooled conv1 act., zero border; valid W cols are 8..23
    #                         (conv2 halo lives at cols 6..7 / 24..25, rows 0..1 / 18..19)
    # pb1_ref: (1, 32, 64)    conv1 W-pool staging
    # pb2_ref: (1, 16, 32)    conv2 W-pool staging
    f32 = jnp.float32

    # ------------------ conv1 (5x5, pad 2) + ReLU + 2x2 maxpool ------------------
    h1_ref[...] = jnp.zeros_like(h1_ref)          # zero border == conv2 padding

    def conv1_tile(i, carry):
        # conv output rows 2i, 2i+1  ->  pooled row i   (i = 0..15)
        acc = jnp.zeros((2, 32, 64), f32)
        for dh in range(5):                       # Cin == 1: 25 VPU broadcast mul-adds
            for dw in range(5):
                xs = x_ref[0, pl.ds(2 * i + dh, 2), dw:dw + 32, :]     # (2,32,1)
                k = dh * 5 + dw
                acc = acc + xs * w1_ref[k:k + 1, :]                    # -> (2,32,64)
        acc = jnp.maximum(acc + b1_ref[...], 0.0)
        hmax = jnp.maximum(acc[0:1], acc[1:2])                         # pool H  (1,32,64)
        pb1_ref[...] = hmax
        pooled = jnp.maximum(pb1_ref[:, pl.ds(0, 16, 2), :],
                             pb1_ref[:, pl.ds(1, 16, 2), :])           # pool W  (1,16,64)
        h1_ref[pl.ds(2 + i, 1), pl.ds(8, 16), :] = pooled              # aligned store
        return carry

    lax.fori_loop(0, 16, conv1_tile, 0)

    # -------- conv2 (5x5, pad 2) + ReLU + 2x2 maxpool + FC accumulation ----------
    def conv2_tile(t, logits):
        # conv2 output rows 2t, 2t+1  ->  pooled row t ; FC rows t*256 .. t*256+255
        acc = jnp.zeros((2, 16, 32), f32)
        for dh in range(5):
            parts = [h1_ref[pl.ds(2 * t + dh, 2), pl.ds(6 + dw, 16), :]
                     for dw in range(5)]                               # 5 x (2,16,64)
            patch = jnp.concatenate(parts, axis=-1)                    # (2,16,320)
            acc = acc + jnp.dot(patch.reshape(32, 320), w2_ref[dh],
                                preferred_element_type=f32).reshape(2, 16, 32)
        acc = jnp.maximum(acc + b2_ref[...], 0.0)
        hmax = jnp.maximum(acc[0:1], acc[1:2])                         # pool H  (1,16,32)
        pb2_ref[...] = hmax
        pooled = jnp.maximum(pb2_ref[:, pl.ds(0, 8, 2), :],
                             pb2_ref[:, pl.ds(1, 8, 2), :])            # pool W  (1,8,32)
        # flatten pooled row t in (w, c) order -> (1,256) and accumulate the FC
        pieces = [pooled[0, w:w + 1, :] for w in range(8)]
        flat = jnp.concatenate(pieces, axis=-1)                        # (1,256)
        wf_blk = wf_ref[pl.ds(pl.multiple_of(t * 256, 256), 256), :]   # (256,36)
        return logits + jnp.dot(flat, wf_blk, preferred_element_type=f32)

    logits = lax.fori_loop(0, 8, conv2_tile, bf_ref[...].astype(f32))  # (1,36)

    # ------------------------------- softmax -------------------------------------
    m = jnp.max(logits, axis=-1, keepdims=True)
    e = jnp.exp(logits - m)
    o_ref[0] = (e / jnp.sum(e, axis=-1, keepdims=True)).astype(o_ref.dtype)


# -----------------------------------------------------------------------------
# Wrapper: one fused pallas_call over the batch.
# -----------------------------------------------------------------------------
def cnn_pallas(x, w1_flat, b1, w2_fold, b2, wf_nhwc, bf):
    N = x.size // (32 * 32)
    # torch: x.view(-1, 1, 32, 32); with C == 1, NCHW and NHWC have identical layout.
    xi = x.reshape(N, 32, 32, 1).astype(jnp.float32)
    xi = jnp.pad(xi, ((0, 0), (2, 2), (2, 2), (0, 0)))                 # (N,36,36,1)

    out = pl.pallas_call(
        cnn_kernel,
        out_shape=jax.ShapeDtypeStruct((N, 1, 36), jnp.float32),
        grid_spec=pltpu.PrefetchScalarGridSpec(
            num_scalar_prefetch=0,
            grid=(N,),
            in_specs=[
                pl.BlockSpec((1, 36, 36, 1), lambda n: (n, 0, 0, 0)),
                pl.BlockSpec((25, 64), lambda n: (0, 0)),
                pl.BlockSpec((1, 64), lambda n: (0, 0)),
                pl.BlockSpec((5, 320, 32), lambda n: (0, 0, 0)),
                pl.BlockSpec((1, 32), lambda n: (0, 0)),
                pl.BlockSpec((2048, 36), lambda n: (0, 0)),
                pl.BlockSpec((1, 36), lambda n: (0, 0)),
            ],
            out_specs=pl.BlockSpec((1, 1, 36), lambda n: (n, 0, 0)),
            scratch_shapes=[
                pltpu.VMEM((20, 32, 64), jnp.float32),   # padded pooled conv1 activation
                pltpu.VMEM((1, 32, 64), jnp.float32),    # conv1 W-pool staging
                pltpu.VMEM((1, 16, 32), jnp.float32),    # conv2 W-pool staging
            ],
        ),
        compiler_params=pltpu.CompilerParams(
            dimension_semantics=("parallel",)),          # one image per core on v7x
    )(xi, w1_flat, b1.reshape(1, 64), w2_fold, b2.reshape(1, 32),
      wf_nhwc, bf.reshape(1, 36))
    return out.reshape(N, 36)


@jax.jit
def cnn_forward(x, params):
    return cnn_pallas(x, *params)


# -----------------------------------------------------------------------------
# Pure-JAX reference (numerical sanity check).
# -----------------------------------------------------------------------------
def reference_forward(x, w1, b1, w2, b2, wf, bf):
    N = x.size // (32 * 32)
    h = x.reshape(N, 1, 32, 32).transpose(0, 2, 3, 1)
    dn = lax.conv_dimension_numbers(h.shape, w1.shape, ("NHWC", "HWIO", "NHWC"))
    h = lax.conv_general_dilated(h, w1, (1, 1), [(2, 2), (2, 2)],
                                 dimension_numbers=dn) + b1
    h = jnp.maximum(h, 0.0)
    h = lax.reduce_window(h, -jnp.inf, lax.max, (1, 2, 2, 1), (1, 2, 2, 1), "VALID")
    dn2 = lax.conv_dimension_numbers(h.shape, w2.shape, ("NHWC", "HWIO", "NHWC"))
    h = lax.conv_general_dilated(h, w2, (1, 1), [(2, 2), (2, 2)],
                                 dimension_numbers=dn2) + b2
    h = jnp.maximum(h, 0.0)
    h = lax.reduce_window(h, -jnp.inf, lax.max, (1, 2, 2, 1), (1, 2, 2, 1), "VALID")
    flat = h.transpose(0, 3, 1, 2).reshape(N, 32 * 8 * 8)   # torch NCHW flatten order
    logits = flat @ wf + bf
    return jax.nn.softmax(logits, axis=1)


def init_params(key):
    ks = jax.random.split(key, 6)

    def uniform(k, shape, fan_in):
        bound = 1.0 / np.sqrt(fan_in)
        return jax.random.uniform(k, shape, jnp.float32, -bound, bound)

    w1 = uniform(ks[0], (5, 5, 1, 64), 1 * 5 * 5)      # HWIO
    b1 = uniform(ks[1], (64,), 1 * 5 * 5)
    w2 = uniform(ks[2], (5, 5, 64, 32), 64 * 5 * 5)    # HWIO
    b2 = uniform(ks[3], (32,), 64 * 5 * 5)
    wf = uniform(ks[4], (2048, 36), 2048)              # rows in torch C*H*W flatten order
    bf = uniform(ks[5], (36,), 2048)

    # Kernel-side layouts (computed once):
    w1_flat = w1.reshape(25, 64)                       # (dh*5+dw, cout)
    w2_fold = w2.reshape(5, 5 * 64, 32)                # (dh, dw*64+cin, cout)
    # permute FC rows from torch's (c, h, w) flatten order to the kernel's (h, w, c)
    wf_nhwc = wf.reshape(32, 8, 8, 36).transpose(1, 2, 0, 3).reshape(2048, 36)

    ref_params = (w1, b1, w2, b2, wf, bf)
    pallas_params = (w1_flat, b1, w2_fold, b2, wf_nhwc, bf)
    return ref_params, pallas_params


if __name__ == "__main__":
    key = jax.random.PRNGKey(0)
    pkey, xkey = jax.random.split(key)
    (w1, b1, w2, b2, wf, bf), pallas_params = init_params(pkey)

    # batch=2, single channel, 32x32 images (the forward implies 32x32 via .view)
    x = jax.random.normal(xkey, (2, 1, 32, 32), dtype=jnp.float32)

    out = cnn_forward(x, pallas_params)
    out = jax.block_until_ready(out)

    ref = reference_forward(x, w1, b1, w2, b2, wf, bf)
    np.testing.assert_allclose(np.asarray(out), np.asarray(ref),
                               rtol=1e-4, atol=2e-5)
    assert out.shape == (2, 36)
    assert np.allclose(np.asarray(out).sum(axis=1), 1.0, atol=1e-5)

    print("KERNEL_OK")
</pallas_src>

<mosaic_0001>
module attributes {stable_mosaic.version = 11 : i64} {
  func.func @cnn_kernel(%arg0: i32, %arg1: memref<1x36x36x1xf32, #tpu.memory_space<vmem>>, %arg2: memref<25x64xf32, #tpu.memory_space<vmem>>, %arg3: memref<1x64xf32, #tpu.memory_space<vmem>>, %arg4: memref<5x320x32xf32, #tpu.memory_space<vmem>>, %arg5: memref<1x32xf32, #tpu.memory_space<vmem>>, %arg6: memref<2048x36xf32, #tpu.memory_space<vmem>>, %arg7: memref<1x36xf32, #tpu.memory_space<vmem>>, %arg8: memref<1x1x36xf32, #tpu.memory_space<vmem>>, %arg9: memref<20x32x64xf32, #tpu.memory_space<vmem>>, %arg10: memref<1x32x64xf32, #tpu.memory_space<vmem>>, %arg11: memref<1x16x32xf32, #tpu.memory_space<vmem>>) attributes {dimension_semantics = [#tpu.dimension_semantics<parallel>], iteration_bounds = array<i64: 2>, scalar_prefetch = 0 : i64, scratch_operands = 3 : i64, tpu.core_type = #tpu.core_type<tc>, window_params = [{transform_indices = @transform_0, window_bounds = array<i64: 1, 36, 36, 1>}, {pipeline_mode = #tpu.pipeline_mode<synchronous>, transform_indices = @transform_1, window_bounds = array<i64: 25, 64>}, {pipeline_mode = #tpu.pipeline_mode<synchronous>, transform_indices = @transform_2, window_bounds = array<i64: 1, 64>}, {pipeline_mode = #tpu.pipeline_mode<synchronous>, transform_indices = @transform_3, window_bounds = array<i64: 5, 320, 32>}, {pipeline_mode = #tpu.pipeline_mode<synchronous>, transform_indices = @transform_4, window_bounds = array<i64: 1, 32>}, {pipeline_mode = #tpu.pipeline_mode<synchronous>, transform_indices = @transform_5, window_bounds = array<i64: 2048, 36>}, {pipeline_mode = #tpu.pipeline_mode<synchronous>, transform_indices = @transform_6, window_bounds = array<i64: 1, 36>}, {transform_indices = @transform_7, window_bounds = array<i64: 1, 1, 36>}]} {
    %cst = arith.constant 0.000000e+00 : f32
    %0 = vector.broadcast %cst : f32 to vector<20x32x64xf32>
    %c0 = arith.constant 0 : index
    %c0_0 = arith.constant 0 : index
    %c0_1 = arith.constant 0 : index
    %1 = vector.load %arg9[%c0, %c0_0, %c0_1] : memref<20x32x64xf32, #tpu.memory_space<vmem>>, vector<20x32x64xf32>
    tpu.vector_store %arg9[%c0, %c0_0, %c0_1], %0 {strides = array<i32>} : memref<20x32x64xf32, #tpu.memory_space<vmem>>, vector<20x32x64xf32>,
    %c0_i32 = arith.constant 0 : i32
    %c16_i32 = arith.constant 16 : i32
    %2 = arith.addi %c0_i32, %c16_i32 : i32
    %c1_i32 = arith.constant 1 : i32
    scf.for %arg12 = %c0_i32 to %2 step %c1_i32  : i32 {
      %cst_13 = arith.constant 0.000000e+00 : f32
      %18 = vector.broadcast %cst_13 : f32 to vector<2x32x64xf32>
      %c2_i32 = arith.constant 2 : i32
      %19 = arith.muli %c2_i32, %arg12 : i32
      %c0_i32_14 = arith.constant 0 : i32
      %20 = arith.addi %19, %c0_i32_14 : i32
      %c0_15 = arith.constant 0 : index
      %21 = arith.index_cast %20 : i32 to index
      %c0_16 = arith.constant 0 : index
      %c0_17 = arith.constant 0 : index
      %22 = vector.load %arg1[%c0_15, %21, %c0_16, %c0_17] : memref<1x36x36x1xf32, #tpu.memory_space<vmem>>, vector<1x2x32x1xf32>
      %23 = vector.shape_cast %22 : vector<1x2x32x1xf32> to vector<2x32x1xf32>
      %c0_18 = arith.constant 0 : index
      %c0_19 = arith.constant 0 : index
      %24 = vector.load %arg2[%c0_18, %c0_19] : memref<25x64xf32, #tpu.memory_space<vmem>>, vector<1x64xf32>
      %25 = vector.shape_cast %24 : vector<1x64xf32> to vector<1x1x64xf32>
      %26 = vector.broadcast %23 : vector<2x32x1xf32> to vector<2x32x64xf32>
      %27 = vector.broadcast %25 : vector<1x1x64xf32> to vector<2x32x64xf32>
      %28 = arith.mulf %26, %27 : vector<2x32x64xf32>
      %29 = arith.addf %18, %28 : vector<2x32x64xf32>
      %c2_i32_20 = arith.constant 2 : i32
      %30 = arith.muli %c2_i32_20, %arg12 : i32
      %c0_i32_21 = arith.constant 0 : i32
      %31 = arith.addi %30, %c0_i32_21 : i32
      %c0_22 = arith.constant 0 : index
      %32 = arith.index_cast %31 : i32 to index
      %c1 = arith.constant 1 : index
      %c0_23 = arith.constant 0 : index
      %33 = vector.load %arg1[%c0_22, %32, %c1, %c0_23] : memref<1x36x36x1xf32, #tpu.memory_space<vmem>>, vector<1x2x32x1xf32>
      %34 = vector.shape_cast %33 : vector<1x2x32x1xf32> to vector<2x32x1xf32>
      %c1_24 = arith.constant 1 : index
      %c0_25 = arith.constant 0 : index
      %35 = vector.load %arg2[%c1_24, %c0_25] : memref<25x64xf32, #tpu.memory_space<vmem>>, vector<1x64xf32>
      %36 = vector.shape_cast %35 : vector<1x64xf32> to vector<1x1x64xf32>
      %37 = vector.broadcast %34 : vector<2x32x1xf32> to vector<2x32x64xf32>
      %38 = vector.broadcast %36 : vector<1x1x64xf32> to vector<2x32x64xf32>
      %39 = arith.mulf %37, %38 : vector<2x32x64xf32>
      %40 = arith.addf %29, %39 : vector<2x32x64xf32>
      %c2_i32_26 = arith.constant 2 : i32
      %41 = arith.muli %c2_i32_26, %arg12 : i32
      %c0_i32_27 = arith.constant 0 : i32
      %42 = arith.addi %41, %c0_i32_27 : i32
      %c0_28 = arith.constant 0 : index
      %43 = arith.index_cast %42 : i32 to index
      %c2 = arith.constant 2 : index
      %c0_29 = arith.constant 0 : index
      %44 = vector.load %arg1[%c0_28, %43, %c2, %c0_29] : memref<1x36x36x1xf32, #tpu.memory_space<vmem>>, vector<1x2x32x1xf32>
      %45 = vector.shape_cast %44 : vector<1x2x32x1xf32> to vector<2x32x1xf32>
      %c2_30 = arith.constant 2 : index
      %c0_31 = arith.constant 0 : index
      %46 = vector.load %arg2[%c2_30, %c0_31] : memref<25x64xf32, #tpu.memory_space<vmem>>, vector<1x64xf32>
      %47 = vector.shape_cast %46 : vector<1x64xf32> to vector<1x1x64xf32>
      %48 = vector.broadcast %45 : vector<2x32x1xf32> to vector<2x32x64xf32>
      %49 = vector.broadcast %47 : vector<1x1x64xf32> to vector<2x32x64xf32>
      %50 = arith.mulf %48, %49 : vector<2x32x64xf32>
      %51 = arith.addf %40, %50 : vector<2x32x64xf32>
      %c2_i32_32 = arith.constant 2 : i32
      %52 = arith.muli %c2_i32_32, %arg12 : i32
      %c0_i32_33 = arith.constant 0 : i32
      %53 = arith.addi %52, %c0_i32_33 : i32
      %c0_34 = arith.constant 0 : index
      %54 = arith.index_cast %53 : i32 to index
      %c3 = arith.constant 3 : index
      %c0_35 = arith.constant 0 : index
      %55 = vector.load %arg1[%c0_34, %54, %c3, %c0_35] : memref<1x36x36x1xf32, #tpu.memory_space<vmem>>, vector<1x2x32x1xf32>
      %56 = vector.shape_cast %55 : vector<1x2x32x1xf32> to vector<2x32x1xf32>
      %c3_36 = arith.constant 3 : index
      %c0_37 = arith.constant 0 : index
      %57 = vector.load %arg2[%c3_36, %c0_37] : memref<25x64xf32, #tpu.memory_space<vmem>>, vector<1x64xf32>
      %58 = vector.shape_cast %57 : vector<1x64xf32> to vector<1x1x64xf32>
      %59 = vector.broadcast %56 : vector<2x32x1xf32> to vector<2x32x64xf32>
      %60 = vector.broadcast %58 : vector<1x1x64xf32> to vector<2x32x64xf32>
      %61 = arith.mulf %59, %60 : vector<2x32x64xf32>
      %62 = arith.addf %51, %61 : vector<2x32x64xf32>
      %c2_i32_38 = arith.constant 2 : i32
      %63 = arith.muli %c2_i32_38, %arg12 : i32
      %c0_i32_39 = arith.constant 0 : i32
      %64 = arith.addi %63, %c0_i32_39 : i32
      %c0_40 = arith.constant 0 : index
      %65 = arith.index_cast %64 : i32 to index
      %c4 = arith.constant 4 : index
      %c0_41 = arith.constant 0 : index
      %66 = vector.load %arg1[%c0_40, %65, %c4, %c0_41] : memref<1x36x36x1xf32, #tpu.memory_space<vmem>>, vector<1x2x32x1xf32>
      %67 = vector.shape_cast %66 : vector<1x2x32x1xf32> to vector<2x32x1xf32>
      %c4_42 = arith.constant 4 : index
      %c0_43 = arith.constant 0 : index
      %68 = vector.load %arg2[%c4_42, %c0_43] : memref<25x64xf32, #tpu.memory_space<vmem>>, vector<1x64xf32>
      %69 = vector.shape_cast %68 : vector<1x64xf32> to vector<1x1x64xf32>
      %70 = vector.broadcast %67 : vector<2x32x1xf32> to vector<2x32x64xf32>
      %71 = vector.broadcast %69 : vector<1x1x64xf32> to vector<2x32x64xf32>
      %72 = arith.mulf %70, %71 : vector<2x32x64xf32>
      %73 = arith.addf %62, %72 : vector<2x32x64xf32>
      %c2_i32_44 = arith.constant 2 : i32
      %74 = arith.muli %c2_i32_44, %arg12 : i32
      %c1_i32_45 = arith.constant 1 : i32
      %75 = arith.addi %74, %c1_i32_45 : i32
      %c0_46 = arith.constant 0 : index
      %76 = arith.index_cast %75 : i32 to index
      %c0_47 = arith.constant 0 : index
      %c0_48 = arith.constant 0 : index
      %77 = vector.load %arg1[%c0_46, %76, %c0_47, %c0_48] : memref<1x36x36x1xf32, #tpu.memory_space<vmem>>, vector<1x2x32x1xf32>
      %78 = vector.shape_cast %77 : vector<1x2x32x1xf32> to vector<2x32x1xf32>
      %c5 = arith.constant 5 : index
      %c0_49 = arith.constant 0 : index
      %79 = vector.load %arg2[%c5, %c0_49] : memref<25x64xf32, #tpu.memory_space<vmem>>, vector<1x64xf32>
      %80 = vector.shape_cast %79 : vector<1x64xf32> to vector<1x1x64xf32>
      %81 = vector.broadcast %78 : vector<2x32x1xf32> to vector<2x32x64xf32>
      %82 = vector.broadcast %80 : vector<1x1x64xf32> to vector<2x32x64xf32>
      %83 = arith.mulf %81, %82 : vector<2x32x64xf32>
      %84 = arith.addf %73, %83 : vector<2x32x64xf32>
      %c2_i32_50 = arith.constant 2 : i32
      %85 = arith.muli %c2_i32_50, %arg12 : i32
      %c1_i32_51 = arith.constant 1 : i32
      %86 = arith.addi %85, %c1_i32_51 : i32
      %c0_52 = arith.constant 0 : index
      %87 = arith.index_cast %86 : i32 to index
      %c1_53 = arith.constant 1 : index
      %c0_54 = arith.constant 0 : index
      %88 = vector.load %arg1[%c0_52, %87, %c1_53, %c0_54] : memref<1x36x36x1xf32, #tpu.memory_space<vmem>>, vector<1x2x32x1xf32>
      %89 = vector.shape_cast %88 : vector<1x2x32x1xf32> to vector<2x32x1xf32>
      %c6 = arith.constant 6 : index
      %c0_55 = arith.constant 0 : index
      %90 = vector.load %arg2[%c6, %c0_55] : memref<25x64xf32, #tpu.memory_space<vmem>>, vector<1x64xf32>
      %91 = vector.shape_cast %90 : vector<1x64xf32> to vector<1x1x64xf32>
      %92 = vector.broadcast %89 : vector<2x32x1xf32> to vector<2x32x64xf32>
      %93 = vector.broadcast %91 : vector<1x1x64xf32> to vector<2x32x64xf32>
      %94 = arith.mulf %92, %93 : vector<2x32x64xf32>
      %95 = arith.addf %84, %94 : vector<2x32x64xf32>
      %c2_i32_56 = arith.constant 2 : i32
      %96 = arith.muli %c2_i32_56, %arg12 : i32
      %c1_i32_57 = arith.constant 1 : i32
      %97 = arith.addi %96, %c1_i32_57 : i32
      %c0_58 = arith.constant 0 : index
      %98 = arith.index_cast %97 : i32 to index
      %c2_59 = arith.constant 2 : index
      %c0_60 = arith.constant 0 : index
      %99 = vector.load %arg1[%c0_58, %98, %c2_59, %c0_60] : memref<1x36x36x1xf32, #tpu.memory_space<vmem>>, vector<1x2x32x1xf32>
      %100 = vector.shape_cast %99 : vector<1x2x32x1xf32> to vector<2x32x1xf32>
      %c7 = arith.constant 7 : index
      %c0_61 = arith.constant 0 : index
      %101 = vector.load %arg2[%c7, %c0_61] : memref<25x64xf32, #tpu.memory_space<vmem>>, vector<1x64xf32>
      %102 = vector.shape_cast %101 : vector<1x64xf32> to vector<1x1x64xf32>
      %103 = vector.broadcast %100 : vector<2x32x1xf32> to vector<2x32x64xf32>
      %104 = vector.broadcast %102 : vector<1x1x64xf32> to vector<2x32x64xf32>
      %105 = arith.mulf %103, %104 : vector<2x32x64xf32>
      %106 = arith.addf %95, %105 : vector<2x32x64xf32>
      %c2_i32_62 = arith.constant 2 : i32
      %107 = arith.muli %c2_i32_62, %arg12 : i32
      %c1_i32_63 = arith.constant 1 : i32
      %108 = arith.addi %107, %c1_i32_63 : i32
      %c0_64 = arith.constant 0 : index
      %109 = arith.index_cast %108 : i32 to index
      %c3_65 = arith.constant 3 : index
      %c0_66 = arith.constant 0 : index
      %110 = vector.load %arg1[%c0_64, %109, %c3_65, %c0_66] : memref<1x36x36x1xf32, #tpu.memory_space<vmem>>, vector<1x2x32x1xf32>
      %111 = vector.shape_cast %110 : vector<1x2x32x1xf32> to vector<2x32x1xf32>
      %c8 = arith.constant 8 : index
      %c0_67 = arith.constant 0 : index
      %112 = vector.load %arg2[%c8, %c0_67] : memref<25x64xf32, #tpu.memory_space<vmem>>, vector<1x64xf32>
      %113 = vector.shape_cast %112 : vector<1x64xf32> to vector<1x1x64xf32>
      %114 = vector.broadcast %111 : vector<2x32x1xf32> to vector<2x32x64xf32>
      %115 = vector.broadcast %113 : vector<1x1x64xf32> to vector<2x32x64xf32>
      %116 = arith.mulf %114, %115 : vector<2x32x64xf32>
      %117 = arith.addf %106, %116 : vector<2x32x64xf32>
      %c2_i32_68 = arith.constant 2 : i32
      %118 = arith.muli %c2_i32_68, %arg12 : i32
      %c1_i32_69 = arith.constant 1 : i32
      %119 = arith.addi %118, %c1_i32_69 : i32
      %c0_70 = arith.constant 0 : index
      %120 = arith.index_cast %119 : i32 to index
      %c4_71 = arith.constant 4 : index
      %c0_72 = arith.constant 0 : index
      %121 = vector.load %arg1[%c0_70, %120, %c4_71, %c0_72] : memref<1x36x36x1xf32, #tpu.memory_space<vmem>>, vector<1x2x32x1xf32>
      %122 = vector.shape_cast %121 : vector<1x2x32x1xf32> to vector<2x32x1xf32>
      %c9 = arith.constant 9 : index
      %c0_73 = arith.constant 0 : index
      %123 = vector.load %arg2[%c9, %c0_73] : memref<25x64xf32, #tpu.memory_space<vmem>>, vector<1x64xf32>
      %124 = vector.shape_cast %123 : vector<1x64xf32> to vector<1x1x64xf32>
      %125 = vector.broadcast %122 : vector<2x32x1xf32> to vector<2x32x64xf32>
      %126 = vector.broadcast %124 : vector<1x1x64xf32> to vector<2x32x64xf32>
      %127 = arith.mulf %125, %126 : vector<2x32x64xf32>
      %128 = arith.addf %117, %127 : vector<2x32x64xf32>
      %c2_i32_74 = arith.constant 2 : i32
      %129 = arith.muli %c2_i32_74, %arg12 : i32
      %c2_i32_75 = arith.constant 2 : i32
      %130 = arith.addi %129, %c2_i32_75 : i32
      %c0_76 = arith.constant 0 : index
      %131 = arith.index_cast %130 : i32 to index
      %c0_77 = arith.constant 0 : index
      %c0_78 = arith.constant 0 : index
      %132 = vector.load %arg1[%c0_76, %131, %c0_77, %c0_78] : memref<1x36x36x1xf32, #tpu.memory_space<vmem>>, vector<1x2x32x1xf32>
      %133 = vector.shape_cast %132 : vector<1x2x32x1xf32> to vector<2x32x1xf32>
      %c10 = arith.constant 10 : index
      %c0_79 = arith.constant 0 : index
      %134 = vector.load %arg2[%c10, %c0_79] : memref<25x64xf32, #tpu.memory_space<vmem>>, vector<1x64xf32>
      %135 = vector.shape_cast %134 : vector<1x64xf32> to vector<1x1x64xf32>
      %136 = vector.broadcast %133 : vector<2x32x1xf32> to vector<2x32x64xf32>
      %137 = vector.broadcast %135 : vector<1x1x64xf32> to vector<2x32x64xf32>
      %138 = arith.mulf %136, %137 : vector<2x32x64xf32>
      %139 = arith.addf %128, %138 : vector<2x32x64xf32>
      %c2_i32_80 = arith.constant 2 : i32
      %140 = arith.muli %c2_i32_80, %arg12 : i32
      %c2_i32_81 = arith.constant 2 : i32
      %141 = arith.addi %140, %c2_i32_81 : i32
      %c0_82 = arith.constant 0 : index
      %142 = arith.index_cast %141 : i32 to index
      %c1_83 = arith.constant 1 : index
      %c0_84 = arith.constant 0 : index
      %143 = vector.load %arg1[%c0_82, %142, %c1_83, %c0_84] : memref<1x36x36x1xf32, #tpu.memory_space<vmem>>, vector<1x2x32x1xf32>
      %144 = vector.shape_cast %143 : vector<1x2x32x1xf32> to vector<2x32x1xf32>
      %c11 = arith.constant 11 : index
      %c0_85 = arith.constant 0 : index
      %145 = vector.load %arg2[%c11, %c0_85] : memref<25x64xf32, #tpu.memory_space<vmem>>, vector<1x64xf32>
      %146 = vector.shape_cast %145 : vector<1x64xf32> to vector<1x1x64xf32>
      %147 = vector.broadcast %144 : vector<2x32x1xf32> to vector<2x32x64xf32>
      %148 = vector.broadcast %146 : vector<1x1x64xf32> to vector<2x32x64xf32>
      %149 = arith.mulf %147, %148 : vector<2x32x64xf32>
      %150 = arith.addf %139, %149 : vector<2x32x64xf32>
      %c2_i32_86 = arith.constant 2 : i32
      %151 = arith.muli %c2_i32_86, %arg12 : i32
      %c2_i32_87 = arith.constant 2 : i32
      %152 = arith.addi %151, %c2_i32_87 : i32
      %c0_88 = arith.constant 0 : index
      %153 = arith.index_cast %152 : i32 to index
      %c2_89 = arith.constant 2 : index
      %c0_90 = arith.constant 0 : index
      %154 = vector.load %arg1[%c0_88, %153, %c2_89, %c0_90] : memref<1x36x36x1xf32, #tpu.memory_space<vmem>>, vector<1x2x32x1xf32>
      %155 = vector.shape_cast %154 : vector<1x2x32x1xf32> to vector<2x32x1xf32>
      %c12 = arith.constant 12 : index
      %c0_91 = arith.constant 0 : index
      %156 = vector.load %arg2[%c12, %c0_91] : memref<25x64xf32, #tpu.memory_space<vmem>>, vector<1x64xf32>
      %157 = vector.shape_cast %156 : vector<1x64xf32> to vector<1x1x64xf32>
      %158 = vector.broadcast %155 : vector<2x32x1xf32> to vector<2x32x64xf32>
      %159 = vector.broadcast %157 : vector<1x1x64xf32> to vector<2x32x64xf32>
      %160 = arith.mulf %158, %159 : vector<2x32x64xf32>
      %161 = arith.addf %150, %160 : vector<2x32x64xf32>
      %c2_i32_92 = arith.constant 2 : i32
      %162 = arith.muli %c2_i32_92, %arg12 : i32
      %c2_i32_93 = arith.constant 2 : i32
      %163 = arith.addi %162, %c2_i32_93 : i32
      %c0_94 = arith.constant 0 : index
      %164 = arith.index_cast %163 : i32 to index
      %c3_95 = arith.constant 3 : index
      %c0_96 = arith.constant 0 : index
      %165 = vector.load %arg1[%c0_94, %164, %c3_95, %c0_96] : memref<1x36x36x1xf32, #tpu.memory_space<vmem>>, vector<1x2x32x1xf32>
      %166 = vector.shape_cast %165 : vector<1x2x32x1xf32> to vector<2x32x1xf32>
      %c13 = arith.constant 13 : index
      %c0_97 = arith.constant 0 : index
      %167 = vector.load %arg2[%c13, %c0_97] : memref<25x64xf32, #tpu.memory_space<vmem>>, vector<1x64xf32>
      %168 = vector.shape_cast %167 : vector<1x64xf32> to vector<1x1x64xf32>
      %169 = vector.broadcast %166 : vector<2x32x1xf32> to vector<2x32x64xf32>
      %170 = vector.broadcast %168 : vector<1x1x64xf32> to vector<2x32x64xf32>
      %171 = arith.mulf %169, %170 : vector<2x32x64xf32>
      %172 = arith.addf %161, %171 : vector<2x32x64xf32>
      %c2_i32_98 = arith.constant 2 : i32
      %173 = arith.muli %c2_i32_98, %arg12 : i32
      %c2_i32_99 = arith.constant 2 : i32
      %174 = arith.addi %173, %c2_i32_99 : i32
      %c0_100 = arith.constant 0 : index
      %175 = arith.index_cast %174 : i32 to index
      %c4_101 = arith.constant 4 : index
      %c0_102 = arith.constant 0 : index
      %176 = vector.load %arg1[%c0_100, %175, %c4_101, %c0_102] : memref<1x36x36x1xf32, #tpu.memory_space<vmem>>, vector<1x2x32x1xf32>
      %177 = vector.shape_cast %176 : vector<1x2x32x1xf32> to vector<2x32x1xf32>
      %c14 = arith.constant 14 : index
      %c0_103 = arith.constant 0 : index
      %178 = vector.load %arg2[%c14, %c0_103] : memref<25x64xf32, #tpu.memory_space<vmem>>, vector<1x64xf32>
      %179 = vector.shape_cast %178 : vector<1x64xf32> to vector<1x1x64xf32>
      %180 = vector.broadcast %177 : vector<2x32x1xf32> to vector<2x32x64xf32>
      %181 = vector.broadcast %179 : vector<1x1x64xf32> to vector<2x32x64xf32>
      %182 = arith.mulf %180, %181 : vector<2x32x64xf32>
      %183 = arith.addf %172, %182 : vector<2x32x64xf32>
      %c2_i32_104 = arith.constant 2 : i32
      %184 = arith.muli %c2_i32_104, %arg12 : i32
      %c3_i32 = arith.constant 3 : i32
      %185 = arith.addi %184, %c3_i32 : i32
      %c0_105 = arith.constant 0 : index
      %186 = arith.index_cast %185 : i32 to index
      %c0_106 = arith.constant 0 : index
      %c0_107 = arith.constant 0 : index
      %187 = vector.load %arg1[%c0_105, %186, %c0_106, %c0_107] : memref<1x36x36x1xf32, #tpu.memory_space<vmem>>, vector<1x2x32x1xf32>
      %188 = vector.shape_cast %187 : vector<1x2x32x1xf32> to vector<2x32x1xf32>
      %c15 = arith.constant 15 : index
      %c0_108 = arith.constant 0 : index
      %189 = vector.load %arg2[%c15, %c0_108] : memref<25x64xf32, #tpu.memory_space<vmem>>, vector<1x64xf32>
      %190 = vector.shape_cast %189 : vector<1x64xf32> to vector<1x1x64xf32>
      %191 = vector.broadcast %188 : vector<2x32x1xf32> to vector<2x32x64xf32>
      %192 = vector.broadcast %190 : vector<1x1x64xf32> to vector<2x32x64xf32>
      %193 = arith.mulf %191, %192 : vector<2x32x64xf32>
      %194 = arith.addf %183, %193 : vector<2x32x64xf32>
      %c2_i32_109 = arith.constant 2 : i32
      %195 = arith.muli %c2_i32_109, %arg12 : i32
      %c3_i32_110 = arith.constant 3 : i32
      %196 = arith.addi %195, %c3_i32_110 : i32
      %c0_111 = arith.constant 0 : index
      %197 = arith.index_cast %196 : i32 to index
      %c1_112 = arith.constant 1 : index
      %c0_113 = arith.constant 0 : index
      %198 = vector.load %arg1[%c0_111, %197, %c1_112, %c0_113] : memref<1x36x36x1xf32, #tpu.memory_space<vmem>>, vector<1x2x32x1xf32>
      %199 = vector.shape_cast %198 : vector<1x2x32x1xf32> to vector<2x32x1xf32>
      %c16 = arith.constant 16 : index
      %c0_114 = arith.constant 0 : index
      %200 = vector.load %arg2[%c16, %c0_114] : memref<25x64xf32, #tpu.memory_space<vmem>>, vector<1x64xf32>
      %201 = vector.shape_cast %200 : vector<1x64xf32> to vector<1x1x64xf32>
      %202 = vector.broadcast %199 : vector<2x32x1xf32> to vector<2x32x64xf32>
      %203 = vector.broadcast %201 : vector<1x1x64xf32> to vector<2x32x64xf32>
      %204 = arith.mulf %202, %203 : vector<2x32x64xf32>
      %205 = arith.addf %194, %204 : vector<2x32x64xf32>
      %c2_i32_115 = arith.constant 2 : i32
      %206 = arith.muli %c2_i32_115, %arg12 : i32
      %c3_i32_116 = arith.constant 3 : i32
      %207 = arith.addi %206, %c3_i32_116 : i32
      %c0_117 = arith.constant 0 : index
      %208 = arith.index_cast %207 : i32 to index
      %c2_118 = arith.constant 2 : index
      %c0_119 = arith.constant 0 : index
      %209 = vector.load %arg1[%c0_117, %208, %c2_118, %c0_119] : memref<1x36x36x1xf32, #tpu.memory_space<vmem>>, vector<1x2x32x1xf32>
      %210 = vector.shape_cast %209 : vector<1x2x32x1xf32> to vector<2x32x1xf32>
      %c17 = arith.constant 17 : index
      %c0_120 = arith.constant 0 : index
      %211 = vector.load %arg2[%c17, %c0_120] : memref<25x64xf32, #tpu.memory_space<vmem>>, vector<1x64xf32>
      %212 = vector.shape_cast %211 : vector<1x64xf32> to vector<1x1x64xf32>
      %213 = vector.broadcast %210 : vector<2x32x1xf32> to vector<2x32x64xf32>
      %214 = vector.broadcast %212 : vector<1x1x64xf32> to vector<2x32x64xf32>
      %215 = arith.mulf %213, %214 : vector<2x32x64xf32>
      %216 = arith.addf %205, %215 : vector<2x32x64xf32>
      %c2_i32_121 = arith.constant 2 : i32
      %217 = arith.muli %c2_i32_121, %arg12 : i32
      %c3_i32_122 = arith.constant 3 : i32
      %218 = arith.addi %217, %c3_i32_122 : i32
      %c0_123 = arith.constant 0 : index
      %219 = arith.index_cast %218 : i32 to index
      %c3_124 = arith.constant 3 : index
      %c0_125 = arith.constant 0 : index
      %220 = vector.load %arg1[%c0_123, %219, %c3_124, %c0_125] : memref<1x36x36x1xf32, #tpu.memory_space<vmem>>, vector<1x2x32x1xf32>
      %221 = vector.shape_cast %220 : vector<1x2x32x1xf32> to vector<2x32x1xf32>
      %c18 = arith.constant 18 : index
      %c0_126 = arith.constant 0 : index
      %222 = vector.load %arg2[%c18, %c0_126] : memref<25x64xf32, #tpu.memory_space<vmem>>, vector<1x64xf32>
      %223 = vector.shape_cast %222 : vector<1x64xf32> to vector<1x1x64xf32>
      %224 = vector.broadcast %221 : vector<2x32x1xf32> to vector<2x32x64xf32>
      %225 = vector.broadcast %223 : vector<1x1x64xf32> to vector<2x32x64xf32>
      %226 = arith.mulf %224, %225 : vector<2x32x64xf32>
      %227 = arith.addf %216, %226 : vector<2x32x64xf32>
      %c2_i32_127 = arith.constant 2 : i32
      %228 = arith.muli %c2_i32_127, %arg12 : i32
      %c3_i32_128 = arith.constant 3 : i32
      %229 = arith.addi %228, %c3_i32_128 : i32
      %c0_129 = arith.constant 0 : index
      %230 = arith.index_cast %229 : i32 to index
      %c4_130 = arith.constant 4 : index
      %c0_131 = arith.constant 0 : index
      %231 = vector.load %arg1[%c0_129, %230, %c4_130, %c0_131] : memref<1x36x36x1xf32, #tpu.memory_space<vmem>>, vector<1x2x32x1xf32>
      %232 = vector.shape_cast %231 : vector<1x2x32x1xf32> to vector<2x32x1xf32>
      %c19 = arith.constant 19 : index
      %c0_132 = arith.constant 0 : index
      %233 = vector.load %arg2[%c19, %c0_132] : memref<25x64xf32, #tpu.memory_space<vmem>>, vector<1x64xf32>
      %234 = vector.shape_cast %233 : vector<1x64xf32> to vector<1x1x64xf32>
      %235 = vector.broadcast %232 : vector<2x32x1xf32> to vector<2x32x64xf32>
      %236 = vector.broadcast %234 : vector<1x1x64xf32> to vector<2x32x64xf32>
      %237 = arith.mulf %235, %236 : vector<2x32x64xf32>
      %238 = arith.addf %227, %237 : vector<2x32x64xf32>
      %c2_i32_133 = arith.constant 2 : i32
      %239 = arith.muli %c2_i32_133, %arg12 : i32
      %c4_i32 = arith.constant 4 : i32
      %240 = arith.addi %239, %c4_i32 : i32
      %c0_134 = arith.constant 0 : index
      %241 = arith.index_cast %240 : i32 to index
      %c0_135 = arith.constant 0 : index
      %c0_136 = arith.constant 0 : index
      %242 = vector.load %arg1[%c0_134, %241, %c0_135, %c0_136] : memref<1x36x36x1xf32, #tpu.memory_space<vmem>>, vector<1x2x32x1xf32>
      %243 = vector.shape_cast %242 : vector<1x2x32x1xf32> to vector<2x32x1xf32>
      %c20 = arith.constant 20 : index
      %c0_137 = arith.constant 0 : index
      %244 = vector.load %arg2[%c20, %c0_137] : memref<25x64xf32, #tpu.memory_space<vmem>>, vector<1x64xf32>
      %245 = vector.shape_cast %244 : vector<1x64xf32> to vector<1x1x64xf32>
      %246 = vector.broadcast %243 : vector<2x32x1xf32> to vector<2x32x64xf32>
      %247 = vector.broadcast %245 : vector<1x1x64xf32> to vector<2x32x64xf32>
      %248 = arith.mulf %246, %247 : vector<2x32x64xf32>
      %249 = arith.addf %238, %248 : vector<2x32x64xf32>
      %c2_i32_138 = arith.constant 2 : i32
      %250 = arith.muli %c2_i32_138, %arg12 : i32
      %c4_i32_139 = arith.constant 4 : i32
      %251 = arith.addi %250, %c4_i32_139 : i32
      %c0_140 = arith.constant 0 : index
      %252 = arith.index_cast %251 : i32 to index
      %c1_141 = arith.constant 1 : index
      %c0_142 = arith.constant 0 : index
      %253 = vector.load %arg1[%c0_140, %252, %c1_141, %c0_142] : memref<1x36x36x1xf32, #tpu.memory_space<vmem>>, vector<1x2x32x1xf32>
      %254 = vector.shape_cast %253 : vector<1x2x32x1xf32> to vector<2x32x1xf32>
      %c21 = arith.constant 21 : index
      %c0_143 = arith.constant 0 : index
      %255 = vector.load %arg2[%c21, %c0_143] : memref<25x64xf32, #tpu.memory_space<vmem>>, vector<1x64xf32>
      %256 = vector.shape_cast %255 : vector<1x64xf32> to vector<1x1x64xf32>
      %257 = vector.broadcast %254 : vector<2x32x1xf32> to vector<2x32x64xf32>
      %258 = vector.broadcast %256 : vector<1x1x64xf32> to vector<2x32x64xf32>
      %259 = arith.mulf %257, %258 : vector<2x32x64xf32>
      %260 = arith.addf %249, %259 : vector<2x32x64xf32>
      %c2_i32_144 = arith.constant 2 : i32
      %261 = arith.muli %c2_i32_144, %arg12 : i32
      %c4_i32_145 = arith.constant 4 : i32
      %262 = arith.addi %261, %c4_i32_145 : i32
      %c0_146 = arith.constant 0 : index
      %263 = arith.index_cast %262 : i32 to index
      %c2_147 = arith.constant 2 : index
      %c0_148 = arith.constant 0 : index
      %264 = vector.load %arg1[%c0_146, %263, %c2_147, %c0_148] : memref<1x36x36x1xf32, #tpu.memory_space<vmem>>, vector<1x2x32x1xf32>
      %265 = vector.shape_cast %264 : vector<1x2x32x1xf32> to vector<2x32x1xf32>
      %c22 = arith.constant 22 : index
      %c0_149 = arith.constant 0 : index
      %266 = vector.load %arg2[%c22, %c0_149] : memref<25x64xf32, #tpu.memory_space<vmem>>, vector<1x64xf32>
      %267 = vector.shape_cast %266 : vector<1x64xf32> to vector<1x1x64xf32>
      %268 = vector.broadcast %265 : vector<2x32x1xf32> to vector<2x32x64xf32>
      %269 = vector.broadcast %267 : vector<1x1x64xf32> to vector<2x32x64xf32>
      %270 = arith.mulf %268, %269 : vector<2x32x64xf32>
      %271 = arith.addf %260, %270 : vector<2x32x64xf32>
      %c2_i32_150 = arith.constant 2 : i32
      %272 = arith.muli %c2_i32_150, %arg12 : i32
      %c4_i32_151 = arith.constant 4 : i32
      %273 = arith.addi %272, %c4_i32_151 : i32
      %c0_152 = arith.constant 0 : index
      %274 = arith.index_cast %273 : i32 to index
      %c3_153 = arith.constant 3 : index
      %c0_154 = arith.constant 0 : index
      %275 = vector.load %arg1[%c0_152, %274, %c3_153, %c0_154] : memref<1x36x36x1xf32, #tpu.memory_space<vmem>>, vector<1x2x32x1xf32>
      %276 = vector.shape_cast %275 : vector<1x2x32x1xf32> to vector<2x32x1xf32>
      %c23 = arith.constant 23 : index
      %c0_155 = arith.constant 0 : index
      %277 = vector.load %arg2[%c23, %c0_155] : memref<25x64xf32, #tpu.memory_space<vmem>>, vector<1x64xf32>
      %278 = vector.shape_cast %277 : vector<1x64xf32> to vector<1x1x64xf32>
      %279 = vector.broadcast %276 : vector<2x32x1xf32> to vector<2x32x64xf32>
      %280 = vector.broadcast %278 : vector<1x1x64xf32> to vector<2x32x64xf32>
      %281 = arith.mulf %279, %280 : vector<2x32x64xf32>
      %282 = arith.addf %271, %281 : vector<2x32x64xf32>
      %c2_i32_156 = arith.constant 2 : i32
      %283 = arith.muli %c2_i32_156, %arg12 : i32
      %c4_i32_157 = arith.constant 4 : i32
      %284 = arith.addi %283, %c4_i32_157 : i32
      %c0_158 = arith.constant 0 : index
      %285 = arith.index_cast %284 : i32 to index
      %c4_159 = arith.constant 4 : index
      %c0_160 = arith.constant 0 : index
      %286 = vector.load %arg1[%c0_158, %285, %c4_159, %c0_160] : memref<1x36x36x1xf32, #tpu.memory_space<vmem>>, vector<1x2x32x1xf32>
      %287 = vector.shape_cast %286 : vector<1x2x32x1xf32> to vector<2x32x1xf32>
      %c24 = arith.constant 24 : index
      %c0_161 = arith.constant 0 : index
      %288 = vector.load %arg2[%c24, %c0_161] : memref<25x64xf32, #tpu.memory_space<vmem>>, vector<1x64xf32>
      %289 = vector.shape_cast %288 : vector<1x64xf32> to vector<1x1x64xf32>
      %290 = vector.broadcast %287 : vector<2x32x1xf32> to vector<2x32x64xf32>
      %291 = vector.broadcast %289 : vector<1x1x64xf32> to vector<2x32x64xf32>
      %292 = arith.mulf %290, %291 : vector<2x32x64xf32>
      %293 = arith.addf %282, %292 : vector<2x32x64xf32>
      %c0_162 = arith.constant 0 : index
      %c0_163 = arith.constant 0 : index
      %294 = vector.load %arg3[%c0_162, %c0_163] : memref<1x64xf32, #tpu.memory_space<vmem>>, vector<1x64xf32>
      %295 = vector.shape_cast %294 : vector<1x64xf32> to vector<1x1x64xf32>
      %296 = vector.broadcast %295 : vector<1x1x64xf32> to vector<2x32x64xf32>
      %297 = arith.addf %293, %296 : vector<2x32x64xf32>
      %cst_164 = arith.constant 0.000000e+00 : f32
      %298 = vector.broadcast %cst_164 : f32 to vector<2x32x64xf32>
      %299 = arith.maximumf %297, %298 : vector<2x32x64xf32>
      %300 = vector.extract_strided_slice %299 {offsets = [0, 0, 0], sizes = [1, 32, 64], strides = [1, 1, 1]} : vector<2x32x64xf32> to vector<1x32x64xf32>
      %301 = vector.extract_strided_slice %299 {offsets = [1, 0, 0], sizes = [1, 32, 64], strides = [1, 1, 1]} : vector<2x32x64xf32> to vector<1x32x64xf32>
      %302 = arith.maximumf %300, %301 : vector<1x32x64xf32>
      %c0_165 = arith.constant 0 : index
      %c0_166 = arith.constant 0 : index
      %c0_167 = arith.constant 0 : index
      %303 = vector.load %arg10[%c0_165, %c0_166, %c0_167] : memref<1x32x64xf32, #tpu.memory_space<vmem>>, vector<1x32x64xf32>
      tpu.vector_store %arg10[%c0_165, %c0_166, %c0_167], %302 {strides = array<i32>} : memref<1x32x64xf32, #tpu.memory_space<vmem>>, vector<1x32x64xf32>,
      %c0_168 = arith.constant 0 : index
      %c0_169 = arith.constant 0 : index
      %c0_170 = arith.constant 0 : index
      %304 = tpu.strided_load %arg10[%c0_168, %c0_169, %c0_170] {strides = array<i32: 1, 2, 1>} : memref<1x32x64xf32, #tpu.memory_space<vmem>>, vector<1x16x64xf32>
      %c0_171 = arith.constant 0 : index
      %c1_172 = arith.constant 1 : index
      %c0_173 = arith.constant 0 : index
      %305 = tpu.strided_load %arg10[%c0_171, %c1_172, %c0_173] {strides = array<i32: 1, 2, 1>} : memref<1x32x64xf32, #tpu.memory_space<vmem>>, vector<1x16x64xf32>
      %306 = arith.maximumf %304, %305 : vector<1x16x64xf32>
      %c2_i32_174 = arith.constant 2 : i32
      %307 = arith.addi %c2_i32_174, %arg12 : i32
      %308 = arith.index_cast %307 : i32 to index
      %c8_175 = arith.constant 8 : index
      %c0_176 = arith.constant 0 : index
      %309 = vector.load %arg9[%308, %c8_175, %c0_176] : memref<20x32x64xf32, #tpu.memory_space<vmem>>, vector<1x16x64xf32>
      tpu.vector_store %arg9[%308, %c8_175, %c0_176], %306 {strides = array<i32>} : memref<20x32x64xf32, #tpu.memory_space<vmem>>, vector<1x16x64xf32>,
    }
    %c16_i32_2 = arith.constant 16 : i32
    %c0_3 = arith.constant 0 : index
    %c0_4 = arith.constant 0 : index
    %3 = vector.load %arg7[%c0_3, %c0_4] : memref<1x36xf32, #tpu.memory_space<vmem>>, vector<1x36xf32>
    %c0_i32_5 = arith.constant 0 : i32
    %c8_i32 = arith.constant 8 : i32
    %4 = arith.addi %c0_i32_5, %c8_i32 : i32
    %c1_i32_6 = arith.constant 1 : i32
    %5 = scf.for %arg12 = %c0_i32_5 to %4 step %c1_i32_6 iter_args(%arg13 = %3) -> (vector<1x36xf32>)  : i32 {
      %cst_13 = arith.constant 0.000000e+00 : f32
      %18 = vector.broadcast %cst_13 : f32 to vector<2x16x32xf32>
      %c2_i32 = arith.constant 2 : i32
      %19 = arith.muli %c2_i32, %arg12 : i32
      %c0_i32_14 = arith.constant 0 : i32
      %20 = arith.addi %19, %c0_i32_14 : i32
      %21 = arith.index_cast %20 : i32 to index
      %c6 = arith.constant 6 : index
      %c0_15 = arith.constant 0 : index
      %22 = vector.load %arg9[%21, %c6, %c0_15] : memref<20x32x64xf32, #tpu.memory_space<vmem>>, vector<2x16x64xf32>
      %c2_i32_16 = arith.constant 2 : i32
      %23 = arith.muli %c2_i32_16, %arg12 : i32
      %c0_i32_17 = arith.constant 0 : i32
      %24 = arith.addi %23, %c0_i32_17 : i32
      %25 = arith.index_cast %24 : i32 to index
      %c7 = arith.constant 7 : index
      %c0_18 = arith.constant 0 : index
      %26 = vector.load %arg9[%25, %c7, %c0_18] : memref<20x32x64xf32, #tpu.memory_space<vmem>>, vector<2x16x64xf32>
      %c2_i32_19 = arith.constant 2 : i32
      %27 = arith.muli %c2_i32_19, %arg12 : i32
      %c0_i32_20 = arith.constant 0 : i32
      %28 = arith.addi %27, %c0_i32_20 : i32
      %29 = arith.index_cast %28 : i32 to index
      %c8 = arith.constant 8 : index
      %c0_21 = arith.constant 0 : index
      %30 = vector.load %arg9[%29, %c8, %c0_21] : memref<20x32x64xf32, #tpu.memory_space<vmem>>, vector<2x16x64xf32>
      %c2_i32_22 = arith.constant 2 : i32
      %31 = arith.muli %c2_i32_22, %arg12 : i32
      %c0_i32_23 = arith.constant 0 : i32
      %32 = arith.addi %31, %c0_i32_23 : i32
      %33 = arith.index_cast %32 : i32 to index
      %c9 = arith.constant 9 : index
      %c0_24 = arith.constant 0 : index
      %34 = vector.load %arg9[%33, %c9, %c0_24] : memref<20x32x64xf32, #tpu.memory_space<vmem>>, vector<2x16x64xf32>
      %c2_i32_25 = arith.constant 2 : i32
      %35 = arith.muli %c2_i32_25, %arg12 : i32
      %c0_i32_26 = arith.constant 0 : i32
      %36 = arith.addi %35, %c0_i32_26 : i32
      %37 = arith.index_cast %36 : i32 to index
      %c10 = arith.constant 10 : index
      %c0_27 = arith.constant 0 : index
      %38 = vector.load %arg9[%37, %c10, %c0_27] : memref<20x32x64xf32, #tpu.memory_space<vmem>>, vector<2x16x64xf32>
      %39 = tpu.concatenate %22, %26, %30, %34, %38 in 2 : vector<2x16x64xf32>, vector<2x16x64xf32>, vector<2x16x64xf32>, vector<2x16x64xf32>, vector<2x16x64xf32> -> vector<2x16x320xf32>
      %40 = vector.shape_cast %39 : vector<2x16x320xf32> to vector<32x320xf32>
      %c0_28 = arith.constant 0 : index
      %c0_29 = arith.constant 0 : index
      %c0_30 = arith.constant 0 : index
      %41 = vector.load %arg4[%c0_28, %c0_29, %c0_30] : memref<5x320x32xf32, #tpu.memory_space<vmem>>, vector<1x320x32xf32>
      %42 = vector.shape_cast %41 : vector<1x320x32xf32> to vector<320x32xf32>
      %cst_31 = arith.constant dense<0.000000e+00> : vector<32x32xf32>
      %43 = tpu.matmul %40, %42, %cst_31 {dimension_numbers = #tpu.dot_dimension_numbers<[1], [0], [0], [1], [0, 0, 1, 1], [], []>} : vector<32x320xf32>, vector<320x32xf32>, vector<32x32xf32> -> vector<32x32xf32>
      %44 = vector.shape_cast %43 : vector<32x32xf32> to vector<2x16x32xf32>
      %45 = arith.addf %18, %44 : vector<2x16x32xf32>
      %c2_i32_32 = arith.constant 2 : i32
      %46 = arith.muli %c2_i32_32, %arg12 : i32
      %c1_i32_33 = arith.constant 1 : i32
      %47 = arith.addi %46, %c1_i32_33 : i32
      %48 = arith.index_cast %47 : i32 to index
      %c6_34 = arith.constant 6 : index
      %c0_35 = arith.constant 0 : index
      %49 = vector.load %arg9[%48, %c6_34, %c0_35] : memref<20x32x64xf32, #tpu.memory_space<vmem>>, vector<2x16x64xf32>
      %c2_i32_36 = arith.constant 2 : i32
      %50 = arith.muli %c2_i32_36, %arg12 : i32
      %c1_i32_37 = arith.constant 1 : i32
      %51 = arith.addi %50, %c1_i32_37 : i32
      %52 = arith.index_cast %51 : i32 to index
      %c7_38 = arith.constant 7 : index
      %c0_39 = arith.constant 0 : index
      %53 = vector.load %arg9[%52, %c7_38, %c0_39] : memref<20x32x64xf32, #tpu.memory_space<vmem>>, vector<2x16x64xf32>
      %c2_i32_40 = arith.constant 2 : i32
      %54 = arith.muli %c2_i32_40, %arg12 : i32
      %c1_i32_41 = arith.constant 1 : i32
      %55 = arith.addi %54, %c1_i32_41 : i32
      %56 = arith.index_cast %55 : i32 to index
      %c8_42 = arith.constant 8 : index
      %c0_43 = arith.constant 0 : index
      %57 = vector.load %arg9[%56, %c8_42, %c0_43] : memref<20x32x64xf32, #tpu.memory_space<vmem>>, vector<2x16x64xf32>
      %c2_i32_44 = arith.constant 2 : i32
      %58 = arith.muli %c2_i32_44, %arg12 : i32
      %c1_i32_45 = arith.constant 1 : i32
      %59 = arith.addi %58, %c1_i32_45 : i32
      %60 = arith.index_cast %59 : i32 to index
      %c9_46 = arith.constant 9 : index
      %c0_47 = arith.constant 0 : index
      %61 = vector.load %arg9[%60, %c9_46, %c0_47] : memref<20x32x64xf32, #tpu.memory_space<vmem>>, vector<2x16x64xf32>
      %c2_i32_48 = arith.constant 2 : i32
      %62 = arith.muli %c2_i32_48, %arg12 : i32
      %c1_i32_49 = arith.constant 1 : i32
      %63 = arith.addi %62, %c1_i32_49 : i32
      %64 = arith.index_cast %63 : i32 to index
      %c10_50 = arith.constant 10 : index
      %c0_51 = arith.constant 0 : index
      %65 = vector.load %arg9[%64, %c10_50, %c0_51] : memref<20x32x64xf32, #tpu.memory_space<vmem>>, vector<2x16x64xf32>
      %66 = tpu.concatenate %49, %53, %57, %61, %65 in 2 : vector<2x16x64xf32>, vector<2x16x64xf32>, vector<2x16x64xf32>, vector<2x16x64xf32>, vector<2x16x64xf32> -> vector<2x16x320xf32>
      %67 = vector.shape_cast %66 : vector<2x16x320xf32> to vector<32x320xf32>
      %c1 = arith.constant 1 : index
      %c0_52 = arith.constant 0 : index
      %c0_53 = arith.constant 0 : index
      %68 = vector.load %arg4[%c1, %c0_52, %c0_53] : memref<5x320x32xf32, #tpu.memory_space<vmem>>, vector<1x320x32xf32>
      %69 = vector.shape_cast %68 : vector<1x320x32xf32> to vector<320x32xf32>
      %cst_54 = arith.constant dense<0.000000e+00> : vector<32x32xf32>
      %70 = tpu.matmul %67, %69, %cst_54 {dimension_numbers = #tpu.dot_dimension_numbers<[1], [0], [0], [1], [0, 0, 1, 1], [], []>} : vector<32x320xf32>, vector<320x32xf32>, vector<32x32xf32> -> vector<32x32xf32>
      %71 = vector.shape_cast %70 : vector<32x32xf32> to vector<2x16x32xf32>
      %72 = arith.addf %45, %71 : vector<2x16x32xf32>
      %c2_i32_55 = arith.constant 2 : i32
      %73 = arith.muli %c2_i32_55, %arg12 : i32
      %c2_i32_56 = arith.constant 2 : i32
      %74 = arith.addi %73, %c2_i32_56 : i32
      %75 = arith.index_cast %74 : i32 to index
      %c6_57 = arith.constant 6 : index
      %c0_58 = arith.constant 0 : index
      %76 = vector.load %arg9[%75, %c6_57, %c0_58] : memref<20x32x64xf32, #tpu.memory_space<vmem>>, vector<2x16x64xf32>
      %c2_i32_59 = arith.constant 2 : i32
      %77 = arith.muli %c2_i32_59, %arg12 : i32
      %c2_i32_60 = arith.constant 2 : i32
      %78 = arith.addi %77, %c2_i32_60 : i32
      %79 = arith.index_cast %78 : i32 to index
      %c7_61 = arith.constant 7 : index
      %c0_62 = arith.constant 0 : index
      %80 = vector.load %arg9[%79, %c7_61, %c0_62] : memref<20x32x64xf32, #tpu.memory_space<vmem>>, vector<2x16x64xf32>
      %c2_i32_63 = arith.constant 2 : i32
      %81 = arith.muli %c2_i32_63, %arg12 : i32
      %c2_i32_64 = arith.constant 2 : i32
      %82 = arith.addi %81, %c2_i32_64 : i32
      %83 = arith.index_cast %82 : i32 to index
      %c8_65 = arith.constant 8 : index
      %c0_66 = arith.constant 0 : index
      %84 = vector.load %arg9[%83, %c8_65, %c0_66] : memref<20x32x64xf32, #tpu.memory_space<vmem>>, vector<2x16x64xf32>
      %c2_i32_67 = arith.constant 2 : i32
      %85 = arith.muli %c2_i32_67, %arg12 : i32
      %c2_i32_68 = arith.constant 2 : i32
      %86 = arith.addi %85, %c2_i32_68 : i32
      %87 = arith.index_cast %86 : i32 to index
      %c9_69 = arith.constant 9 : index
      %c0_70 = arith.constant 0 : index
      %88 = vector.load %arg9[%87, %c9_69, %c0_70] : memref<20x32x64xf32, #tpu.memory_space<vmem>>, vector<2x16x64xf32>
      %c2_i32_71 = arith.constant 2 : i32
      %89 = arith.muli %c2_i32_71, %arg12 : i32
      %c2_i32_72 = arith.constant 2 : i32
      %90 = arith.addi %89, %c2_i32_72 : i32
      %91 = arith.index_cast %90 : i32 to index
      %c10_73 = arith.constant 10 : index
      %c0_74 = arith.constant 0 : index
      %92 = vector.load %arg9[%91, %c10_73, %c0_74] : memref<20x32x64xf32, #tpu.memory_space<vmem>>, vector<2x16x64xf32>
      %93 = tpu.concatenate %76, %80, %84, %88, %92 in 2 : vector<2x16x64xf32>, vector<2x16x64xf32>, vector<2x16x64xf32>, vector<2x16x64xf32>, vector<2x16x64xf32> -> vector<2x16x320xf32>
      %94 = vector.shape_cast %93 : vector<2x16x320xf32> to vector<32x320xf32>
      %c2 = arith.constant 2 : index
      %c0_75 = arith.constant 0 : index
      %c0_76 = arith.constant 0 : index
      %95 = vector.load %arg4[%c2, %c0_75, %c0_76] : memref<5x320x32xf32, #tpu.memory_space<vmem>>, vector<1x320x32xf32>
      %96 = vector.shape_cast %95 : vector<1x320x32xf32> to vector<320x32xf32>
      %cst_77 = arith.constant dense<0.000000e+00> : vector<32x32xf32>
      %97 = tpu.matmul %94, %96, %cst_77 {dimension_numbers = #tpu.dot_dimension_numbers<[1], [0], [0], [1], [0, 0, 1, 1], [], []>} : vector<32x320xf32>, vector<320x32xf32>, vector<32x32xf32> -> vector<32x32xf32>
      %98 = vector.shape_cast %97 : vector<32x32xf32> to vector<2x16x32xf32>
      %99 = arith.addf %72, %98 : vector<2x16x32xf32>
      %c2_i32_78 = arith.constant 2 : i32
      %100 = arith.muli %c2_i32_78, %arg12 : i32
      %c3_i32 = arith.constant 3 : i32
      %101 = arith.addi %100, %c3_i32 : i32
      %102 = arith.index_cast %101 : i32 to index
      %c6_79 = arith.constant 6 : index
      %c0_80 = arith.constant 0 : index
      %103 = vector.load %arg9[%102, %c6_79, %c0_80] : memref<20x32x64xf32, #tpu.memory_space<vmem>>, vector<2x16x64xf32>
      %c2_i32_81 = arith.constant 2 : i32
      %104 = arith.muli %c2_i32_81, %arg12 : i32
      %c3_i32_82 = arith.constant 3 : i32
      %105 = arith.addi %104, %c3_i32_82 : i32
      %106 = arith.index_cast %105 : i32 to index
      %c7_83 = arith.constant 7 : index
      %c0_84 = arith.constant 0 : index
      %107 = vector.load %arg9[%106, %c7_83, %c0_84] : memref<20x32x64xf32, #tpu.memory_space<vmem>>, vector<2x16x64xf32>
      %c2_i32_85 = arith.constant 2 : i32
      %108 = arith.muli %c2_i32_85, %arg12 : i32
      %c3_i32_86 = arith.constant 3 : i32
      %109 = arith.addi %108, %c3_i32_86 : i32
      %110 = arith.index_cast %109 : i32 to index
      %c8_87 = arith.constant 8 : index
      %c0_88 = arith.constant 0 : index
      %111 = vector.load %arg9[%110, %c8_87, %c0_88] : memref<20x32x64xf32, #tpu.memory_space<vmem>>, vector<2x16x64xf32>
      %c2_i32_89 = arith.constant 2 : i32
      %112 = arith.muli %c2_i32_89, %arg12 : i32
      %c3_i32_90 = arith.constant 3 : i32
      %113 = arith.addi %112, %c3_i32_90 : i32
      %114 = arith.index_cast %113 : i32 to index
      %c9_91 = arith.constant 9 : index
      %c0_92 = arith.constant 0 : index
      %115 = vector.load %arg9[%114, %c9_91, %c0_92] : memref<20x32x64xf32, #tpu.memory_space<vmem>>, vector<2x16x64xf32>
      %c2_i32_93 = arith.constant 2 : i32
      %116 = arith.muli %c2_i32_93, %arg12 : i32
      %c3_i32_94 = arith.constant 3 : i32
      %117 = arith.addi %116, %c3_i32_94 : i32
      %118 = arith.index_cast %117 : i32 to index
      %c10_95 = arith.constant 10 : index
      %c0_96 = arith.constant 0 : index
      %119 = vector.load %arg9[%118, %c10_95, %c0_96] : memref<20x32x64xf32, #tpu.memory_space<vmem>>, vector<2x16x64xf32>
      %120 = tpu.concatenate %103, %107, %111, %115, %119 in 2 : vector<2x16x64xf32>, vector<2x16x64xf32>, vector<2x16x64xf32>, vector<2x16x64xf32>, vector<2x16x64xf32> -> vector<2x16x320xf32>
      %121 = vector.shape_cast %120 : vector<2x16x320xf32> to vector<32x320xf32>
      %c3 = arith.constant 3 : index
      %c0_97 = arith.constant 0 : index
      %c0_98 = arith.constant 0 : index
      %122 = vector.load %arg4[%c3, %c0_97, %c0_98] : memref<5x320x32xf32, #tpu.memory_space<vmem>>, vector<1x320x32xf32>
      %123 = vector.shape_cast %122 : vector<1x320x32xf32> to vector<320x32xf32>
      %cst_99 = arith.constant dense<0.000000e+00> : vector<32x32xf32>
      %124 = tpu.matmul %121, %123, %cst_99 {dimension_numbers = #tpu.dot_dimension_numbers<[1], [0], [0], [1], [0, 0, 1, 1], [], []>} : vector<32x320xf32>, vector<320x32xf32>, vector<32x32xf32> -> vector<32x32xf32>
      %125 = vector.shape_cast %124 : vector<32x32xf32> to vector<2x16x32xf32>
      %126 = arith.addf %99, %125 : vector<2x16x32xf32>
      %c2_i32_100 = arith.constant 2 : i32
      %127 = arith.muli %c2_i32_100, %arg12 : i32
      %c4_i32 = arith.constant 4 : i32
      %128 = arith.addi %127, %c4_i32 : i32
      %129 = arith.index_cast %128 : i32 to index
      %c6_101 = arith.constant 6 : index
      %c0_102 = arith.constant 0 : index
      %130 = vector.load %arg9[%129, %c6_101, %c0_102] : memref<20x32x64xf32, #tpu.memory_space<vmem>>, vector<2x16x64xf32>
      %c2_i32_103 = arith.constant 2 : i32
      %131 = arith.muli %c2_i32_103, %arg12 : i32
      %c4_i32_104 = arith.constant 4 : i32
      %132 = arith.addi %131, %c4_i32_104 : i32
      %133 = arith.index_cast %132 : i32 to index
      %c7_105 = arith.constant 7 : index
      %c0_106 = arith.constant 0 : index
      %134 = vector.load %arg9[%133, %c7_105, %c0_106] : memref<20x32x64xf32, #tpu.memory_space<vmem>>, vector<2x16x64xf32>
      %c2_i32_107 = arith.constant 2 : i32
      %135 = arith.muli %c2_i32_107, %arg12 : i32
      %c4_i32_108 = arith.constant 4 : i32
      %136 = arith.addi %135, %c4_i32_108 : i32
      %137 = arith.index_cast %136 : i32 to index
      %c8_109 = arith.constant 8 : index
      %c0_110 = arith.constant 0 : index
      %138 = vector.load %arg9[%137, %c8_109, %c0_110] : memref<20x32x64xf32, #tpu.memory_space<vmem>>, vector<2x16x64xf32>
      %c2_i32_111 = arith.constant 2 : i32
      %139 = arith.muli %c2_i32_111, %arg12 : i32
      %c4_i32_112 = arith.constant 4 : i32
      %140 = arith.addi %139, %c4_i32_112 : i32
      %141 = arith.index_cast %140 : i32 to index
      %c9_113 = arith.constant 9 : index
      %c0_114 = arith.constant 0 : index
      %142 = vector.load %arg9[%141, %c9_113, %c0_114] : memref<20x32x64xf32, #tpu.memory_space<vmem>>, vector<2x16x64xf32>
      %c2_i32_115 = arith.constant 2 : i32
      %143 = arith.muli %c2_i32_115, %arg12 : i32
      %c4_i32_116 = arith.constant 4 : i32
      %144 = arith.addi %143, %c4_i32_116 : i32
      %145 = arith.index_cast %144 : i32 to index
      %c10_117 = arith.constant 10 : index
      %c0_118 = arith.constant 0 : index
      %146 = vector.load %arg9[%145, %c10_117, %c0_118] : memref<20x32x64xf32, #tpu.memory_space<vmem>>, vector<2x16x64xf32>
      %147 = tpu.concatenate %130, %134, %138, %142, %146 in 2 : vector<2x16x64xf32>, vector<2x16x64xf32>, vector<2x16x64xf32>, vector<2x16x64xf32>, vector<2x16x64xf32> -> vector<2x16x320xf32>
      %148 = vector.shape_cast %147 : vector<2x16x320xf32> to vector<32x320xf32>
      %c4 = arith.constant 4 : index
      %c0_119 = arith.constant 0 : index
      %c0_120 = arith.constant 0 : index
      %149 = vector.load %arg4[%c4, %c0_119, %c0_120] : memref<5x320x32xf32, #tpu.memory_space<vmem>>, vector<1x320x32xf32>
      %150 = vector.shape_cast %149 : vector<1x320x32xf32> to vector<320x32xf32>
      %cst_121 = arith.constant dense<0.000000e+00> : vector<32x32xf32>
      %151 = tpu.matmul %148, %150, %cst_121 {dimension_numbers = #tpu.dot_dimension_numbers<[1], [0], [0], [1], [0, 0, 1, 1], [], []>} : vector<32x320xf32>, vector<320x32xf32>, vector<32x32xf32> -> vector<32x32xf32>
      %152 = vector.shape_cast %151 : vector<32x32xf32> to vector<2x16x32xf32>
      %153 = arith.addf %126, %152 : vector<2x16x32xf32>
      %c0_122 = arith.constant 0 : index
      %c0_123 = arith.constant 0 : index
      %154 = vector.load %arg5[%c0_122, %c0_123] : memref<1x32xf32, #tpu.memory_space<vmem>>, vector<1x32xf32>
      %155 = vector.shape_cast %154 : vector<1x32xf32> to vector<1x1x32xf32>
      %156 = vector.broadcast %155 : vector<1x1x32xf32> to vector<2x16x32xf32>
      %157 = arith.addf %153, %156 : vector<2x16x32xf32>
      %cst_124 = arith.constant 0.000000e+00 : f32
      %158 = vector.broadcast %cst_124 : f32 to vector<2x16x32xf32>
      %159 = arith.maximumf %157, %158 : vector<2x16x32xf32>
      %160 = vector.extract_strided_slice %159 {offsets = [0, 0, 0], sizes = [1, 16, 32], strides = [1, 1, 1]} : vector<2x16x32xf32> to vector<1x16x32xf32>
      %161 = vector.extract_strided_slice %159 {offsets = [1, 0, 0], sizes = [1, 16, 32], strides = [1, 1, 1]} : vector<2x16x32xf32> to vector<1x16x32xf32>
      %162 = arith.maximumf %160, %161 : vector<1x16x32xf32>
      %c0_125 = arith.constant 0 : index
      %c0_126 = arith.constant 0 : index
      %c0_127 = arith.constant 0 : index
      %163 = vector.load %arg11[%c0_125, %c0_126, %c0_127] : memref<1x16x32xf32, #tpu.memory_space<vmem>>, vector<1x16x32xf32>
      tpu.vector_store %arg11[%c0_125, %c0_126, %c0_127], %162 {strides = array<i32>} : memref<1x16x32xf32, #tpu.memory_space<vmem>>, vector<1x16x32xf32>,
      %c0_128 = arith.constant 0 : index
      %c0_129 = arith.constant 0 : index
      %c0_130 = arith.constant 0 : index
      %164 = tpu.strided_load %arg11[%c0_128, %c0_129, %c0_130] {strides = array<i32: 1, 2, 1>} : memref<1x16x32xf32, #tpu.memory_space<vmem>>, vector<1x8x32xf32>
      %c0_131 = arith.constant 0 : index
      %c1_132 = arith.constant 1 : index
      %c0_133 = arith.constant 0 : index
      %165 = tpu.strided_load %arg11[%c0_131, %c1_132, %c0_133] {strides = array<i32: 1, 2, 1>} : memref<1x16x32xf32, #tpu.memory_space<vmem>>, vector<1x8x32xf32>
      %166 = arith.maximumf %164, %165 : vector<1x8x32xf32>
      %167 = vector.extract_strided_slice %166 {offsets = [0, 0, 0], sizes = [1, 1, 32], strides = [1, 1, 1]} : vector<1x8x32xf32> to vector<1x1x32xf32>
      %168 = vector.shape_cast %167 : vector<1x1x32xf32> to vector<1x32xf32>
      %169 = vector.extract_strided_slice %166 {offsets = [0, 1, 0], sizes = [1, 1, 32], strides = [1, 1, 1]} : vector<1x8x32xf32> to vector<1x1x32xf32>
      %170 = vector.shape_cast %169 : vector<1x1x32xf32> to vector<1x32xf32>
      %171 = vector.extract_strided_slice %166 {offsets = [0, 2, 0], sizes = [1, 1, 32], strides = [1, 1, 1]} : vector<1x8x32xf32> to vector<1x1x32xf32>
      %172 = vector.shape_cast %171 : vector<1x1x32xf32> to vector<1x32xf32>
      %173 = vector.extract_strided_slice %166 {offsets = [0, 3, 0], sizes = [1, 1, 32], strides = [1, 1, 1]} : vector<1x8x32xf32> to vector<1x1x32xf32>
      %174 = vector.shape_cast %173 : vector<1x1x32xf32> to vector<1x32xf32>
      %175 = vector.extract_strided_slice %166 {offsets = [0, 4, 0], sizes = [1, 1, 32], strides = [1, 1, 1]} : vector<1x8x32xf32> to vector<1x1x32xf32>
      %176 = vector.shape_cast %175 : vector<1x1x32xf32> to vector<1x32xf32>
      %177 = vector.extract_strided_slice %166 {offsets = [0, 5, 0], sizes = [1, 1, 32], strides = [1, 1, 1]} : vector<1x8x32xf32> to vector<1x1x32xf32>
      %178 = vector.shape_cast %177 : vector<1x1x32xf32> to vector<1x32xf32>
      %179 = vector.extract_strided_slice %166 {offsets = [0, 6, 0], sizes = [1, 1, 32], strides = [1, 1, 1]} : vector<1x8x32xf32> to vector<1x1x32xf32>
      %180 = vector.shape_cast %179 : vector<1x1x32xf32> to vector<1x32xf32>
      %181 = vector.extract_strided_slice %166 {offsets = [0, 7, 0], sizes = [1, 1, 32], strides = [1, 1, 1]} : vector<1x8x32xf32> to vector<1x1x32xf32>
      %182 = vector.shape_cast %181 : vector<1x1x32xf32> to vector<1x32xf32>
      %183 = tpu.concatenate %168, %170, %172, %174, %176, %178, %180, %182 in 1 : vector<1x32xf32>, vector<1x32xf32>, vector<1x32xf32>, vector<1x32xf32>, vector<1x32xf32>, vector<1x32xf32>, vector<1x32xf32>, vector<1x32xf32> -> vector<1x256xf32>
      %c256_i32 = arith.constant 256 : i32
      %184 = arith.muli %arg12, %c256_i32 : i32
      %185 = tpu.assume_multiple %184, 256 : i32
      %186 = arith.index_cast %185 : i32 to index
      %c0_134 = arith.constant 0 : index
      %187 = vector.load %arg6[%186, %c0_134] : memref<2048x36xf32, #tpu.memory_space<vmem>>, vector<256x36xf32>
      %cst_135 = arith.constant dense<0.000000e+00> : vector<1x36xf32>
      %188 = tpu.matmul %183, %187, %cst_135 {dimension_numbers = #tpu.dot_dimension_numbers<[1], [0], [0], [1], [0, 0, 1, 1], [], []>} : vector<1x256xf32>, vector<256x36xf32>, vector<1x36xf32> -> vector<1x36xf32>
      %189 = arith.addf %arg13, %188 : vector<1x36xf32>
      scf.yield %189 : vector<1x36xf32>
    }
    %c8_i32_7 = arith.constant 8 : i32
    %cst_8 = arith.constant dense<0xFF800000> : vector<1xf32>
    %6 = vector.multi_reduction <maximumf>, %5, %cst_8 [1] : vector<1x36xf32> to vector<1xf32>
    %7 = vector.shape_cast %6 : vector<1xf32> to vector<1x1xf32>
    %8 = vector.broadcast %7 : vector<1x1xf32> to vector<1x36xf32>
    %9 = arith.subf %5, %8 : vector<1x36xf32>
    %10 = math.exp %9 : vector<1x36xf32>
    %cst_9 = arith.constant dense<0.000000e+00> : vector<1xf32>
    %11 = vector.multi_reduction <add>, %10, %cst_9 [1] : vector<1x36xf32> to vector<1xf32>
    %12 = vector.shape_cast %11 : vector<1xf32> to vector<1x1xf32>
    %13 = vector.broadcast %12 : vector<1x1xf32> to vector<1x36xf32>
    %14 = arith.divf %10, %13 : vector<1x36xf32>
    %c0_10 = arith.constant 0 : index
    %c0_11 = arith.constant 0 : index
    %c0_12 = arith.constant 0 : index
    %15 = vector.load %arg8[%c0_10, %c0_11, %c0_12] : memref<1x1x36xf32, #tpu.memory_space<vmem>>, vector<1x1x36xf32>
    %16 = vector.shape_cast %15 : vector<1x1x36xf32> to vector<1x36xf32>
    %17 = vector.shape_cast %14 : vector<1x36xf32> to vector<1x1x36xf32>
    tpu.vector_store %arg8[%c0_10, %c0_11, %c0_12], %17 {strides = array<i32>} : memref<1x1x36xf32, #tpu.memory_space<vmem>>, vector<1x1x36xf32>,
    return
  }
  func.func @transform_0(%arg0: i32) -> (i32, i32, i32, i32) {
    %c0_i32 = arith.constant 0 : i32
    %c0_i32_0 = arith.constant 0 : i32
    %c0_i32_1 = arith.constant 0 : i32
    %c0_i32_2 = arith.constant 0 : i32
    return %arg0, %c0_i32, %c0_i32_0, %c0_i32_1 : i32, i32, i32, i32
  }
  func.func @transform_1(%arg0: i32) -> (i32, i32) {
    %c0_i32 = arith.constant 0 : i32
    %c0_i32_0 = arith.constant 0 : i32
    %c0_i32_1 = arith.constant 0 : i32
    return %c0_i32, %c0_i32_0 : i32, i32
  }
  func.func @transform_2(%arg0: i32) -> (i32, i32) {
    %c0_i32 = arith.constant 0 : i32
    %c0_i32_0 = arith.constant 0 : i32
    %c0_i32_1 = arith.constant 0 : i32
    return %c0_i32, %c0_i32_0 : i32, i32
  }
  func.func @transform_3(%arg0: i32) -> (i32, i32, i32) {
    %c0_i32 = arith.constant 0 : i32
    %c0_i32_0 = arith.constant 0 : i32
    %c0_i32_1 = arith.constant 0 : i32
    %c0_i32_2 = arith.constant 0 : i32
    return %c0_i32, %c0_i32_0, %c0_i32_1 : i32, i32, i32
  }
  func.func @transform_4(%arg0: i32) -> (i32, i32) {
    %c0_i32 = arith.constant 0 : i32
    %c0_i32_0 = arith.constant 0 : i32
    %c0_i32_1 = arith.constant 0 : i32
    return %c0_i32, %c0_i32_0 : i32, i32
  }
  func.func @transform_5(%arg0: i32) -> (i32, i32) {
    %c0_i32 = arith.constant 0 : i32
    %c0_i32_0 = arith.constant 0 : i32
    %c0_i32_1 = arith.constant 0 : i32
    return %c0_i32, %c0_i32_0 : i32, i32
  }
  func.func @transform_6(%arg0: i32) -> (i32, i32) {
    %c0_i32 = arith.constant 0 : i32
    %c0_i32_0 = arith.constant 0 : i32
    %c0_i32_1 = arith.constant 0 : i32
    return %c0_i32, %c0_i32_0 : i32, i32
  }
  func.func @transform_7(%arg0: i32) -> (i32, i32, i32) {
    %c0_i32 = arith.constant 0 : i32
    %c0_i32_0 = arith.constant 0 : i32
    %c0_i32_1 = arith.constant 0 : i32
    return %arg0, %c0_i32, %c0_i32_0 : i32, i32, i32
  }
}

</mosaic_0001>

<llo_original>
// kernel: cnn_forward.1
$region0: #{cnn_forward.1}
  #allocation0 [shape = 'u32[]', space=smem, size = 0x4, offset = 0x4, fixed_abs, tag = 'smem constant byte address 0x4 - core index']
  #allocation1 [shape = 'u32[144,128]{1,0:T(1,128)}', space=vmem, size = 0x12000, scoped, tag = 'internal scratch']
  #allocation2 [shape = 'f32[20,32,64]{2,1,0:T(8,128)}', space=vmem, size = 0x50000, scoped, tag = 'scratch operand']
  #allocation3 [shape = 'f32[1,32,64]{2,1,0:T(8,128)}', space=vmem, size = 0x4000, scoped, tag = 'scratch operand']
  #allocation4 [shape = 'f32[1,16,32]{2,1,0:T(8,128)}', space=vmem, size = 0x2000, scoped, tag = 'scratch operand']
  %s0 = inlined_call_operand.vmem [shape: f32[2,36,36,1], index: 0, kind: input, shape index: {}]
  %s1 = inlined_call_operand.vmem [shape: f32[25,64], index: 1, kind: input, shape index: {}]
  %s2 = inlined_call_operand.vmem [shape: f32[1,64], index: 2, kind: input, shape index: {}]
  %s3 = inlined_call_operand.vmem [shape: f32[5,320,32], index: 3, kind: input, shape index: {}]
  %s4 = inlined_call_operand.vmem [shape: f32[1,32], index: 4, kind: input, shape index: {}]
  %s5 = inlined_call_operand.vmem [shape: f32[2048,36], index: 5, kind: input, shape index: {}]
  %s6 = inlined_call_operand.vmem [shape: f32[1,36], index: 6, kind: input, shape index: {}]
  %s7 = inlined_call_operand.hbm [shape: f32[2,1,36], index: 7, kind: output, shape index: {}]
  %s8 = sld [smem:[#allocation0]]
  $region75: #{cnn_forward.1} parent=0
    _
  %s10 = ssub.s32 1, %s8
  %s11 = scalar_select 0, %s10, %s8
  $region1: #{cnn_forward.1} parent=0
    #allocation5 [shape = 'u8[1024]{0}', space=vmem, size = 0x400, scoped, tag = 'output window, operand 0']
    #allocation6 [shape = 's32[2]{0}', space=sflag, size = 0x8, scoped, tag = 'scoped memory for cnn_forward.1']
    %12 = vsyncpa [#allocation6], 0
    %s13 = scalar_lea.sflag [#allocation6], 1
    %14 = vsyncpa %s13, 0
    loop: start=0, step=1, limit=4
    $region2: #{cnn_forward.1} parent=1 // loop_pre_header
      _
    $region3: #{cnn_forward.1} parent=1 // loop_header
      %s16 = sphi 0, %s20
      %p17 = scmp.ge.s32.totalorder %s16, 4
      %s26 = sphi 0, %s28
      %s29 = sphi 0, %s26
      %s30 = sphi 0, %s29
      %s46 = sphi 0, %s30
      %s50 = sphi 0, %s50
      %s52 = sphi 0, %s50
      %s53 = sphi 0, %s52
      %s67 = sphi 0, %s53
      %s71 = sphi 0, %s71
      %s73 = sphi 0, %s71
      %s74 = sphi 0, %s73
      %s88 = sphi 0, %s74
      %s92 = sphi 0, %s92
      %s94 = sphi 0, %s92
      %s95 = sphi 0, %s94
      %s109 = sphi 0, %s95
      %s113 = sphi 0, %s113
      %s115 = sphi 0, %s113
      %s116 = sphi 0, %s115
      %s130 = sphi 0, %s116
      %s134 = sphi 0, %s134
      %s136 = sphi 0, %s134
      %s137 = sphi 0, %s136
      %s151 = sphi 0, %s137
      %s155 = sphi 0, %s155
      %s157 = sphi 0, %s155
      %s158 = sphi 0, %s157
      %s172 = sphi 0, %s158
      %s178 = sphi 0, %s180
      %s181 = sphi 0, %s178
      %s182 = sphi 0, %s181
      %s198 = sphi 0, %s182
    $region4: #{cnn_forward.1} parent=1 // loop_header_branch
      %19 = sbr.rel (%p17) target = $region8
    $region5: #{cnn_forward.1} parent=1 // loop_body
      %s21 = ssub.s32 %s16, 1
      %s22 = ssub.s32 %s16, 2
      %s23 = sadd.s32 %s16, 1
      %s24 = ssub.s32 %s16, %s23
      %p25 = scmp.eq.s32.totalorder %s24, 0
      %s27 = sadd.s32 %s26, 1
      %s28 = scalar_select %p25, %s26, %s27
      %p31 = pneg %p25
      %p32 = scmp.eq.s32.totalorder %s16, 1
      %p33 = por %p31, %p32
      %p34 = scmp.ne.s32.totalorder %s26, %s29
      %p35 = scmp.eq.s32.totalorder %s16, 0
      %p36 = por %p34, %p35
      %p37 = scmp.ne.s32.totalorder %s26, %s29
      %p38 = scmp.eq.s32.totalorder %s21, 1
      %p39 = por %p37, %p38
      %p40 = scmp.ne.s32.totalorder %s29, %s30
      %p41 = scmp.eq.s32.totalorder %s21, 0
      %p42 = por %p40, %p41
      %p43 = scmp.ne.s32.totalorder %s29, %s30
      %p44 = scmp.eq.s32.totalorder %s22, 1
      %p45 = por %p43, %p44
      %p47 = scmp.ne.s32.totalorder %s30, %s46
      %p48 = scmp.eq.s32.totalorder %s22, 0
      %p49 = por %p47, %p48
      %s51 = sadd.s32 %s50, 1
      %p54 = scmp.eq.s32.totalorder %s16, 1
      %p55 = scmp.ne.s32.totalorder %s50, %s52
      %p56 = scmp.eq.s32.totalorder %s16, 0
      %p57 = por %p55, %p56
      %p58 = scmp.ne.s32.totalorder %s50, %s52
      %p59 = scmp.eq.s32.totalorder %s21, 1
      %p60 = por %p58, %p59
      %p61 = scmp.ne.s32.totalorder %s52, %s53
      %p62 = scmp.eq.s32.totalorder %s21, 0
      %p63 = por %p61, %p62
      %p64 = scmp.ne.s32.totalorder %s52, %s53
      %p65 = scmp.eq.s32.totalorder %s22, 1
      %p66 = por %p64, %p65
      %p68 = scmp.ne.s32.totalorder %s53, %s67
      %p69 = scmp.eq.s32.totalorder %s22, 0
      %p70 = por %p68, %p69
      %s72 = sadd.s32 %s71, 1
      %p75 = scmp.eq.s32.totalorder %s16, 1
      %p76 = scmp.ne.s32.totalorder %s71, %s73
      %p77 = scmp.eq.s32.totalorder %s16, 0
      %p78 = por %p76, %p77
      %p79 = scmp.ne.s32.totalorder %s71, %s73
      %p80 = scmp.eq.s32.totalorder %s21, 1
      %p81 = por %p79, %p80
      %p82 = scmp.ne.s32.totalorder %s73, %s74
      %p83 = scmp.eq.s32.totalorder %s21, 0
      %p84 = por %p82, %p83
      %p85 = scmp.ne.s32.totalorder %s73, %s74
      %p86 = scmp.eq.s32.totalorder %s22, 1
      %p87 = por %p85, %p86
      %p89 = scmp.ne.s32.totalorder %s74, %s88
      %p90 = scmp.eq.s32.totalorder %s22, 0
      %p91 = por %p89, %p90
      %s93 = sadd.s32 %s92, 1
      %p96 = scmp.eq.s32.totalorder %s16, 1
      %p97 = scmp.ne.s32.totalorder %s92, %s94
      %p98 = scmp.eq.s32.totalorder %s16, 0
      %p99 = por %p97, %p98
      %p100 = scmp.ne.s32.totalorder %s92, %s94
      %p101 = scmp.eq.s32.totalorder %s21, 1
      %p102 = por %p100, %p101
      %p103 = scmp.ne.s32.totalorder %s94, %s95
      %p104 = scmp.eq.s32.totalorder %s21, 0
      %p105 = por %p103, %p104
      %p106 = scmp.ne.s32.totalorder %s94, %s95
      %p107 = scmp.eq.s32.totalorder %s22, 1
      %p108 = por %p106, %p107
      %p110 = scmp.ne.s32.totalorder %s95, %s109
      %p111 = scmp.eq.s32.totalorder %s22, 0
      %p112 = por %p110, %p111
      %s114 = sadd.s32 %s113, 1
      %p117 = scmp.eq.s32.totalorder %s16, 1
      %p118 = scmp.ne.s32.totalorder %s113, %s115
      %p119 = scmp.eq.s32.totalorder %s16, 0
      %p120 = por %p118, %p119
      %p121 = scmp.ne.s32.totalorder %s113, %s115
      %p122 = scmp.eq.s32.totalorder %s21, 1
      %p123 = por %p121, %p122
      %p124 = scmp.ne.s32.totalorder %s115, %s116
      %p125 = scmp.eq.s32.totalorder %s21, 0
      %p126 = por %p124, %p125
      %p127 = scmp.ne.s32.totalorder %s115, %s116
      %p128 = scmp.eq.s32.totalorder %s22, 1
      %p129 = por %p127, %p128
      %p131 = scmp.ne.s32.totalorder %s116, %s130
      %p132 = scmp.eq.s32.totalorder %s22, 0
      %p133 = por %p131, %p132
      %s135 = sadd.s32 %s134, 1
      %p138 = scmp.eq.s32.totalorder %s16, 1
      %p139 = scmp.ne.s32.totalorder %s134, %s136
      %p140 = scmp.eq.s32.totalorder %s16, 0
      %p141 = por %p139, %p140
      %p142 = scmp.ne.s32.totalorder %s134, %s136
      %p143 = scmp.eq.s32.totalorder %s21, 1
      %p144 = por %p142, %p143
      %p145 = scmp.ne.s32.totalorder %s136, %s137
      %p146 = scmp.eq.s32.totalorder %s21, 0
      %p147 = por %p145, %p146
      %p148 = scmp.ne.s32.totalorder %s136, %s137
      %p149 = scmp.eq.s32.totalorder %s22, 1
      %p150 = por %p148, %p149
      %p152 = scmp.ne.s32.totalorder %s137, %s151
      %p153 = scmp.eq.s32.totalorder %s22, 0
      %p154 = por %p152, %p153
      %s156 = sadd.s32 %s155, 1
      %p159 = scmp.eq.s32.totalorder %s16, 1
      %p160 = scmp.ne.s32.totalorder %s155, %s157
      %p161 = scmp.eq.s32.totalorder %s16, 0
      %p162 = por %p160, %p161
      %p163 = scmp.ne.s32.totalorder %s155, %s157
      %p164 = scmp.eq.s32.totalorder %s21, 1
      %p165 = por %p163, %p164
      %p166 = scmp.ne.s32.totalorder %s157, %s158
      %p167 = scmp.eq.s32.totalorder %s21, 0
      %p168 = por %p166, %p167
      %p169 = scmp.ne.s32.totalorder %s157, %s158
      %p170 = scmp.eq.s32.totalorder %s22, 1
      %p171 = por %p169, %p170
      %p173 = scmp.ne.s32.totalorder %s158, %s172
      %p174 = scmp.eq.s32.totalorder %s22, 0
      %p175 = por %p173, %p174
      %s176 = ssub.s32 %s16, %s23
      %p177 = scmp.eq.s32.totalorder %s176, 0
      %s179 = sadd.s32 %s178, 1
      %s180 = scalar_select %p177, %s178, %s179
      %p183 = pneg %p177
      %p184 = scmp.eq.s32.totalorder %s16, 1
      %p185 = por %p183, %p184
      %p186 = scmp.ne.s32.totalorder %s178, %s181
      %p187 = scmp.eq.s32.totalorder %s16, 0
      %p188 = por %p186, %p187
      %p189 = scmp.ne.s32.totalorder %s178, %s181
      %p190 = scmp.eq.s32.totalorder %s21, 1
      %p191 = por %p189, %p190
      %p192 = scmp.ne.s32.totalorder %s181, %s182
      %p193 = scmp.eq.s32.totalorder %s21, 0
      %p194 = por %p192, %p193
      %p195 = scmp.ne.s32.totalorder %s181, %s182
      %p196 = scmp.eq.s32.totalorder %s22, 1
      %p197 = por %p195, %p196
      %p199 = scmp.ne.s32.totalorder %s182, %s198
      %p200 = scmp.eq.s32.totalorder %s22, 0
      %p201 = por %p199, %p200
      %p202 = scmp.le.s32.totalorder 1, %s16
      %p203 = scmp.lt.s32.totalorder %s16, 3
      %p204 = pnand %p202, %p203
      %p205 = pneg %p204
      // Predicated region
      $region9: #{cnn_forward.1} parent=5 // pred_check
        _
      $region10: #{cnn_forward.1} parent=5 // pred_check_branch
        %207 = sbr.rel (%p204) target = $region12
      $region11: #{cnn_forward.1} parent=5 // pred_region
        %s208 = ssub.s32 %s16, 1
        // Predicated region
        $region13: #{cnn_forward.1} parent=11 // pred_check
          %p209 = pneg %p63
        $region14: #{cnn_forward.1} parent=11 // pred_check_branch
          %211 = sbr.rel (%p209) target = $region16
        $region15: #{cnn_forward.1} parent=11 // pred_region
          _
        $region16: #{cnn_forward.1} parent=11 // pred_fallthru
          _
        // Predicated region
        $region17: #{cnn_forward.1} parent=11 // pred_check
          %p212 = pneg %p84
        $region18: #{cnn_forward.1} parent=11 // pred_check_branch
          %214 = sbr.rel (%p212) target = $region20
        $region19: #{cnn_forward.1} parent=11 // pred_region
          _
        $region20: #{cnn_forward.1} parent=11 // pred_fallthru
          _
        // Predicated region
        $region21: #{cnn_forward.1} parent=11 // pred_check
          %p215 = pneg %p105
        $region22: #{cnn_forward.1} parent=11 // pred_check_branch
          %217 = sbr.rel (%p215) target = $region24
        $region23: #{cnn_forward.1} parent=11 // pred_region
          _
        $region24: #{cnn_forward.1} parent=11 // pred_fallthru
          _
        // Predicated region
        $region25: #{cnn_forward.1} parent=11 // pred_check
          %p218 = pneg %p126
        $region26: #{cnn_forward.1} parent=11 // pred_check_branch
          %220 = sbr.rel (%p218) target = $region28
        $region27: #{cnn_forward.1} parent=11 // pred_region
          _
        $region28: #{cnn_forward.1} parent=11 // pred_fallthru
          _
        // Predicated region
        $region29: #{cnn_forward.1} parent=11 // pred_check
          %p221 = pneg %p147
        $region30: #{cnn_forward.1} parent=11 // pred_check_branch
          %223 = sbr.rel (%p221) target = $region32
        $region31: #{cnn_forward.1} parent=11 // pred_region
          _
        $region32: #{cnn_forward.1} parent=11 // pred_fallthru
          _
        // Predicated region
        $region33: #{cnn_forward.1} parent=11 // pred_check
          %p224 = pneg %p168
        $region34: #{cnn_forward.1} parent=11 // pred_check_branch
          %226 = sbr.rel (%p224) target = $region36
        $region35: #{cnn_forward.1} parent=11 // pred_region
          _
        $region36: #{cnn_forward.1} parent=11 // pred_fallthru
          _
      $region12: #{cnn_forward.1} parent=5 // pred_fallthru
        _
      %p227 = scmp.lt.s32.totalorder %s16, 2
      // Predicated region
      $region37: #{cnn_forward.1} parent=5 // pred_check
        %p228 = pneg %p227
      $region38: #{cnn_forward.1} parent=5 // pred_check_branch
        %230 = sbr.rel (%p228) target = $region40
      $region39: #{cnn_forward.1} parent=5 // pred_region
        // Predicated region
        $region41: #{cnn_forward.1} parent=39 // pred_check
          %p231 = pneg %p36
        $region42: #{cnn_forward.1} parent=39 // pred_check_branch
          %233 = sbr.rel (%p231) target = $region44
        $region43: #{cnn_forward.1} parent=39 // pred_region
          %p234 = scmp.lt.s32.totalorder %s16, 1
          %s235 = scalar_select %p234, %s16, 1
          %s236 = smul.addr %s235, 180
          %s237 = smul.addr %s236, 8
          %s238 = scalar_lea.vmem %s0, %s237
        $region44: #{cnn_forward.1} parent=39 // pred_fallthru
          _
      $region40: #{cnn_forward.1} parent=5 // pred_fallthru
        _
      %p239 = scmp.le.s32.totalorder 1, %s16
      %p240 = scmp.lt.s32.totalorder %s16, 3
      %p241 = pnand %p239, %p240
      %p242 = pneg %p241
      // Predicated region
      $region45: #{cnn_forward.1} parent=5 // pred_check
        _
      $region46: #{cnn_forward.1} parent=5 // pred_check_branch
        %244 = sbr.rel (%p241) target = $region48
      $region47: #{cnn_forward.1} parent=5 // pred_region
        %s245 = ssub.s32 %s16, 1
        %p246 = scmp.lt.s32.totalorder %s21, 1
        %s247 = scalar_select %p246, %s21, 1
        %s248 = smul.addr %s247, 180
        %s249 = smul.addr %s248, 8
        %s250 = scalar_lea.vmem %s0, %s249
        %p251 = pneg %p42
        %p252 = pneg %p39
        %p253 = pneg %p63
        %p254 = pneg %p60
        %p255 = pneg %p84
        %p256 = pneg %p81
        %p257 = pneg %p105
        %p258 = pneg %p102
        %p259 = pneg %p126
        %p260 = pneg %p123
        %p261 = pneg %p147
        %p262 = pneg %p144
        %p263 = pneg %p168
        %p264 = pneg %p165
        %p265 = pneg %p194
        %p266 = pneg %p191
        %s267 = sand.u32 %s181, 1
        %s268 = scalar_lea.sflag [#allocation6], %s267
        %s269 = sand.u32 %s181, 1
        %s270 = scalar_lea.vmem [#allocation5], %s269
        %p271 = scmp.lt.s32.totalorder %s21, 1
        %s272 = scalar_select %p271, %s21, 1
        %s273 = smul.addr %s272, 180
        %s274 = smul.addr %s273, 8
        %s275 = scalar_lea.vmem %s0, %s274
        %vm276 = vcmask 523264
        %277 = vst.msk [vmem:[#allocation2] sm:$0xff] %vm276, 0.0
        %278 = vst.msk [vmem:[#allocation2 + $0x8] sm:$0xff] %vm276, 0.0
        %279 = vst.msk [vmem:[#allocation2 + $0x10] sm:$0xff] %vm276, 0.0
        %280 = vst.msk [vmem:[#allocation2 + $0x18] sm:$0xff] %vm276, 0.0
        %281 = vst.msk [vmem:[#allocation2 + $0x20] sm:$0xff] %vm276, 0.0
        %282 = vst.msk [vmem:[#allocation2 + $0x28] sm:$0xff] %vm276, 0.0
        %283 = vst.msk [vmem:[#allocation2 + $0x30] sm:$0xff] %vm276, 0.0
        %284 = vst.msk [vmem:[#allocation2 + $0x38] sm:$0xff] %vm276, 0.0
        %285 = vst.msk [vmem:[#allocation2 + $0x40] sm:$0xff] %vm276, 0.0
        %286 = vst.msk [vmem:[#allocation2 + $0x48] sm:$0xff] %vm276, 0.0
        %287 = vst.msk [vmem:[#allocation2 + $0x50] sm:$0xff] %vm276, 0.0
        %288 = vst.msk [vmem:[#allocation2 + $0x58] sm:$0xff] %vm276, 0.0
        %289 = vst.msk [vmem:[#allocation2 + $0x60] sm:$0xff] %vm276, 0.0
        %290 = vst.msk [vmem:[#allocation2 + $0x68] sm:$0xff] %vm276, 0.0
        %291 = vst.msk [vmem:[#allocation2 + $0x70] sm:$0xff] %vm276, 0.0
        %292 = vst.msk [vmem:[#allocation2 + $0x78] sm:$0xff] %vm276, 0.0
        %293 = vst.msk [vmem:[#allocation2 + $0x80] sm:$0xff] %vm276, 0.0
        %294 = vst.msk [vmem:[#allocation2 + $0x88] sm:$0xff] %vm276, 0.0
        %295 = vst.msk [vmem:[#allocation2 + $0x90] sm:$0xff] %vm276, 0.0
        %296 = vst.msk [vmem:[#allocation2 + $0x98] sm:$0xff] %vm276, 0.0
        %297 = vst.msk [vmem:[#allocation2 + $0xa0] sm:$0xff] %vm276, 0.0
        %298 = vst.msk [vmem:[#allocation2 + $0xa8] sm:$0xff] %vm276, 0.0
        %299 = vst.msk [vmem:[#allocation2 + $0xb0] sm:$0xff] %vm276, 0.0
        %300 = vst.msk [vmem:[#allocation2 + $0xb8] sm:$0xff] %vm276, 0.0
        %301 = vst.msk [vmem:[#allocation2 + $0xc0] sm:$0xff] %vm276, 0.0
        %302 = vst.msk [vmem:[#allocation2 + $0xc8] sm:$0xff] %vm276, 0.0
        %303 = vst.msk [vmem:[#allocation2 + $0xd0] sm:$0xff] %vm276, 0.0
        %304 = vst.msk [vmem:[#allocation2 + $0xd8] sm:$0xff] %vm276, 0.0
        %305 = vst.msk [vmem:[#allocation2 + $0xe0] sm:$0xff] %vm276, 0.0
        %306 = vst.msk [vmem:[#allocation2 + $0xe8] sm:$0xff] %vm276, 0.0
        %307 = vst.msk [vmem:[#allocation2 + $0xf0] sm:$0xff] %vm276, 0.0
        %308 = vst.msk [vmem:[#allocation2 + $0xf8] sm:$0xff] %vm276, 0.0
        %309 = vst.msk [vmem:[#allocation2 + $0x100] sm:$0xff] %vm276, 0.0
        %310 = vst.msk [vmem:[#allocation2 + $0x108] sm:$0xff] %vm276, 0.0
        %311 = vst.msk [vmem:[#allocation2 + $0x110] sm:$0xff] %vm276, 0.0
        %312 = vst.msk [vmem:[#allocation2 + $0x118] sm:$0xff] %vm276, 0.0
        %313 = vst.msk [vmem:[#allocation2 + $0x120] sm:$0xff] %vm276, 0.0
        %314 = vst.msk [vmem:[#allocation2 + $0x128] sm:$0xff] %vm276, 0.0
        %315 = vst.msk [vmem:[#allocation2 + $0x130] sm:$0xff] %vm276, 0.0
        %316 = vst.msk [vmem:[#allocation2 + $0x138] sm:$0xff] %vm276, 0.0
        %317 = vst.msk [vmem:[#allocation2 + $0x140] sm:$0xff] %vm276, 0.0
        %318 = vst.msk [vmem:[#allocation2 + $0x148] sm:$0xff] %vm276, 0.0
        %319 = vst.msk [vmem:[#allocation2 + $0x150] sm:$0xff] %vm276, 0.0
        %320 = vst.msk [vmem:[#allocation2 + $0x158] sm:$0xff] %vm276, 0.0
        %321 = vst.msk [vmem:[#allocation2 + $0x160] sm:$0xff] %vm276, 0.0
        %322 = vst.msk [vmem:[#allocation2 + $0x168] sm:$0xff] %vm276, 0.0
        %323 = vst.msk [vmem:[#allocation2 + $0x170] sm:$0xff] %vm276, 0.0
        %324 = vst.msk [vmem:[#allocation2 + $0x178] sm:$0xff] %vm276, 0.0
        %325 = vst.msk [vmem:[#allocation2 + $0x180] sm:$0xff] %vm276, 0.0
        %326 = vst.msk [vmem:[#allocation2 + $0x188] sm:$0xff] %vm276, 0.0
        %327 = vst.msk [vmem:[#allocation2 + $0x190] sm:$0xff] %vm276, 0.0
        %328 = vst.msk [vmem:[#allocation2 + $0x198] sm:$0xff] %vm276, 0.0
        %329 = vst.msk [vmem:[#allocation2 + $0x1a0] sm:$0xff] %vm276, 0.0
        %330 = vst.msk [vmem:[#allocation2 + $0x1a8] sm:$0xff] %vm276, 0.0
        %331 = vst.msk [vmem:[#allocation2 + $0x1b0] sm:$0xff] %vm276, 0.0
        %332 = vst.msk [vmem:[#allocation2 + $0x1b8] sm:$0xff] %vm276, 0.0
        %333 = vst.msk [vmem:[#allocation2 + $0x1c0] sm:$0xff] %vm276, 0.0
        %334 = vst.msk [vmem:[#allocation2 + $0x1c8] sm:$0xff] %vm276, 0.0
        %335 = vst.msk [vmem:[#allocation2 + $0x1d0] sm:$0xff] %vm276, 0.0
        %336 = vst.msk [vmem:[#allocation2 + $0x1d8] sm:$0xff] %vm276, 0.0
        %337 = vst.msk [vmem:[#allocation2 + $0x1e0] sm:$0xff] %vm276, 0.0
        %338 = vst.msk [vmem:[#allocation2 + $0x1e8] sm:$0xff] %vm276, 0.0
        %339 = vst.msk [vmem:[#allocation2 + $0x1f0] sm:$0xff] %vm276, 0.0
        %340 = vst.msk [vmem:[#allocation2 + $0x1f8] sm:$0xff] %vm276, 0.0
        %341 = vst.msk [vmem:[#allocation2 + $0x200] sm:$0xff] %vm276, 0.0
        %342 = vst.msk [vmem:[#allocation2 + $0x208] sm:$0xff] %vm276, 0.0
        %343 = vst.msk [vmem:[#allocation2 + $0x210] sm:$0xff] %vm276, 0.0
        %344 = vst.msk [vmem:[#allocation2 + $0x218] sm:$0xff] %vm276, 0.0
        %345 = vst.msk [vmem:[#allocation2 + $0x220] sm:$0xff] %vm276, 0.0
        %346 = vst.msk [vmem:[#allocation2 + $0x228] sm:$0xff] %vm276, 0.0
        %347 = vst.msk [vmem:[#allocation2 + $0x230] sm:$0xff] %vm276, 0.0
        %348 = vst.msk [vmem:[#allocation2 + $0x238] sm:$0xff] %vm276, 0.0
        %349 = vst.msk [vmem:[#allocation2 + $0x240] sm:$0xff] %vm276, 0.0
        %350 = vst.msk [vmem:[#allocation2 + $0x248] sm:$0xff] %vm276, 0.0
        %351 = vst.msk [vmem:[#allocation2 + $0x250] sm:$0xff] %vm276, 0.0
        %352 = vst.msk [vmem:[#allocation2 + $0x258] sm:$0xff] %vm276, 0.0
        %353 = vst.msk [vmem:[#allocation2 + $0x260] sm:$0xff] %vm276, 0.0
        %354 = vst.msk [vmem:[#allocation2 + $0x268] sm:$0xff] %vm276, 0.0
        %355 = vst.msk [vmem:[#allocation2 + $0x270] sm:$0xff] %vm276, 0.0
        %356 = vst.msk [vmem:[#allocation2 + $0x278] sm:$0xff] %vm276, 0.0
        loop: start=0, step=1, limit=16
        $region49: #{cnn_forward.1} parent=47 // loop_pre_header
          _
        $region50: #{cnn_forward.1} parent=47 // loop_header
          %s358 = sphi 0, %s362
          %p359 = scmp.ge.s32.totalorder %s358, 16
        $region51: #{cnn_forward.1} parent=47 // loop_header_branch
          %361 = sbr.rel (%p359) target = $region55
        $region52: #{cnn_forward.1} parent=47 // loop_body
          %s363 = smul.u32 %s358, 2
          %s364 = smul.u32 %s363, 40
          %s365 = scalar_lea.vmem %s275, %s364
          %v366 = vld [vmem:[%s365] sm:$0xff]
          %v367 = vld [vmem:[%s365 + $0x8] sm:$0xff]
          %v368 = vld [vmem:[%s365 + $0x10] sm:$0xff]
          %v369 = vld [vmem:[%s365 + $0x18] sm:$0xff]
          %v370 = vld [vmem:[%s365 + $0x28] sm:$0xff]
          %v371 = vld [vmem:[%s365 + $0x30] sm:$0xff]
          %v372 = vld [vmem:[%s365 + $0x38] sm:$0xff]
          %v373 = vld [vmem:[%s365 + $0x40] sm:$0xff]
          %v374 = vld [vmem:[%s1] sm:$0x1]
          %376 = vset.pattern.permute.xlu0 0
          %377 = vperm.xlu0 %376, %v366
          %v378 = vpop.permute.xlu0 %377
          %381 = vset.pattern.permute.xlu0 0
          %382 = vperm.xlu0 %381, %v367
          %v383 = vpop.permute.xlu0 %382
          %386 = vset.pattern.permute.xlu0 0
          %387 = vperm.xlu0 %386, %v368
          %v388 = vpop.permute.xlu0 %387
          %391 = vset.pattern.permute.xlu0 0
          %392 = vperm.xlu0 %391, %v369
          %v393 = vpop.permute.xlu0 %392
          %396 = vset.pattern.permute.xlu0 0
          %397 = vperm.xlu0 %396, %v370
          %v398 = vpop.permute.xlu0 %397
          %401 = vset.pattern.permute.xlu0 0
          %402 = vperm.xlu0 %401, %v371
          %v403 = vpop.permute.xlu0 %402
          %406 = vset.pattern.permute.xlu0 0
          %407 = vperm.xlu0 %406, %v372
          %v408 = vpop.permute.xlu0 %407
          %411 = vset.pattern.permute.xlu0 0
          %412 = vperm.xlu0 %411, %v373
          %v413 = vpop.permute.xlu0 %412
          %v415 = vlaneseq
          %v416 = vshrl.u32 %v415, 7
          %v417 = vsub.s32 0, %v416
          %v418 = vrot.slane %v374, %v417
          %v419 = vmul.f32 %v378, %v418
          %v420 = vmul.f32 %v383, %v418
          %v421 = vmul.f32 %v388, %v418
          %v422 = vmul.f32 %v393, %v418
          %v423 = vmul.f32 %v398, %v418
          %v424 = vmul.f32 %v403, %v418
          %v425 = vmul.f32 %v408, %v418
          %v426 = vmul.f32 %v413, %v418
          %v427 = vadd.f32 %v419, 0.0
          %v428 = vadd.f32 %v420, 0.0
          %v429 = vadd.f32 %v421, 0.0
          %v430 = vadd.f32 %v422, 0.0
          %v431 = vadd.f32 %v423, 0.0
          %v432 = vadd.f32 %v424, 0.0
          %v433 = vadd.f32 %v425, 0.0
          %v434 = vadd.f32 %v426, 0.0
          %v435 = vld [vmem:[%s365 + $0x1] sm:$0xff]
          %v436 = vld [vmem:[%s365 + $0x9] sm:$0xff]
          %v437 = vld [vmem:[%s365 + $0x11] sm:$0xff]
          %v438 = vld [vmem:[%s365 + $0x19] sm:$0xff]
          %v439 = vld [vmem:[%s365 + $0x29] sm:$0xff]
          %v440 = vld [vmem:[%s365 + $0x31] sm:$0xff]
          %v441 = vld [vmem:[%s365 + $0x39] sm:$0xff]
          %v442 = vld [vmem:[%s365 + $0x41] sm:$0xff]
          %v443 = vld [vmem:[%s1 + $0x1] sm:$0x1]
          %445 = vset.pattern.permute.xlu0 0
          %446 = vperm.xlu0 %445, %v435
          %v447 = vpop.permute.xlu0 %446
          %450 = vset.pattern.permute.xlu0 0
          %451 = vperm.xlu0 %450, %v436
          %v452 = vpop.permute.xlu0 %451
          %455 = vset.pattern.permute.xlu0 0
          %456 = vperm.xlu0 %455, %v437
          %v457 = vpop.permute.xlu0 %456
          %460 = vset.pattern.permute.xlu0 0
          %461 = vperm.xlu0 %460, %v438
          %v462 = vpop.permute.xlu0 %461
          %465 = vset.pattern.permute.xlu0 0
          %466 = vperm.xlu0 %465, %v439
          %v467 = vpop.permute.xlu0 %466
          %470 = vset.pattern.permute.xlu0 0
          %471 = vperm.xlu0 %470, %v440
          %v472 = vpop.permute.xlu0 %471
          %475 = vset.pattern.permute.xlu0 0
          %476 = vperm.xlu0 %475, %v441
          %v477 = vpop.permute.xlu0 %476
          %480 = vset.pattern.permute.xlu0 0
          %481 = vperm.xlu0 %480, %v442
          %v482 = vpop.permute.xlu0 %481
          %v484 = vlaneseq
          %v485 = vshrl.u32 %v484, 7
          %v486 = vsub.s32 0, %v485
          %v487 = vrot.slane %v443, %v486
          %v488 = vmul.f32 %v447, %v487
          %v489 = vmul.f32 %v452, %v487
          %v490 = vmul.f32 %v457, %v487
          %v491 = vmul.f32 %v462, %v487
          %v492 = vmul.f32 %v467, %v487
          %v493 = vmul.f32 %v472, %v487
          %v494 = vmul.f32 %v477, %v487
          %v495 = vmul.f32 %v482, %v487
          %v496 = vadd.f32 %v427, %v488
          %v497 = vadd.f32 %v428, %v489
          %v498 = vadd.f32 %v429, %v490
          %v499 = vadd.f32 %v430, %v491
          %v500 = vadd.f32 %v431, %v492
          %v501 = vadd.f32 %v432, %v493
          %v502 = vadd.f32 %v433, %v494
          %v503 = vadd.f32 %v434, %v495
          %v504 = vld [vmem:[%s365 + $0x2] sm:$0xff]
          %v505 = vld [vmem:[%s365 + $0xa] sm:$0xff]
          %v506 = vld [vmem:[%s365 + $0x12] sm:$0xff]
          %v507 = vld [vmem:[%s365 + $0x1a] sm:$0xff]
          %v508 = vld [vmem:[%s365 + $0x2a] sm:$0xff]
          %v509 = vld [vmem:[%s365 + $0x32] sm:$0xff]
          %v510 = vld [vmem:[%s365 + $0x3a] sm:$0xff]
          %v511 = vld [vmem:[%s365 + $0x42] sm:$0xff]
          %v512 = vld [vmem:[%s1 + $0x2] sm:$0x1]
          %514 = vset.pattern.permute.xlu0 0
          %515 = vperm.xlu0 %514, %v504
          %v516 = vpop.permute.xlu0 %515
          %519 = vset.pattern.permute.xlu0 0
          %520 = vperm.xlu0 %519, %v505
          %v521 = vpop.permute.xlu0 %520
          %524 = vset.pattern.permute.xlu0 0
          %525 = vperm.xlu0 %524, %v506
          %v526 = vpop.permute.xlu0 %525
          %529 = vset.pattern.permute.xlu0 0
          %530 = vperm.xlu0 %529, %v507
          %v531 = vpop.permute.xlu0 %530
          %534 = vset.pattern.permute.xlu0 0
          %535 = vperm.xlu0 %534, %v508
          %v536 = vpop.permute.xlu0 %535
          %539 = vset.pattern.permute.xlu0 0
          %540 = vperm.xlu0 %539, %v509
          %v541 = vpop.permute.xlu0 %540
          %544 = vset.pattern.permute.xlu0 0
          %545 = vperm.xlu0 %544, %v510
          %v546 = vpop.permute.xlu0 %545
          %549 = vset.pattern.permute.xlu0 0
          %550 = vperm.xlu0 %549, %v511
          %v551 = vpop.permute.xlu0 %550
          %v553 = vlaneseq
          %v554 = vshrl.u32 %v553, 7
          %v555 = vsub.s32 0, %v554
          %v556 = vrot.slane %v512, %v555
          %v557 = vmul.f32 %v516, %v556
          %v558 = vmul.f32 %v521, %v556
          %v559 = vmul.f32 %v526, %v556
          %v560 = vmul.f32 %v531, %v556
          %v561 = vmul.f32 %v536, %v556
          %v562 = vmul.f32 %v541, %v556
          %v563 = vmul.f32 %v546, %v556
          %v564 = vmul.f32 %v551, %v556
          %v565 = vadd.f32 %v496, %v557
          %v566 = vadd.f32 %v497, %v558
          %v567 = vadd.f32 %v498, %v559
          %v568 = vadd.f32 %v499, %v560
          %v569 = vadd.f32 %v500, %v561
          %v570 = vadd.f32 %v501, %v562
          %v571 = vadd.f32 %v502, %v563
          %v572 = vadd.f32 %v503, %v564
          %v573 = vld [vmem:[%s365 + $0x3] sm:$0xff]
          %v574 = vld [vmem:[%s365 + $0xb] sm:$0xff]
          %v575 = vld [vmem:[%s365 + $0x13] sm:$0xff]
          %v576 = vld [vmem:[%s365 + $0x1b] sm:$0xff]
          %v577 = vld [vmem:[%s365 + $0x2b] sm:$0xff]
          %v578 = vld [vmem:[%s365 + $0x33] sm:$0xff]
          %v579 = vld [vmem:[%s365 + $0x3b] sm:$0xff]
          %v580 = vld [vmem:[%s365 + $0x43] sm:$0xff]
          %v581 = vld [vmem:[%s1 + $0x3] sm:$0x1]
          %583 = vset.pattern.permute.xlu0 0
          %584 = vperm.xlu0 %583, %v573
          %v585 = vpop.permute.xlu0 %584
          %588 = vset.pattern.permute.xlu0 0
          %589 = vperm.xlu0 %588, %v574
          %v590 = vpop.permute.xlu0 %589
          %593 = vset.pattern.permute.xlu0 0
          %594 = vperm.xlu0 %593, %v575
          %v595 = vpop.permute.xlu0 %594
          %598 = vset.pattern.permute.xlu0 0
          %599 = vperm.xlu0 %598, %v576
          %v600 = vpop.permute.xlu0 %599
          %603 = vset.pattern.permute.xlu0 0
          %604 = vperm.xlu0 %603, %v577
          %v605 = vpop.permute.xlu0 %604
          %608 = vset.pattern.permute.xlu0 0
          %609 = vperm.xlu0 %608, %v578
          %v610 = vpop.permute.xlu0 %609
          %613 = vset.pattern.permute.xlu0 0
          %614 = vperm.xlu0 %613, %v579
          %v615 = vpop.permute.xlu0 %614
          %618 = vset.pattern.permute.xlu0 0
          %619 = vperm.xlu0 %618, %v580
          %v620 = vpop.permute.xlu0 %619
          %v622 = vlaneseq
          %v623 = vshrl.u32 %v622, 7
          %v624 = vsub.s32 0, %v623
          %v625 = vrot.slane %v581, %v624
          %v626 = vmul.f32 %v585, %v625
          %v627 = vmul.f32 %v590, %v625
          %v628 = vmul.f32 %v595, %v625
          %v629 = vmul.f32 %v600, %v625
          %v630 = vmul.f32 %v605, %v625
          %v631 = vmul.f32 %v610, %v625
          %v632 = vmul.f32 %v615, %v625
          %v633 = vmul.f32 %v620, %v625
          %v634 = vadd.f32 %v565, %v626
          %v635 = vadd.f32 %v566, %v627
          %v636 = vadd.f32 %v567, %v628
          %v637 = vadd.f32 %v568, %v629
          %v638 = vadd.f32 %v569, %v630
          %v639 = vadd.f32 %v570, %v631
          %v640 = vadd.f32 %v571, %v632
          %v641 = vadd.f32 %v572, %v633
          %v642 = vld [vmem:[%s365 + $0x4] sm:$0xff]
          %v643 = vld [vmem:[%s365 + $0xc] sm:$0xff]
          %v644 = vld [vmem:[%s365 + $0x14] sm:$0xff]
          %v645 = vld [vmem:[%s365 + $0x1c] sm:$0xff]
          %v646 = vld [vmem:[%s365 + $0x2c] sm:$0xff]
          %v647 = vld [vmem:[%s365 + $0x34] sm:$0xff]
          %v648 = vld [vmem:[%s365 + $0x3c] sm:$0xff]
          %v649 = vld [vmem:[%s365 + $0x44] sm:$0xff]
          %v650 = vld [vmem:[%s1 + $0x4] sm:$0x1]
          %652 = vset.pattern.permute.xlu0 0
          %653 = vperm.xlu0 %652, %v642
          %v654 = vpop.permute.xlu0 %653
          %657 = vset.pattern.permute.xlu0 0
          %658 = vperm.xlu0 %657, %v643
          %v659 = vpop.permute.xlu0 %658
          %662 = vset.pattern.permute.xlu0 0
          %663 = vperm.xlu0 %662, %v644
          %v664 = vpop.permute.xlu0 %663
          %667 = vset.pattern.permute.xlu0 0
          %668 = vperm.xlu0 %667, %v645
          %v669 = vpop.permute.xlu0 %668
          %672 = vset.pattern.permute.xlu0 0
          %673 = vperm.xlu0 %672, %v646
          %v674 = vpop.permute.xlu0 %673
          %677 = vset.pattern.permute.xlu0 0
          %678 = vperm.xlu0 %677, %v647
          %v679 = vpop.permute.xlu0 %678
          %682 = vset.pattern.permute.xlu0 0
          %683 = vperm.xlu0 %682, %v648
          %v684 = vpop.permute.xlu0 %683
          %687 = vset.pattern.permute.xlu0 0
          %688 = vperm.xlu0 %687, %v649
          %v689 = vpop.permute.xlu0 %688
          %v691 = vlaneseq
          %v692 = vshrl.u32 %v691, 7
          %v693 = vsub.s32 0, %v692
          %v694 = vrot.slane %v650, %v693
          %v695 = vmul.f32 %v654, %v694
          %v696 = vmul.f32 %v659, %v694
          %v697 = vmul.f32 %v664, %v694
          %v698 = vmul.f32 %v669, %v694
          %v699 = vmul.f32 %v674, %v694
          %v700 = vmul.f32 %v679, %v694
          %v701 = vmul.f32 %v684, %v694
          %v702 = vmul.f32 %v689, %v694
          %v703 = vadd.f32 %v634, %v695
          %v704 = vadd.f32 %v635, %v696
          %v705 = vadd.f32 %v636, %v697
          %v706 = vadd.f32 %v637, %v698
          %v707 = vadd.f32 %v638, %v699
          %v708 = vadd.f32 %v639, %v700
          %v709 = vadd.f32 %v640, %v701
          %v710 = vadd.f32 %v641, %v702
          %s711 = sadd.s32 %s363, 1
          %s712 = smul.u32 %s711, 40
          %s713 = scalar_lea.vmem %s275, %s712
          %v714 = vld [vmem:[%s713] sm:$0xff]
          %v715 = vld [vmem:[%s713 + $0x8] sm:$0xff]
          %v716 = vld [vmem:[%s713 + $0x10] sm:$0xff]
          %v717 = vld [vmem:[%s713 + $0x18] sm:$0xff]
          %v718 = vld [vmem:[%s713 + $0x28] sm:$0xff]
          %v719 = vld [vmem:[%s713 + $0x30] sm:$0xff]
          %v720 = vld [vmem:[%s713 + $0x38] sm:$0xff]
          %v721 = vld [vmem:[%s713 + $0x40] sm:$0xff]
          %v722 = vld [vmem:[%s1 + $0x5] sm:$0x1]
          %724 = vset.pattern.permute.xlu0 0
          %725 = vperm.xlu0 %724, %v714
          %v726 = vpop.permute.xlu0 %725
          %729 = vset.pattern.permute.xlu0 0
          %730 = vperm.xlu0 %729, %v715
          %v731 = vpop.permute.xlu0 %730
          %734 = vset.pattern.permute.xlu0 0
          %735 = vperm.xlu0 %734, %v716
          %v736 = vpop.permute.xlu0 %735
          %739 = vset.pattern.permute.xlu0 0
          %740 = vperm.xlu0 %739, %v717
          %v741 = vpop.permute.xlu0 %740
          %744 = vset.pattern.permute.xlu0 0
          %745 = vperm.xlu0 %744, %v718
          %v746 = vpop.permute.xlu0 %745
          %749 = vset.pattern.permute.xlu0 0
          %750 = vperm.xlu0 %749, %v719
          %v751 = vpop.permute.xlu0 %750
          %754 = vset.pattern.permute.xlu0 0
          %755 = vperm.xlu0 %754, %v720
          %v756 = vpop.permute.xlu0 %755
          %759 = vset.pattern.permute.xlu0 0
          %760 = vperm.xlu0 %759, %v721
          %v761 = vpop.permute.xlu0 %760
          %v763 = vlaneseq
          %v764 = vshrl.u32 %v763, 7
          %v765 = vsub.s32 0, %v764
          %v766 = vrot.slane %v722, %v765
          %v767 = vmul.f32 %v726, %v766
          %v768 = vmul.f32 %v731, %v766
          %v769 = vmul.f32 %v736, %v766
          %v770 = vmul.f32 %v741, %v766
          %v771 = vmul.f32 %v746, %v766
          %v772 = vmul.f32 %v751, %v766
          %v773 = vmul.f32 %v756, %v766
          %v774 = vmul.f32 %v761, %v766
          %v775 = vadd.f32 %v703, %v767
          %v776 = vadd.f32 %v704, %v768
          %v777 = vadd.f32 %v705, %v769
          %v778 = vadd.f32 %v706, %v770
          %v779 = vadd.f32 %v707, %v771
          %v780 = vadd.f32 %v708, %v772
          %v781 = vadd.f32 %v709, %v773
          %v782 = vadd.f32 %v710, %v774
          %v783 = vld [vmem:[%s713 + $0x1] sm:$0xff]
          %v784 = vld [vmem:[%s713 + $0x9] sm:$0xff]
          %v785 = vld [vmem:[%s713 + $0x11] sm:$0xff]
          %v786 = vld [vmem:[%s713 + $0x19] sm:$0xff]
          %v787 = vld [vmem:[%s713 + $0x29] sm:$0xff]
          %v788 = vld [vmem:[%s713 + $0x31] sm:$0xff]
          %v789 = vld [vmem:[%s713 + $0x39] sm:$0xff]
          %v790 = vld [vmem:[%s713 + $0x41] sm:$0xff]
          %v791 = vld [vmem:[%s1 + $0x6] sm:$0x1]
          %793 = vset.pattern.permute.xlu0 0
          %794 = vperm.xlu0 %793, %v783
          %v795 = vpop.permute.xlu0 %794
          %798 = vset.pattern.permute.xlu0 0
          %799 = vperm.xlu0 %798, %v784
          %v800 = vpop.permute.xlu0 %799
          %803 = vset.pattern.permute.xlu0 0
          %804 = vperm.xlu0 %803, %v785
          %v805 = vpop.permute.xlu0 %804
          %808 = vset.pattern.permute.xlu0 0
          %809 = vperm.xlu0 %808, %v786
          %v810 = vpop.permute.xlu0 %809
          %813 = vset.pattern.permute.xlu0 0
          %814 = vperm.xlu0 %813, %v787
          %v815 = vpop.permute.xlu0 %814
          %818 = vset.pattern.permute.xlu0 0
          %819 = vperm.xlu0 %818, %v788
          %v820 = vpop.permute.xlu0 %819
          %823 = vset.pattern.permute.xlu0 0
          %824 = vperm.xlu0 %823, %v789
          %v825 = vpop.permute.xlu0 %824
          %828 = vset.pattern.permute.xlu0 0
          %829 = vperm.xlu0 %828, %v790
          %v830 = vpop.permute.xlu0 %829
          %v832 = vlaneseq
          %v833 = vshrl.u32 %v832, 7
          %v834 = vsub.s32 0, %v833
          %v835 = vrot.slane %v791, %v834
          %v836 = vmul.f32 %v795, %v835
          %v837 = vmul.f32 %v800, %v835
          %v838 = vmul.f32 %v805, %v835
          %v839 = vmul.f32 %v810, %v835
          %v840 = vmul.f32 %v815, %v835
          %v841 = vmul.f32 %v820, %v835
          %v842 = vmul.f32 %v825, %v835
          %v843 = vmul.f32 %v830, %v835
          %v844 = vadd.f32 %v775, %v836
          %v845 = vadd.f32 %v776, %v837
          %v846 = vadd.f32 %v777, %v838
          %v847 = vadd.f32 %v778, %v839
          %v848 = vadd.f32 %v779, %v840
          %v849 = vadd.f32 %v780, %v841
          %v850 = vadd.f32 %v781, %v842
          %v851 = vadd.f32 %v782, %v843
          %v852 = vld [vmem:[%s713 + $0x2] sm:$0xff]
          %v853 = vld [vmem:[%s713 + $0xa] sm:$0xff]
          %v854 = vld [vmem:[%s713 + $0x12] sm:$0xff]
          %v855 = vld [vmem:[%s713 + $0x1a] sm:$0xff]
          %v856 = vld [vmem:[%s713 + $0x2a] sm:$0xff]
          %v857 = vld [vmem:[%s713 + $0x32] sm:$0xff]
          %v858 = vld [vmem:[%s713 + $0x3a] sm:$0xff]
          %v859 = vld [vmem:[%s713 + $0x42] sm:$0xff]
          %v860 = vld [vmem:[%s1 + $0x7] sm:$0x1]
          %862 = vset.pattern.permute.xlu0 0
          %863 = vperm.xlu0 %862, %v852
          %v864 = vpop.permute.xlu0 %863
          %867 = vset.pattern.permute.xlu0 0
          %868 = vperm.xlu0 %867, %v853
          %v869 = vpop.permute.xlu0 %868
          %872 = vset.pattern.permute.xlu0 0
          %873 = vperm.xlu0 %872, %v854
          %v874 = vpop.permute.xlu0 %873
          %877 = vset.pattern.permute.xlu0 0
          %878 = vperm.xlu0 %877, %v855
          %v879 = vpop.permute.xlu0 %878
          %882 = vset.pattern.permute.xlu0 0
          %883 = vperm.xlu0 %882, %v856
          %v884 = vpop.permute.xlu0 %883
          %887 = vset.pattern.permute.xlu0 0
          %888 = vperm.xlu0 %887, %v857
          %v889 = vpop.permute.xlu0 %888
          %892 = vset.pattern.permute.xlu0 0
          %893 = vperm.xlu0 %892, %v858
          %v894 = vpop.permute.xlu0 %893
          %897 = vset.pattern.permute.xlu0 0
          %898 = vperm.xlu0 %897, %v859
          %v899 = vpop.permute.xlu0 %898
          %v901 = vlaneseq
          %v902 = vshrl.u32 %v901, 7
          %v903 = vsub.s32 0, %v902
          %v904 = vrot.slane %v860, %v903
          %v905 = vmul.f32 %v864, %v904
          %v906 = vmul.f32 %v869, %v904
          %v907 = vmul.f32 %v874, %v904
          %v908 = vmul.f32 %v879, %v904
          %v909 = vmul.f32 %v884, %v904
          %v910 = vmul.f32 %v889, %v904
          %v911 = vmul.f32 %v894, %v904
          %v912 = vmul.f32 %v899, %v904
          %v913 = vadd.f32 %v844, %v905
          %v914 = vadd.f32 %v845, %v906
          %v915 = vadd.f32 %v846, %v907
          %v916 = vadd.f32 %v847, %v908
          %v917 = vadd.f32 %v848, %v909
          %v918 = vadd.f32 %v849, %v910
          %v919 = vadd.f32 %v850, %v911
          %v920 = vadd.f32 %v851, %v912
          %v921 = vld [vmem:[%s713 + $0x3] sm:$0xff]
          %v922 = vld [vmem:[%s713 + $0xb] sm:$0xff]
          %v923 = vld [vmem:[%s713 + $0x13] sm:$0xff]
          %v924 = vld [vmem:[%s713 + $0x1b] sm:$0xff]
          %v925 = vld [vmem:[%s713 + $0x2b] sm:$0xff]
          %v926 = vld [vmem:[%s713 + $0x33] sm:$0xff]
          %v927 = vld [vmem:[%s713 + $0x3b] sm:$0xff]
          %v928 = vld [vmem:[%s713 + $0x43] sm:$0xff]
          %v929 = vld [vmem:[%s1 + $0x8] sm:$0x1]
          %931 = vset.pattern.permute.xlu0 0
          %932 = vperm.xlu0 %931, %v921
          %v933 = vpop.permute.xlu0 %932
          %936 = vset.pattern.permute.xlu0 0
          %937 = vperm.xlu0 %936, %v922
          %v938 = vpop.permute.xlu0 %937
          %941 = vset.pattern.permute.xlu0 0
          %942 = vperm.xlu0 %941, %v923
          %v943 = vpop.permute.xlu0 %942
          %946 = vset.pattern.permute.xlu0 0
          %947 = vperm.xlu0 %946, %v924
          %v948 = vpop.permute.xlu0 %947
          %951 = vset.pattern.permute.xlu0 0
          %952 = vperm.xlu0 %951, %v925
          %v953 = vpop.permute.xlu0 %952
          %956 = vset.pattern.permute.xlu0 0
          %957 = vperm.xlu0 %956, %v926
          %v958 = vpop.permute.xlu0 %957
          %961 = vset.pattern.permute.xlu0 0
          %962 = vperm.xlu0 %961, %v927
          %v963 = vpop.permute.xlu0 %962
          %966 = vset.pattern.permute.xlu0 0
          %967 = vperm.xlu0 %966, %v928
          %v968 = vpop.permute.xlu0 %967
          %v970 = vlaneseq
          %v971 = vshrl.u32 %v970, 7
          %v972 = vsub.s32 0, %v971
          %v973 = vrot.slane %v929, %v972
          %v974 = vmul.f32 %v933, %v973
          %v975 = vmul.f32 %v938, %v973
          %v976 = vmul.f32 %v943, %v973
          %v977 = vmul.f32 %v948, %v973
          %v978 = vmul.f32 %v953, %v973
          %v979 = vmul.f32 %v958, %v973
          %v980 = vmul.f32 %v963, %v973
          %v981 = vmul.f32 %v968, %v973
          %v982 = vadd.f32 %v913, %v974
          %v983 = vadd.f32 %v914, %v975
          %v984 = vadd.f32 %v915, %v976
          %v985 = vadd.f32 %v916, %v977
          %v986 = vadd.f32 %v917, %v978
          %v987 = vadd.f32 %v918, %v979
          %v988 = vadd.f32 %v919, %v980
          %v989 = vadd.f32 %v920, %v981
          %v990 = vld [vmem:[%s713 + $0x4] sm:$0xff]
          %v991 = vld [vmem:[%s713 + $0xc] sm:$0xff]
          %v992 = vld [vmem:[%s713 + $0x14] sm:$0xff]
          %v993 = vld [vmem:[%s713 + $0x1c] sm:$0xff]
          %v994 = vld [vmem:[%s713 + $0x2c] sm:$0xff]
          %v995 = vld [vmem:[%s713 + $0x34] sm:$0xff]
          %v996 = vld [vmem:[%s713 + $0x3c] sm:$0xff]
          %v997 = vld [vmem:[%s713 + $0x44] sm:$0xff]
          %v998 = vld [vmem:[%s1 + $0x9] sm:$0x1]
          %1000 = vset.pattern.permute.xlu0 0
          %1001 = vperm.xlu0 %1000, %v990
          %v1002 = vpop.permute.xlu0 %1001
          %1005 = vset.pattern.permute.xlu0 0
          %1006 = vperm.xlu0 %1005, %v991
          %v1007 = vpop.permute.xlu0 %1006
          %1010 = vset.pattern.permute.xlu0 0
          %1011 = vperm.xlu0 %1010, %v992
          %v1012 = vpop.permute.xlu0 %1011
          %1015 = vset.pattern.permute.xlu0 0
          %1016 = vperm.xlu0 %1015, %v993
          %v1017 = vpop.permute.xlu0 %1016
          %1020 = vset.pattern.permute.xlu0 0
          %1021 = vperm.xlu0 %1020, %v994
          %v1022 = vpop.permute.xlu0 %1021
          %1025 = vset.pattern.permute.xlu0 0
          %1026 = vperm.xlu0 %1025, %v995
          %v1027 = vpop.permute.xlu0 %1026
          %1030 = vset.pattern.permute.xlu0 0
          %1031 = vperm.xlu0 %1030, %v996
          %v1032 = vpop.permute.xlu0 %1031
          %1035 = vset.pattern.permute.xlu0 0
          %1036 = vperm.xlu0 %1035, %v997
          %v1037 = vpop.permute.xlu0 %1036
          %v1039 = vlaneseq
          %v1040 = vshrl.u32 %v1039, 7
          %v1041 = vsub.s32 0, %v1040
          %v1042 = vrot.slane %v998, %v1041
          %v1043 = vmul.f32 %v1002, %v1042
          %v1044 = vmul.f32 %v1007, %v1042
          %v1045 = vmul.f32 %v1012, %v1042
          %v1046 = vmul.f32 %v1017, %v1042
          %v1047 = vmul.f32 %v1022, %v1042
          %v1048 = vmul.f32 %v1027, %v1042
          %v1049 = vmul.f32 %v1032, %v1042
          %v1050 = vmul.f32 %v1037, %v1042
          %v1051 = vadd.f32 %v982, %v1043
          %v1052 = vadd.f32 %v983, %v1044
          %v1053 = vadd.f32 %v984, %v1045
          %v1054 = vadd.f32 %v985, %v1046
          %v1055 = vadd.f32 %v986, %v1047
          %v1056 = vadd.f32 %v987, %v1048
          %v1057 = vadd.f32 %v988, %v1049
          %v1058 = vadd.f32 %v989, %v1050
          %s1059 = sadd.s32 %s363, 2
          %s1060 = smul.u32 %s1059, 40
          %s1061 = scalar_lea.vmem %s275, %s1060
          %v1062 = vld [vmem:[%s1061] sm:$0xff]
          %v1063 = vld [vmem:[%s1061 + $0x8] sm:$0xff]
          %v1064 = vld [vmem:[%s1061 + $0x10] sm:$0xff]
          %v1065 = vld [vmem:[%s1061 + $0x18] sm:$0xff]
          %v1066 = vld [vmem:[%s1061 + $0x28] sm:$0xff]
          %v1067 = vld [vmem:[%s1061 + $0x30] sm:$0xff]
          %v1068 = vld [vmem:[%s1061 + $0x38] sm:$0xff]
          %v1069 = vld [vmem:[%s1061 + $0x40] sm:$0xff]
          %v1070 = vld [vmem:[%s1 + $0xa] sm:$0x1]
          %1072 = vset.pattern.permute.xlu0 0
          %1073 = vperm.xlu0 %1072, %v1062
          %v1074 = vpop.permute.xlu0 %1073
          %1077 = vset.pattern.permute.xlu0 0
          %1078 = vperm.xlu0 %1077, %v1063
          %v1079 = vpop.permute.xlu0 %1078
          %1082 = vset.pattern.permute.xlu0 0
          %1083 = vperm.xlu0 %1082, %v1064
          %v1084 = vpop.permute.xlu0 %1083
          %1087 = vset.pattern.permute.xlu0 0
          %1088 = vperm.xlu0 %1087, %v1065
          %v1089 = vpop.permute.xlu0 %1088
          %1092 = vset.pattern.permute.xlu0 0
          %1093 = vperm.xlu0 %1092, %v1066
          %v1094 = vpop.permute.xlu0 %1093
          %1097 = vset.pattern.permute.xlu0 0
          %1098 = vperm.xlu0 %1097, %v1067
          %v1099 = vpop.permute.xlu0 %1098
          %1102 = vset.pattern.permute.xlu0 0
          %1103 = vperm.xlu0 %1102, %v1068
          %v1104 = vpop.permute.xlu0 %1103
          %1107 = vset.pattern.permute.xlu0 0
          %1108 = vperm.xlu0 %1107, %v1069
          %v1109 = vpop.permute.xlu0 %1108
          %v1111 = vlaneseq
          %v1112 = vshrl.u32 %v1111, 7
          %v1113 = vsub.s32 0, %v1112
          %v1114 = vrot.slane %v1070, %v1113
          %v1115 = vmul.f32 %v1074, %v1114
          %v1116 = vmul.f32 %v1079, %v1114
          %v1117 = vmul.f32 %v1084, %v1114
          %v1118 = vmul.f32 %v1089, %v1114
          %v1119 = vmul.f32 %v1094, %v1114
          %v1120 = vmul.f32 %v1099, %v1114
          %v1121 = vmul.f32 %v1104, %v1114
          %v1122 = vmul.f32 %v1109, %v1114
          %v1123 = vadd.f32 %v1051, %v1115
          %v1124 = vadd.f32 %v1052, %v1116
          %v1125 = vadd.f32 %v1053, %v1117
          %v1126 = vadd.f32 %v1054, %v1118
          %v1127 = vadd.f32 %v1055, %v1119
          %v1128 = vadd.f32 %v1056, %v1120
          %v1129 = vadd.f32 %v1057, %v1121
          %v1130 = vadd.f32 %v1058, %v1122
          %v1131 = vld [vmem:[%s1061 + $0x1] sm:$0xff]
          %v1132 = vld [vmem:[%s1061 + $0x9] sm:$0xff]
          %v1133 = vld [vmem:[%s1061 + $0x11] sm:$0xff]
          %v1134 = vld [vmem:[%s1061 + $0x19] sm:$0xff]
          %v1135 = vld [vmem:[%s1061 + $0x29] sm:$0xff]
          %v1136 = vld [vmem:[%s1061 + $0x31] sm:$0xff]
          %v1137 = vld [vmem:[%s1061 + $0x39] sm:$0xff]
          %v1138 = vld [vmem:[%s1061 + $0x41] sm:$0xff]
          %v1139 = vld [vmem:[%s1 + $0xb] sm:$0x1]
          %1141 = vset.pattern.permute.xlu0 0
          %1142 = vperm.xlu0 %1141, %v1131
          %v1143 = vpop.permute.xlu0 %1142
          %1146 = vset.pattern.permute.xlu0 0
          %1147 = vperm.xlu0 %1146, %v1132
          %v1148 = vpop.permute.xlu0 %1147
          %1151 = vset.pattern.permute.xlu0 0
          %1152 = vperm.xlu0 %1151, %v1133
          %v1153 = vpop.permute.xlu0 %1152
          %1156 = vset.pattern.permute.xlu0 0
          %1157 = vperm.xlu0 %1156, %v1134
          %v1158 = vpop.permute.xlu0 %1157
          %1161 = vset.pattern.permute.xlu0 0
          %1162 = vperm.xlu0 %1161, %v1135
          %v1163 = vpop.permute.xlu0 %1162
          %1166 = vset.pattern.permute.xlu0 0
          %1167 = vperm.xlu0 %1166, %v1136
          %v1168 = vpop.permute.xlu0 %1167
          %1171 = vset.pattern.permute.xlu0 0
          %1172 = vperm.xlu0 %1171, %v1137
          %v1173 = vpop.permute.xlu0 %1172
          %1176 = vset.pattern.permute.xlu0 0
          %1177 = vperm.xlu0 %1176, %v1138
          %v1178 = vpop.permute.xlu0 %1177
          %v1180 = vlaneseq
          %v1181 = vshrl.u32 %v1180, 7
          %v1182 = vsub.s32 0, %v1181
          %v1183 = vrot.slane %v1139, %v1182
          %v1184 = vmul.f32 %v1143, %v1183
          %v1185 = vmul.f32 %v1148, %v1183
          %v1186 = vmul.f32 %v1153, %v1183
          %v1187 = vmul.f32 %v1158, %v1183
          %v1188 = vmul.f32 %v1163, %v1183
          %v1189 = vmul.f32 %v1168, %v1183
          %v1190 = vmul.f32 %v1173, %v1183
          %v1191 = vmul.f32 %v1178, %v1183
          %v1192 = vadd.f32 %v1123, %v1184
          %v1193 = vadd.f32 %v1124, %v1185
          %v1194 = vadd.f32 %v1125, %v1186
          %v1195 = vadd.f32 %v1126, %v1187
          %v1196 = vadd.f32 %v1127, %v1188
          %v1197 = vadd.f32 %v1128, %v1189
          %v1198 = vadd.f32 %v1129, %v1190
          %v1199 = vadd.f32 %v1130, %v1191
          %v1200 = vld [vmem:[%s1061 + $0x2] sm:$0xff]
          %v1201 = vld [vmem:[%s1061 + $0xa] sm:$0xff]
          %v1202 = vld [vmem:[%s1061 + $0x12] sm:$0xff]
          %v1203 = vld [vmem:[%s1061 + $0x1a] sm:$0xff]
          %v1204 = vld [vmem:[%s1061 + $0x2a] sm:$0xff]
          %v1205 = vld [vmem:[%s1061 + $0x32] sm:$0xff]
          %v1206 = vld [vmem:[%s1061 + $0x3a] sm:$0xff]
          %v1207 = vld [vmem:[%s1061 + $0x42] sm:$0xff]
          %v1208 = vld [vmem:[%s1 + $0xc] sm:$0x1]
          %1210 = vset.pattern.permute.xlu0 0
          %1211 = vperm.xlu0 %1210, %v1200
          %v1212 = vpop.permute.xlu0 %1211
          %1215 = vset.pattern.permute.xlu0 0
          %1216 = vperm.xlu0 %1215, %v1201
          %v1217 = vpop.permute.xlu0 %1216
          %1220 = vset.pattern.permute.xlu0 0
          %1221 = vperm.xlu0 %1220, %v1202
          %v1222 = vpop.permute.xlu0 %1221
          %1225 = vset.pattern.permute.xlu0 0
          %1226 = vperm.xlu0 %1225, %v1203
          %v1227 = vpop.permute.xlu0 %1226
          %1230 = vset.pattern.permute.xlu0 0
          %1231 = vperm.xlu0 %1230, %v1204
          %v1232 = vpop.permute.xlu0 %1231
          %1235 = vset.pattern.permute.xlu0 0
          %1236 = vperm.xlu0 %1235, %v1205
          %v1237 = vpop.permute.xlu0 %1236
          %1240 = vset.pattern.permute.xlu0 0
          %1241 = vperm.xlu0 %1240, %v1206
          %v1242 = vpop.permute.xlu0 %1241
          %1245 = vset.pattern.permute.xlu0 0
          %1246 = vperm.xlu0 %1245, %v1207
          %v1247 = vpop.permute.xlu0 %1246
          %v1249 = vlaneseq
          %v1250 = vshrl.u32 %v1249, 7
          %v1251 = vsub.s32 0, %v1250
          %v1252 = vrot.slane %v1208, %v1251
          %v1253 = vmul.f32 %v1212, %v1252
          %v1254 = vmul.f32 %v1217, %v1252
          %v1255 = vmul.f32 %v1222, %v1252
          %v1256 = vmul.f32 %v1227, %v1252
          %v1257 = vmul.f32 %v1232, %v1252
          %v1258 = vmul.f32 %v1237, %v1252
          %v1259 = vmul.f32 %v1242, %v1252
          %v1260 = vmul.f32 %v1247, %v1252
          %v1261 = vadd.f32 %v1192, %v1253
          %v1262 = vadd.f32 %v1193, %v1254
          %v1263 = vadd.f32 %v1194, %v1255
          %v1264 = vadd.f32 %v1195, %v1256
          %v1265 = vadd.f32 %v1196, %v1257
          %v1266 = vadd.f32 %v1197, %v1258
          %v1267 = vadd.f32 %v1198, %v1259
          %v1268 = vadd.f32 %v1199, %v1260
          %v1269 = vld [vmem:[%s1061 + $0x3] sm:$0xff]
          %v1270 = vld [vmem:[%s1061 + $0xb] sm:$0xff]
          %v1271 = vld [vmem:[%s1061 + $0x13] sm:$0xff]
          %v1272 = vld [vmem:[%s1061 + $0x1b] sm:$0xff]
          %v1273 = vld [vmem:[%s1061 + $0x2b] sm:$0xff]
          %v1274 = vld [vmem:[%s1061 + $0x33] sm:$0xff]
          %v1275 = vld [vmem:[%s1061 + $0x3b] sm:$0xff]
          %v1276 = vld [vmem:[%s1061 + $0x43] sm:$0xff]
          %v1277 = vld [vmem:[%s1 + $0xd] sm:$0x1]
          %1279 = vset.pattern.permute.xlu0 0
          %1280 = vperm.xlu0 %1279, %v1269
          %v1281 = vpop.permute.xlu0 %1280
          %1284 = vset.pattern.permute.xlu0 0
          %1285 = vperm.xlu0 %1284, %v1270
          %v1286 = vpop.permute.xlu0 %1285
          %1289 = vset.pattern.permute.xlu0 0
          %1290 = vperm.xlu0 %1289, %v1271
          %v1291 = vpop.permute.xlu0 %1290
          %1294 = vset.pattern.permute.xlu0 0
          %1295 = vperm.xlu0 %1294, %v1272
          %v1296 = vpop.permute.xlu0 %1295
          %1299 = vset.pattern.permute.xlu0 0
          %1300 = vperm.xlu0 %1299, %v1273
          %v1301 = vpop.permute.xlu0 %1300
          %1304 = vset.pattern.permute.xlu0 0
          %1305 = vperm.xlu0 %1304, %v1274
          %v1306 = vpop.permute.xlu0 %1305
          %1309 = vset.pattern.permute.xlu0 0
          %1310 = vperm.xlu0 %1309, %v1275
          %v1311 = vpop.permute.xlu0 %1310
          %1314 = vset.pattern.permute.xlu0 0
          %1315 = vperm.xlu0 %1314, %v1276
          %v1316 = vpop.permute.xlu0 %1315
          %v1318 = vlaneseq
          %v1319 = vshrl.u32 %v1318, 7
          %v1320 = vsub.s32 0, %v1319
          %v1321 = vrot.slane %v1277, %v1320
          %v1322 = vmul.f32 %v1281, %v1321
          %v1323 = vmul.f32 %v1286, %v1321
          %v1324 = vmul.f32 %v1291, %v1321
          %v1325 = vmul.f32 %v1296, %v1321
          %v1326 = vmul.f32 %v1301, %v1321
          %v1327 = vmul.f32 %v1306, %v1321
          %v1328 = vmul.f32 %v1311, %v1321
          %v1329 = vmul.f32 %v1316, %v1321
          %v1330 = vadd.f32 %v1261, %v1322
          %v1331 = vadd.f32 %v1262, %v1323
          %v1332 = vadd.f32 %v1263, %v1324
          %v1333 = vadd.f32 %v1264, %v1325
          %v1334 = vadd.f32 %v1265, %v1326
          %v1335 = vadd.f32 %v1266, %v1327
          %v1336 = vadd.f32 %v1267, %v1328
          %v1337 = vadd.f32 %v1268, %v1329
          %v1338 = vld [vmem:[%s1061 + $0x4] sm:$0xff]
          %v1339 = vld [vmem:[%s1061 + $0xc] sm:$0xff]
          %v1340 = vld [vmem:[%s1061 + $0x14] sm:$0xff]
          %v1341 = vld [vmem:[%s1061 + $0x1c] sm:$0xff]
          %v1342 = vld [vmem:[%s1061 + $0x2c] sm:$0xff]
          %v1343 = vld [vmem:[%s1061 + $0x34] sm:$0xff]
          %v1344 = vld [vmem:[%s1061 + $0x3c] sm:$0xff]
          %v1345 = vld [vmem:[%s1061 + $0x44] sm:$0xff]
          %v1346 = vld [vmem:[%s1 + $0xe] sm:$0x1]
          %1348 = vset.pattern.permute.xlu0 0
          %1349 = vperm.xlu0 %1348, %v1338
          %v1350 = vpop.permute.xlu0 %1349
          %1353 = vset.pattern.permute.xlu0 0
          %1354 = vperm.xlu0 %1353, %v1339
          %v1355 = vpop.permute.xlu0 %1354
          %1358 = vset.pattern.permute.xlu0 0
          %1359 = vperm.xlu0 %1358, %v1340
          %v1360 = vpop.permute.xlu0 %1359
          %1363 = vset.pattern.permute.xlu0 0
          %1364 = vperm.xlu0 %1363, %v1341
          %v1365 = vpop.permute.xlu0 %1364
          %1368 = vset.pattern.permute.xlu0 0
          %1369 = vperm.xlu0 %1368, %v1342
          %v1370 = vpop.permute.xlu0 %1369
          %1373 = vset.pattern.permute.xlu0 0
          %1374 = vperm.xlu0 %1373, %v1343
          %v1375 = vpop.permute.xlu0 %1374
          %1378 = vset.pattern.permute.xlu0 0
          %1379 = vperm.xlu0 %1378, %v1344
          %v1380 = vpop.permute.xlu0 %1379
          %1383 = vset.pattern.permute.xlu0 0
          %1384 = vperm.xlu0 %1383, %v1345
          %v1385 = vpop.permute.xlu0 %1384
          %v1387 = vlaneseq
          %v1388 = vshrl.u32 %v1387, 7
          %v1389 = vsub.s32 0, %v1388
          %v1390 = vrot.slane %v1346, %v1389
          %v1391 = vmul.f32 %v1350, %v1390
          %v1392 = vmul.f32 %v1355, %v1390
          %v1393 = vmul.f32 %v1360, %v1390
          %v1394 = vmul.f32 %v1365, %v1390
          %v1395 = vmul.f32 %v1370, %v1390
          %v1396 = vmul.f32 %v1375, %v1390
          %v1397 = vmul.f32 %v1380, %v1390
          %v1398 = vmul.f32 %v1385, %v1390
          %v1399 = vadd.f32 %v1330, %v1391
          %v1400 = vadd.f32 %v1331, %v1392
          %v1401 = vadd.f32 %v1332, %v1393
          %v1402 = vadd.f32 %v1333, %v1394
          %v1403 = vadd.f32 %v1334, %v1395
          %v1404 = vadd.f32 %v1335, %v1396
          %v1405 = vadd.f32 %v1336, %v1397
          %v1406 = vadd.f32 %v1337, %v1398
          %s1407 = sadd.s32 %s363, 3
          %s1408 = smul.u32 %s1407, 40
          %s1409 = scalar_lea.vmem %s275, %s1408
          %v1410 = vld [vmem:[%s1409] sm:$0xff]
          %v1411 = vld [vmem:[%s1409 + $0x8] sm:$0xff]
          %v1412 = vld [vmem:[%s1409 + $0x10] sm:$0xff]
          %v1413 = vld [vmem:[%s1409 + $0x18] sm:$0xff]
          %v1414 = vld [vmem:[%s1409 + $0x28] sm:$0xff]
          %v1415 = vld [vmem:[%s1409 + $0x30] sm:$0xff]
          %v1416 = vld [vmem:[%s1409 + $0x38] sm:$0xff]
          %v1417 = vld [vmem:[%s1409 + $0x40] sm:$0xff]
          %v1418 = vld [vmem:[%s1 + $0xf] sm:$0x1]
          %1420 = vset.pattern.permute.xlu0 0
          %1421 = vperm.xlu0 %1420, %v1410
          %v1422 = vpop.permute.xlu0 %1421
          %1425 = vset.pattern.permute.xlu0 0
          %1426 = vperm.xlu0 %1425, %v1411
          %v1427 = vpop.permute.xlu0 %1426
          %1430 = vset.pattern.permute.xlu0 0
          %1431 = vperm.xlu0 %1430, %v1412
          %v1432 = vpop.permute.xlu0 %1431
          %1435 = vset.pattern.permute.xlu0 0
          %1436 = vperm.xlu0 %1435, %v1413
          %v1437 = vpop.permute.xlu0 %1436
          %1440 = vset.pattern.permute.xlu0 0
          %1441 = vperm.xlu0 %1440, %v1414
          %v1442 = vpop.permute.xlu0 %1441
          %1445 = vset.pattern.permute.xlu0 0
          %1446 = vperm.xlu0 %1445, %v1415
          %v1447 = vpop.permute.xlu0 %1446
          %1450 = vset.pattern.permute.xlu0 0
          %1451 = vperm.xlu0 %1450, %v1416
          %v1452 = vpop.permute.xlu0 %1451
          %1455 = vset.pattern.permute.xlu0 0
          %1456 = vperm.xlu0 %1455, %v1417
          %v1457 = vpop.permute.xlu0 %1456
          %v1459 = vlaneseq
          %v1460 = vshrl.u32 %v1459, 7
          %v1461 = vsub.s32 0, %v1460
          %v1462 = vrot.slane %v1418, %v1461
          %v1463 = vmul.f32 %v1422, %v1462
          %v1464 = vmul.f32 %v1427, %v1462
          %v1465 = vmul.f32 %v1432, %v1462
          %v1466 = vmul.f32 %v1437, %v1462
          %v1467 = vmul.f32 %v1442, %v1462
          %v1468 = vmul.f32 %v1447, %v1462
          %v1469 = vmul.f32 %v1452, %v1462
          %v1470 = vmul.f32 %v1457, %v1462
          %v1471 = vadd.f32 %v1399, %v1463
          %v1472 = vadd.f32 %v1400, %v1464
          %v1473 = vadd.f32 %v1401, %v1465
          %v1474 = vadd.f32 %v1402, %v1466
          %v1475 = vadd.f32 %v1403, %v1467
          %v1476 = vadd.f32 %v1404, %v1468
          %v1477 = vadd.f32 %v1405, %v1469
          %v1478 = vadd.f32 %v1406, %v1470
          %v1479 = vld [vmem:[%s1409 + $0x1] sm:$0xff]
          %v1480 = vld [vmem:[%s1409 + $0x9] sm:$0xff]
          %v1481 = vld [vmem:[%s1409 + $0x11] sm:$0xff]
          %v1482 = vld [vmem:[%s1409 + $0x19] sm:$0xff]
          %v1483 = vld [vmem:[%s1409 + $0x29] sm:$0xff]
          %v1484 = vld [vmem:[%s1409 + $0x31] sm:$0xff]
          %v1485 = vld [vmem:[%s1409 + $0x39] sm:$0xff]
          %v1486 = vld [vmem:[%s1409 + $0x41] sm:$0xff]
          %v1487 = vld [vmem:[%s1 + $0x10] sm:$0x1]
          %1489 = vset.pattern.permute.xlu0 0
          %1490 = vperm.xlu0 %1489, %v1479
          %v1491 = vpop.permute.xlu0 %1490
          %1494 = vset.pattern.permute.xlu0 0
          %1495 = vperm.xlu0 %1494, %v1480
          %v1496 = vpop.permute.xlu0 %1495
          %1499 = vset.pattern.permute.xlu0 0
          %1500 = vperm.xlu0 %1499, %v1481
          %v1501 = vpop.permute.xlu0 %1500
          %1504 = vset.pattern.permute.xlu0 0
          %1505 = vperm.xlu0 %1504, %v1482
          %v1506 = vpop.permute.xlu0 %1505
          %1509 = vset.pattern.permute.xlu0 0
          %1510 = vperm.xlu0 %1509, %v1483
          %v1511 = vpop.permute.xlu0 %1510
          %1514 = vset.pattern.permute.xlu0 0
          %1515 = vperm.xlu0 %1514, %v1484
          %v1516 = vpop.permute.xlu0 %1515
          %1519 = vset.pattern.permute.xlu0 0
          %1520 = vperm.xlu0 %1519, %v1485
          %v1521 = vpop.permute.xlu0 %1520
          %1524 = vset.pattern.permute.xlu0 0
          %1525 = vperm.xlu0 %1524, %v1486
          %v1526 = vpop.permute.xlu0 %1525
          %v1528 = vlaneseq
          %v1529 = vshrl.u32 %v1528, 7
          %v1530 = vsub.s32 0, %v1529
          %v1531 = vrot.slane %v1487, %v1530
          %v1532 = vmul.f32 %v1491, %v1531
          %v1533 = vmul.f32 %v1496, %v1531
          %v1534 = vmul.f32 %v1501, %v1531
          %v1535 = vmul.f32 %v1506, %v1531
          %v1536 = vmul.f32 %v1511, %v1531
          %v1537 = vmul.f32 %v1516, %v1531
          %v1538 = vmul.f32 %v1521, %v1531
          %v1539 = vmul.f32 %v1526, %v1531
          %v1540 = vadd.f32 %v1471, %v1532
          %v1541 = vadd.f32 %v1472, %v1533
          %v1542 = vadd.f32 %v1473, %v1534
          %v1543 = vadd.f32 %v1474, %v1535
          %v1544 = vadd.f32 %v1475, %v1536
          %v1545 = vadd.f32 %v1476, %v1537
          %v1546 = vadd.f32 %v1477, %v1538
          %v1547 = vadd.f32 %v1478, %v1539
          %v1548 = vld [vmem:[%s1409 + $0x2] sm:$0xff]
          %v1549 = vld [vmem:[%s1409 + $0xa] sm:$0xff]
          %v1550 = vld [vmem:[%s1409 + $0x12] sm:$0xff]
          %v1551 = vld [vmem:[%s1409 + $0x1a] sm:$0xff]
          %v1552 = vld [vmem:[%s1409 + $0x2a] sm:$0xff]
          %v1553 = vld [vmem:[%s1409 + $0x32] sm:$0xff]
          %v1554 = vld [vmem:[%s1409 + $0x3a] sm:$0xff]
          %v1555 = vld [vmem:[%s1409 + $0x42] sm:$0xff]
          %v1556 = vld [vmem:[%s1 + $0x11] sm:$0x1]
          %1558 = vset.pattern.permute.xlu0 0
          %1559 = vperm.xlu0 %1558, %v1548
          %v1560 = vpop.permute.xlu0 %1559
          %1563 = vset.pattern.permute.xlu0 0
          %1564 = vperm.xlu0 %1563, %v1549
          %v1565 = vpop.permute.xlu0 %1564
          %1568 = vset.pattern.permute.xlu0 0
          %1569 = vperm.xlu0 %1568, %v1550
          %v1570 = vpop.permute.xlu0 %1569
          %1573 = vset.pattern.permute.xlu0 0
          %1574 = vperm.xlu0 %1573, %v1551
          %v1575 = vpop.permute.xlu0 %1574
          %1578 = vset.pattern.permute.xlu0 0
          %1579 = vperm.xlu0 %1578, %v1552
          %v1580 = vpop.permute.xlu0 %1579
          %1583 = vset.pattern.permute.xlu0 0
          %1584 = vperm.xlu0 %1583, %v1553
          %v1585 = vpop.permute.xlu0 %1584
          %1588 = vset.pattern.permute.xlu0 0
          %1589 = vperm.xlu0 %1588, %v1554
          %v1590 = vpop.permute.xlu0 %1589
          %1593 = vset.pattern.permute.xlu0 0
          %1594 = vperm.xlu0 %1593, %v1555
          %v1595 = vpop.permute.xlu0 %1594
          %v1597 = vlaneseq
          %v1598 = vshrl.u32 %v1597, 7
          %v1599 = vsub.s32 0, %v1598
          %v1600 = vrot.slane %v1556, %v1599
          %v1601 = vmul.f32 %v1560, %v1600
          %v1602 = vmul.f32 %v1565, %v1600
          %v1603 = vmul.f32 %v1570, %v1600
          %v1604 = vmul.f32 %v1575, %v1600
          %v1605 = vmul.f32 %v1580, %v1600
          %v1606 = vmul.f32 %v1585, %v1600
          %v1607 = vmul.f32 %v1590, %v1600
          %v1608 = vmul.f32 %v1595, %v1600
          %v1609 = vadd.f32 %v1540, %v1601
          %v1610 = vadd.f32 %v1541, %v1602
          %v1611 = vadd.f32 %v1542, %v1603
          %v1612 = vadd.f32 %v1543, %v1604
          %v1613 = vadd.f32 %v1544, %v1605
          %v1614 = vadd.f32 %v1545, %v1606
          %v1615 = vadd.f32 %v1546, %v1607
          %v1616 = vadd.f32 %v1547, %v1608
          %v1617 = vld [vmem:[%s1409 + $0x3] sm:$0xff]
          %v1618 = vld [vmem:[%s1409 + $0xb] sm:$0xff]
          %v1619 = vld [vmem:[%s1409 + $0x13] sm:$0xff]
          %v1620 = vld [vmem:[%s1409 + $0x1b] sm:$0xff]
          %v1621 = vld [vmem:[%s1409 + $0x2b] sm:$0xff]
          %v1622 = vld [vmem:[%s1409 + $0x33] sm:$0xff]
          %v1623 = vld [vmem:[%s1409 + $0x3b] sm:$0xff]
          %v1624 = vld [vmem:[%s1409 + $0x43] sm:$0xff]
          %v1625 = vld [vmem:[%s1 + $0x12] sm:$0x1]
          %1627 = vset.pattern.permute.xlu0 0
          %1628 = vperm.xlu0 %1627, %v1617
          %v1629 = vpop.permute.xlu0 %1628
          %1632 = vset.pattern.permute.xlu0 0
          %1633 = vperm.xlu0 %1632, %v1618
          %v1634 = vpop.permute.xlu0 %1633
          %1637 = vset.pattern.permute.xlu0 0
          %1638 = vperm.xlu0 %1637, %v1619
          %v1639 = vpop.permute.xlu0 %1638
          %1642 = vset.pattern.permute.xlu0 0
          %1643 = vperm.xlu0 %1642, %v1620
          %v1644 = vpop.permute.xlu0 %1643
          %1647 = vset.pattern.permute.xlu0 0
          %1648 = vperm.xlu0 %1647, %v1621
          %v1649 = vpop.permute.xlu0 %1648
          %1652 = vset.pattern.permute.xlu0 0
          %1653 = vperm.xlu0 %1652, %v1622
          %v1654 = vpop.permute.xlu0 %1653
          %1657 = vset.pattern.permute.xlu0 0
          %1658 = vperm.xlu0 %1657, %v1623
          %v1659 = vpop.permute.xlu0 %1658
          %1662 = vset.pattern.permute.xlu0 0
          %1663 = vperm.xlu0 %1662, %v1624
          %v1664 = vpop.permute.xlu0 %1663
          %v1666 = vlaneseq
          %v1667 = vshrl.u32 %v1666, 7
          %v1668 = vsub.s32 0, %v1667
          %v1669 = vrot.slane %v1625, %v1668
          %v1670 = vmul.f32 %v1629, %v1669
          %v1671 = vmul.f32 %v1634, %v1669
          %v1672 = vmul.f32 %v1639, %v1669
          %v1673 = vmul.f32 %v1644, %v1669
          %v1674 = vmul.f32 %v1649, %v1669
          %v1675 = vmul.f32 %v1654, %v1669
          %v1676 = vmul.f32 %v1659, %v1669
          %v1677 = vmul.f32 %v1664, %v1669
          %v1678 = vadd.f32 %v1609, %v1670
          %v1679 = vadd.f32 %v1610, %v1671
          %v1680 = vadd.f32 %v1611, %v1672
          %v1681 = vadd.f32 %v1612, %v1673
          %v1682 = vadd.f32 %v1613, %v1674
          %v1683 = vadd.f32 %v1614, %v1675
          %v1684 = vadd.f32 %v1615, %v1676
          %v1685 = vadd.f32 %v1616, %v1677
          %v1686 = vld [vmem:[%s1409 + $0x4] sm:$0xff]
          %v1687 = vld [vmem:[%s1409 + $0xc] sm:$0xff]
          %v1688 = vld [vmem:[%s1409 + $0x14] sm:$0xff]
          %v1689 = vld [vmem:[%s1409 + $0x1c] sm:$0xff]
          %v1690 = vld [vmem:[%s1409 + $0x2c] sm:$0xff]
          %v1691 = vld [vmem:[%s1409 + $0x34] sm:$0xff]
          %v1692 = vld [vmem:[%s1409 + $0x3c] sm:$0xff]
          %v1693 = vld [vmem:[%s1409 + $0x44] sm:$0xff]
          %v1694 = vld [vmem:[%s1 + $0x13] sm:$0x1]
          %1696 = vset.pattern.permute.xlu0 0
          %1697 = vperm.xlu0 %1696, %v1686
          %v1698 = vpop.permute.xlu0 %1697
          %1701 = vset.pattern.permute.xlu0 0
          %1702 = vperm.xlu0 %1701, %v1687
          %v1703 = vpop.permute.xlu0 %1702
          %1706 = vset.pattern.permute.xlu0 0
          %1707 = vperm.xlu0 %1706, %v1688
          %v1708 = vpop.permute.xlu0 %1707
          %1711 = vset.pattern.permute.xlu0 0
          %1712 = vperm.xlu0 %1711, %v1689
          %v1713 = vpop.permute.xlu0 %1712
          %1716 = vset.pattern.permute.xlu0 0
          %1717 = vperm.xlu0 %1716, %v1690
          %v1718 = vpop.permute.xlu0 %1717
          %1721 = vset.pattern.permute.xlu0 0
          %1722 = vperm.xlu0 %1721, %v1691
          %v1723 = vpop.permute.xlu0 %1722
          %1726 = vset.pattern.permute.xlu0 0
          %1727 = vperm.xlu0 %1726, %v1692
          %v1728 = vpop.permute.xlu0 %1727
          %1731 = vset.pattern.permute.xlu0 0
          %1732 = vperm.xlu0 %1731, %v1693
          %v1733 = vpop.permute.xlu0 %1732
          %v1735 = vlaneseq
          %v1736 = vshrl.u32 %v1735, 7
          %v1737 = vsub.s32 0, %v1736
          %v1738 = vrot.slane %v1694, %v1737
          %v1739 = vmul.f32 %v1698, %v1738
          %v1740 = vmul.f32 %v1703, %v1738
          %v1741 = vmul.f32 %v1708, %v1738
          %v1742 = vmul.f32 %v1713, %v1738
          %v1743 = vmul.f32 %v1718, %v1738
          %v1744 = vmul.f32 %v1723, %v1738
          %v1745 = vmul.f32 %v1728, %v1738
          %v1746 = vmul.f32 %v1733, %v1738
          %v1747 = vadd.f32 %v1678, %v1739
          %v1748 = vadd.f32 %v1679, %v1740
          %v1749 = vadd.f32 %v1680, %v1741
          %v1750 = vadd.f32 %v1681, %v1742
          %v1751 = vadd.f32 %v1682, %v1743
          %v1752 = vadd.f32 %v1683, %v1744
          %v1753 = vadd.f32 %v1684, %v1745
          %v1754 = vadd.f32 %v1685, %v1746
          %s1755 = sadd.s32 %s363, 4
          %s1756 = smul.u32 %s1755, 40
          %s1757 = scalar_lea.vmem %s275, %s1756
          %v1758 = vld [vmem:[%s1757] sm:$0xff]
          %v1759 = vld [vmem:[%s1757 + $0x8] sm:$0xff]
          %v1760 = vld [vmem:[%s1757 + $0x10] sm:$0xff]
          %v1761 = vld [vmem:[%s1757 + $0x18] sm:$0xff]
          %v1762 = vld [vmem:[%s1757 + $0x28] sm:$0xff]
          %v1763 = vld [vmem:[%s1757 + $0x30] sm:$0xff]
          %v1764 = vld [vmem:[%s1757 + $0x38] sm:$0xff]
          %v1765 = vld [vmem:[%s1757 + $0x40] sm:$0xff]
          %v1766 = vld [vmem:[%s1 + $0x14] sm:$0x1]
          %1768 = vset.pattern.permute.xlu0 0
          %1769 = vperm.xlu0 %1768, %v1758
          %v1770 = vpop.permute.xlu0 %1769
          %1773 = vset.pattern.permute.xlu0 0
          %1774 = vperm.xlu0 %1773, %v1759
          %v1775 = vpop.permute.xlu0 %1774
          %1778 = vset.pattern.permute.xlu0 0
          %1779 = vperm.xlu0 %1778, %v1760
          %v1780 = vpop.permute.xlu0 %1779
          %1783 = vset.pattern.permute.xlu0 0
          %1784 = vperm.xlu0 %1783, %v1761
          %v1785 = vpop.permute.xlu0 %1784
          %1788 = vset.pattern.permute.xlu0 0
          %1789 = vperm.xlu0 %1788, %v1762
          %v1790 = vpop.permute.xlu0 %1789
          %1793 = vset.pattern.permute.xlu0 0
          %1794 = vperm.xlu0 %1793, %v1763
          %v1795 = vpop.permute.xlu0 %1794
          %1798 = vset.pattern.permute.xlu0 0
          %1799 = vperm.xlu0 %1798, %v1764
          %v1800 = vpop.permute.xlu0 %1799
          %1803 = vset.pattern.permute.xlu0 0
          %1804 = vperm.xlu0 %1803, %v1765
          %v1805 = vpop.permute.xlu0 %1804
          %v1807 = vlaneseq
          %v1808 = vshrl.u32 %v1807, 7
          %v1809 = vsub.s32 0, %v1808
          %v1810 = vrot.slane %v1766, %v1809
          %v1811 = vmul.f32 %v1770, %v1810
          %v1812 = vmul.f32 %v1775, %v1810
          %v1813 = vmul.f32 %v1780, %v1810
          %v1814 = vmul.f32 %v1785, %v1810
          %v1815 = vmul.f32 %v1790, %v1810
          %v1816 = vmul.f32 %v1795, %v1810
          %v1817 = vmul.f32 %v1800, %v1810
          %v1818 = vmul.f32 %v1805, %v1810
          %v1819 = vadd.f32 %v1747, %v1811
          %v1820 = vadd.f32 %v1748, %v1812
          %v1821 = vadd.f32 %v1749, %v1813
          %v1822 = vadd.f32 %v1750, %v1814
          %v1823 = vadd.f32 %v1751, %v1815
          %v1824 = vadd.f32 %v1752, %v1816
          %v1825 = vadd.f32 %v1753, %v1817
          %v1826 = vadd.f32 %v1754, %v1818
          %v1827 = vld [vmem:[%s1757 + $0x1] sm:$0xff]
          %v1828 = vld [vmem:[%s1757 + $0x9] sm:$0xff]
          %v1829 = vld [vmem:[%s1757 + $0x11] sm:$0xff]
          %v1830 = vld [vmem:[%s1757 + $0x19] sm:$0xff]
          %v1831 = vld [vmem:[%s1757 + $0x29] sm:$0xff]
          %v1832 = vld [vmem:[%s1757 + $0x31] sm:$0xff]
          %v1833 = vld [vmem:[%s1757 + $0x39] sm:$0xff]
          %v1834 = vld [vmem:[%s1757 + $0x41] sm:$0xff]
          %v1835 = vld [vmem:[%s1 + $0x15] sm:$0x1]
          %1837 = vset.pattern.permute.xlu0 0
          %1838 = vperm.xlu0 %1837, %v1827
          %v1839 = vpop.permute.xlu0 %1838
          %1842 = vset.pattern.permute.xlu0 0
          %1843 = vperm.xlu0 %1842, %v1828
          %v1844 = vpop.permute.xlu0 %1843
          %1847 = vset.pattern.permute.xlu0 0
          %1848 = vperm.xlu0 %1847, %v1829
          %v1849 = vpop.permute.xlu0 %1848
          %1852 = vset.pattern.permute.xlu0 0
          %1853 = vperm.xlu0 %1852, %v1830
          %v1854 = vpop.permute.xlu0 %1853
          %1857 = vset.pattern.permute.xlu0 0
          %1858 = vperm.xlu0 %1857, %v1831
          %v1859 = vpop.permute.xlu0 %1858
          %1862 = vset.pattern.permute.xlu0 0
          %1863 = vperm.xlu0 %1862, %v1832
          %v1864 = vpop.permute.xlu0 %1863
          %1867 = vset.pattern.permute.xlu0 0
          %1868 = vperm.xlu0 %1867, %v1833
          %v1869 = vpop.permute.xlu0 %1868
          %1872 = vset.pattern.permute.xlu0 0
          %1873 = vperm.xlu0 %1872, %v1834
          %v1874 = vpop.permute.xlu0 %1873
          %v1876 = vlaneseq
          %v1877 = vshrl.u32 %v1876, 7
          %v1878 = vsub.s32 0, %v1877
          %v1879 = vrot.slane %v1835, %v1878
          %v1880 = vmul.f32 %v1839, %v1879
          %v1881 = vmul.f32 %v1844, %v1879
          %v1882 = vmul.f32 %v1849, %v1879
          %v1883 = vmul.f32 %v1854, %v1879
          %v1884 = vmul.f32 %v1859, %v1879
          %v1885 = vmul.f32 %v1864, %v1879
          %v1886 = vmul.f32 %v1869, %v1879
          %v1887 = vmul.f32 %v1874, %v1879
          %v1888 = vadd.f32 %v1819, %v1880
          %v1889 = vadd.f32 %v1820, %v1881
          %v1890 = vadd.f32 %v1821, %v1882
          %v1891 = vadd.f32 %v1822, %v1883
          %v1892 = vadd.f32 %v1823, %v1884
          %v1893 = vadd.f32 %v1824, %v1885
          %v1894 = vadd.f32 %v1825, %v1886
          %v1895 = vadd.f32 %v1826, %v1887
          %v1896 = vld [vmem:[%s1757 + $0x2] sm:$0xff]
          %v1897 = vld [vmem:[%s1757 + $0xa] sm:$0xff]
          %v1898 = vld [vmem:[%s1757 + $0x12] sm:$0xff]
          %v1899 = vld [vmem:[%s1757 + $0x1a] sm:$0xff]
          %v1900 = vld [vmem:[%s1757 + $0x2a] sm:$0xff]
          %v1901 = vld [vmem:[%s1757 + $0x32] sm:$0xff]
          %v1902 = vld [vmem:[%s1757 + $0x3a] sm:$0xff]
          %v1903 = vld [vmem:[%s1757 + $0x42] sm:$0xff]
          %v1904 = vld [vmem:[%s1 + $0x16] sm:$0x1]
          %1906 = vset.pattern.permute.xlu0 0
          %1907 = vperm.xlu0 %1906, %v1896
          %v1908 = vpop.permute.xlu0 %1907
          %1911 = vset.pattern.permute.xlu0 0
          %1912 = vperm.xlu0 %1911, %v1897
          %v1913 = vpop.permute.xlu0 %1912
          %1916 = vset.pattern.permute.xlu0 0
          %1917 = vperm.xlu0 %1916, %v1898
          %v1918 = vpop.permute.xlu0 %1917
          %1921 = vset.pattern.permute.xlu0 0
          %1922 = vperm.xlu0 %1921, %v1899
          %v1923 = vpop.permute.xlu0 %1922
          %1926 = vset.pattern.permute.xlu0 0
          %1927 = vperm.xlu0 %1926, %v1900
          %v1928 = vpop.permute.xlu0 %1927
          %1931 = vset.pattern.permute.xlu0 0
          %1932 = vperm.xlu0 %1931, %v1901
          %v1933 = vpop.permute.xlu0 %1932
          %1936 = vset.pattern.permute.xlu0 0
          %1937 = vperm.xlu0 %1936, %v1902
          %v1938 = vpop.permute.xlu0 %1937
          %1941 = vset.pattern.permute.xlu0 0
          %1942 = vperm.xlu0 %1941, %v1903
          %v1943 = vpop.permute.xlu0 %1942
          %v1945 = vlaneseq
          %v1946 = vshrl.u32 %v1945, 7
          %v1947 = vsub.s32 0, %v1946
          %v1948 = vrot.slane %v1904, %v1947
          %v1949 = vmul.f32 %v1908, %v1948
          %v1950 = vmul.f32 %v1913, %v1948
          %v1951 = vmul.f32 %v1918, %v1948
          %v1952 = vmul.f32 %v1923, %v1948
          %v1953 = vmul.f32 %v1928, %v1948
          %v1954 = vmul.f32 %v1933, %v1948
          %v1955 = vmul.f32 %v1938, %v1948
          %v1956 = vmul.f32 %v1943, %v1948
          %v1957 = vadd.f32 %v1888, %v1949
          %v1958 = vadd.f32 %v1889, %v1950
          %v1959 = vadd.f32 %v1890, %v1951
          %v1960 = vadd.f32 %v1891, %v1952
          %v1961 = vadd.f32 %v1892, %v1953
          %v1962 = vadd.f32 %v1893, %v1954
          %v1963 = vadd.f32 %v1894, %v1955
          %v1964 = vadd.f32 %v1895, %v1956
          %v1965 = vld [vmem:[%s1757 + $0x3] sm:$0xff]
          %v1966 = vld [vmem:[%s1757 + $0xb] sm:$0xff]
          %v1967 = vld [vmem:[%s1757 + $0x13] sm:$0xff]
          %v1968 = vld [vmem:[%s1757 + $0x1b] sm:$0xff]
          %v1969 = vld [vmem:[%s1757 + $0x2b] sm:$0xff]
          %v1970 = vld [vmem:[%s1757 + $0x33] sm:$0xff]
          %v1971 = vld [vmem:[%s1757 + $0x3b] sm:$0xff]
          %v1972 = vld [vmem:[%s1757 + $0x43] sm:$0xff]
          %v1973 = vld [vmem:[%s1 + $0x17] sm:$0x1]
          %1975 = vset.pattern.permute.xlu0 0
          %1976 = vperm.xlu0 %1975, %v1965
          %v1977 = vpop.permute.xlu0 %1976
          %1980 = vset.pattern.permute.xlu0 0
          %1981 = vperm.xlu0 %1980, %v1966
          %v1982 = vpop.permute.xlu0 %1981
          %1985 = vset.pattern.permute.xlu0 0
          %1986 = vperm.xlu0 %1985, %v1967
          %v1987 = vpop.permute.xlu0 %1986
          %1990 = vset.pattern.permute.xlu0 0
          %1991 = vperm.xlu0 %1990, %v1968
          %v1992 = vpop.permute.xlu0 %1991
          %1995 = vset.pattern.permute.xlu0 0
          %1996 = vperm.xlu0 %1995, %v1969
          %v1997 = vpop.permute.xlu0 %1996
          %2000 = vset.pattern.permute.xlu0 0
          %2001 = vperm.xlu0 %2000, %v1970
          %v2002 = vpop.permute.xlu0 %2001
          %2005 = vset.pattern.permute.xlu0 0
          %2006 = vperm.xlu0 %2005, %v1971
          %v2007 = vpop.permute.xlu0 %2006
          %2010 = vset.pattern.permute.xlu0 0
          %2011 = vperm.xlu0 %2010, %v1972
          %v2012 = vpop.permute.xlu0 %2011
          %v2014 = vlaneseq
          %v2015 = vshrl.u32 %v2014, 7
          %v2016 = vsub.s32 0, %v2015
          %v2017 = vrot.slane %v1973, %v2016
          %v2018 = vmul.f32 %v1977, %v2017
          %v2019 = vmul.f32 %v1982, %v2017
          %v2020 = vmul.f32 %v1987, %v2017
          %v2021 = vmul.f32 %v1992, %v2017
          %v2022 = vmul.f32 %v1997, %v2017
          %v2023 = vmul.f32 %v2002, %v2017
          %v2024 = vmul.f32 %v2007, %v2017
          %v2025 = vmul.f32 %v2012, %v2017
          %v2026 = vadd.f32 %v1957, %v2018
          %v2027 = vadd.f32 %v1958, %v2019
          %v2028 = vadd.f32 %v1959, %v2020
          %v2029 = vadd.f32 %v1960, %v2021
          %v2030 = vadd.f32 %v1961, %v2022
          %v2031 = vadd.f32 %v1962, %v2023
          %v2032 = vadd.f32 %v1963, %v2024
          %v2033 = vadd.f32 %v1964, %v2025
          %v2034 = vld [vmem:[%s1757 + $0x4] sm:$0xff]
          %v2035 = vld [vmem:[%s1757 + $0xc] sm:$0xff]
          %v2036 = vld [vmem:[%s1757 + $0x14] sm:$0xff]
          %v2037 = vld [vmem:[%s1757 + $0x1c] sm:$0xff]
          %v2038 = vld [vmem:[%s1757 + $0x2c] sm:$0xff]
          %v2039 = vld [vmem:[%s1757 + $0x34] sm:$0xff]
          %v2040 = vld [vmem:[%s1757 + $0x3c] sm:$0xff]
          %v2041 = vld [vmem:[%s1757 + $0x44] sm:$0xff]
          %v2042 = vld [vmem:[%s1 + $0x18] sm:$0x1]
          %2044 = vset.pattern.permute.xlu0 0
          %2045 = vperm.xlu0 %2044, %v2034
          %v2046 = vpop.permute.xlu0 %2045
          %2049 = vset.pattern.permute.xlu0 0
          %2050 = vperm.xlu0 %2049, %v2035
          %v2051 = vpop.permute.xlu0 %2050
          %2054 = vset.pattern.permute.xlu0 0
          %2055 = vperm.xlu0 %2054, %v2036
          %v2056 = vpop.permute.xlu0 %2055
          %2059 = vset.pattern.permute.xlu0 0
          %2060 = vperm.xlu0 %2059, %v2037
          %v2061 = vpop.permute.xlu0 %2060
          %2064 = vset.pattern.permute.xlu0 0
          %2065 = vperm.xlu0 %2064, %v2038
          %v2066 = vpop.permute.xlu0 %2065
          %2069 = vset.pattern.permute.xlu0 0
          %2070 = vperm.xlu0 %2069, %v2039
          %v2071 = vpop.permute.xlu0 %2070
          %2074 = vset.pattern.permute.xlu0 0
          %2075 = vperm.xlu0 %2074, %v2040
          %v2076 = vpop.permute.xlu0 %2075
          %2079 = vset.pattern.permute.xlu0 0
          %2080 = vperm.xlu0 %2079, %v2041
          %v2081 = vpop.permute.xlu0 %2080
          %v2083 = vlaneseq
          %v2084 = vshrl.u32 %v2083, 7
          %v2085 = vsub.s32 0, %v2084
          %v2086 = vrot.slane %v2042, %v2085
          %v2087 = vmul.f32 %v2046, %v2086
          %v2088 = vmul.f32 %v2051, %v2086
          %v2089 = vmul.f32 %v2056, %v2086
          %v2090 = vmul.f32 %v2061, %v2086
          %v2091 = vmul.f32 %v2066, %v2086
          %v2092 = vmul.f32 %v2071, %v2086
          %v2093 = vmul.f32 %v2076, %v2086
          %v2094 = vmul.f32 %v2081, %v2086
          %v2095 = vadd.f32 %v2026, %v2087
          %v2096 = vadd.f32 %v2027, %v2088
          %v2097 = vadd.f32 %v2028, %v2089
          %v2098 = vadd.f32 %v2029, %v2090
          %v2099 = vadd.f32 %v2030, %v2091
          %v2100 = vadd.f32 %v2031, %v2092
          %v2101 = vadd.f32 %v2032, %v2093
          %v2102 = vadd.f32 %v2033, %v2094
          %v2103 = vld [vmem:[%s2] sm:$0x1]
          %v2105 = vlaneseq
          %v2106 = vshrl.u32 %v2105, 7
          %v2107 = vsub.s32 0, %v2106
          %v2108 = vrot.slane %v2103, %v2107
          %v2110 = vadd.f32 %v2095, %v2108
          %v2111 = vadd.f32 %v2096, %v2108
          %v2112 = vadd.f32 %v2097, %v2108
          %v2113 = vadd.f32 %v2098, %v2108
          %v2114 = vadd.f32 %v2099, %v2108
          %v2115 = vadd.f32 %v2100, %v2108
          %v2116 = vadd.f32 %v2101, %v2108
          %v2117 = vadd.f32 %v2102, %v2108
          %v2118 = vmax.f32 %v2110, 0.0
          %v2119 = vmax.f32 %v2111, 0.0
          %v2120 = vmax.f32 %v2112, 0.0
          %v2121 = vmax.f32 %v2113, 0.0
          %v2122 = vmax.f32 %v2114, 0.0
          %v2123 = vmax.f32 %v2115, 0.0
          %v2124 = vmax.f32 %v2116, 0.0
          %v2125 = vmax.f32 %v2117, 0.0
          %v2126 = vmax.f32 %v2118, %v2122
          %v2127 = vmax.f32 %v2119, %v2123
          %v2128 = vmax.f32 %v2120, %v2124
          %v2129 = vmax.f32 %v2121, %v2125
          %2130 = vst.msk [vmem:[#allocation3] sm:$0xff] %vm276, %v2126
          %2131 = vst.msk [vmem:[#allocation3 + $0x8] sm:$0xff] %vm276, %v2127
          %2132 = vst.msk [vmem:[#allocation3 + $0x10] sm:$0xff] %vm276, %v2128
          %2133 = vst.msk [vmem:[#allocation3 + $0x18] sm:$0xff] %vm276, %v2129
          %v2134 = vld [vmem:[#allocation3] ss:$2 sm:$0xff]
          %s2135 = scalar_lea.vmem [#allocation3], 16
          %v2136 = vld [vmem:[%s2135] ss:$2 sm:$0xff]
          %s2137 = scalar_lea.vmem [#allocation3], 1
          %v2138 = vld [vmem:[%s2137] ss:$2 sm:$0xff]
          %s2139 = scalar_lea.vmem [#allocation3], 17
          %v2140 = vld [vmem:[%s2139] ss:$2 sm:$0xff]
          %v2141 = vmax.f32 %v2134, %v2138
          %v2142 = vmax.f32 %v2136, %v2140
          %s2143 = sadd.s32 %s358, 2
          %s2144 = smul.u32 %s2143, 32
          %s2145 = scalar_lea.vmem [#allocation2], %s2144
          %2146 = vst.msk [vmem:[%s2145 + $0x8] sm:$0xff] %vm276, %v2141
          %2147 = vst.msk [vmem:[%s2145 + $0x10] sm:$0xff] %vm276, %v2142
        $region53: #{cnn_forward.1} parent=47 // loop_footer
          %s362 = sadd.s32 1, %s358
        $region54: #{cnn_forward.1} parent=47 // loop_footer_branch
          %357 = sbr.rel target = $region50
        $region55: #{cnn_forward.1} parent=47 // loop_exit
          _
        %v2148 = vld [vmem:[%s6] sm:$0x1]
        loop: start=0, step=1, limit=8
        $region56: #{cnn_forward.1} parent=47 // loop_pre_header
          _
        $region57: #{cnn_forward.1} parent=47 // loop_header
          %s2150 = sphi 0, %s2154
          %p2151 = scmp.ge.s32.totalorder %s2150, 8
          %v2155 = vphi %v2148, %v3767
        $region58: #{cnn_forward.1} parent=47 // loop_header_branch
          %2153 = sbr.rel (%p2151) target = $region62
        $region59: #{cnn_forward.1} parent=47 // loop_body
          %s2156 = smul.u32 %s2150, 2
          %s2157 = smul.u32 %s2156, 32
          %s2158 = scalar_lea.vmem [#allocation2], %s2157
          %v2159 = vld [vmem:[%s2158 + $0x6] sm:$0xff]
          %v2160 = vld [vmem:[%s2158 + $0xe] sm:$0xff]
          %v2161 = vld [vmem:[%s2158 + $0x26] sm:$0xff]
          %v2162 = vld [vmem:[%s2158 + $0x2e] sm:$0xff]
          %v2163 = vld [vmem:[%s2158 + $0x7] sm:$0xff]
          %v2164 = vld [vmem:[%s2158 + $0xf] sm:$0xff]
          %v2165 = vld [vmem:[%s2158 + $0x27] sm:$0xff]
          %v2166 = vld [vmem:[%s2158 + $0x2f] sm:$0xff]
          %v2167 = vld [vmem:[%s2158 + $0x8] sm:$0xff]
          %v2168 = vld [vmem:[%s2158 + $0x10] sm:$0xff]
          %v2169 = vld [vmem:[%s2158 + $0x28] sm:$0xff]
          %v2170 = vld [vmem:[%s2158 + $0x30] sm:$0xff]
          %v2171 = vld [vmem:[%s2158 + $0x9] sm:$0xff]
          %v2172 = vld [vmem:[%s2158 + $0x11] sm:$0xff]
          %v2173 = vld [vmem:[%s2158 + $0x29] sm:$0xff]
          %v2174 = vld [vmem:[%s2158 + $0x31] sm:$0xff]
          %v2175 = vld [vmem:[%s2158 + $0xa] sm:$0xff]
          %v2176 = vld [vmem:[%s2158 + $0x12] sm:$0xff]
          %v2177 = vld [vmem:[%s2158 + $0x2a] sm:$0xff]
          %v2178 = vld [vmem:[%s2158 + $0x32] sm:$0xff]
          %2183 = vrot.lane.b32.xlu0 %v2163, 64
          %v2184 = vpop.permute.xlu0 %2183
          %2185 = vrot.lane.b32.xlu0 %v2164, 64
          %v2186 = vpop.permute.xlu0 %2185
          %2187 = vrot.lane.b32.xlu0 %v2165, 64
          %v2188 = vpop.permute.xlu0 %2187
          %2189 = vrot.lane.b32.xlu0 %v2166, 64
          %v2190 = vpop.permute.xlu0 %2189
          %2199 = vrot.lane.b32.xlu0 %v2171, 64
          %v2200 = vpop.permute.xlu0 %2199
          %2201 = vrot.lane.b32.xlu0 %v2172, 64
          %v2202 = vpop.permute.xlu0 %2201
          %2203 = vrot.lane.b32.xlu0 %v2173, 64
          %v2204 = vpop.permute.xlu0 %2203
          %2205 = vrot.lane.b32.xlu0 %v2174, 64
          %v2206 = vpop.permute.xlu0 %2205
          %v2211 = vsel %vm276, %v2159, %v2184
          %v2212 = vsel %vm276, %v2160, %v2186
          %v2213 = vsel %vm276, %v2161, %v2188
          %v2214 = vsel %vm276, %v2162, %v2190
          %v2215 = vsel %vm276, %v2167, %v2200
          %v2216 = vsel %vm276, %v2168, %v2202
          %v2217 = vsel %vm276, %v2169, %v2204
          %v2218 = vsel %vm276, %v2170, %v2206
          %v2219 = vld [vmem:[%s3] sm:$0xff]
          %v2220 = vld [vmem:[%s3 + $0x8] sm:$0xff]
          %v2221 = vld [vmem:[%s3 + $0x10] sm:$0xff]
          %v2222 = vld [vmem:[%s3 + $0x18] sm:$0xff]
          %v2223 = vld [vmem:[%s3 + $0x20] sm:$0xff]
          %v2224 = vld [vmem:[%s3 + $0x28] sm:$0xff]
          %v2225 = vld [vmem:[%s3 + $0x30] sm:$0xff]
          %v2226 = vld [vmem:[%s3 + $0x38] sm:$0xff]
          %v2227 = vld [vmem:[%s3 + $0x40] sm:$0xff]
          %v2228 = vld [vmem:[%s3 + $0x48] sm:$0xff]
          %v2229 = vld [vmem:[%s3 + $0x50] sm:$0xff]
          %v2230 = vld [vmem:[%s3 + $0x58] sm:$0xff]
          %v2231 = vld [vmem:[%s3 + $0x60] sm:$0xff]
          %v2232 = vld [vmem:[%s3 + $0x68] sm:$0xff]
          %v2233 = vld [vmem:[%s3 + $0x70] sm:$0xff]
          %v2234 = vld [vmem:[%s3 + $0x78] sm:$0xff]
          %v2235 = vld [vmem:[%s3 + $0x80] sm:$0xff]
          %v2236 = vld [vmem:[%s3 + $0x88] sm:$0xff]
          %v2237 = vld [vmem:[%s3 + $0x90] sm:$0xff]
          %v2238 = vld [vmem:[%s3 + $0x98] sm:$0xff]
          %v2239 = vld [vmem:[%s3 + $0xa0] sm:$0xff]
          %v2240 = vld [vmem:[%s3 + $0xa8] sm:$0xff]
          %v2241 = vld [vmem:[%s3 + $0xb0] sm:$0xff]
          %v2242 = vld [vmem:[%s3 + $0xb8] sm:$0xff]
          %v2243 = vld [vmem:[%s3 + $0xc0] sm:$0xff]
          %v2244 = vld [vmem:[%s3 + $0xc8] sm:$0xff]
          %v2245 = vld [vmem:[%s3 + $0xd0] sm:$0xff]
          %v2246 = vld [vmem:[%s3 + $0xd8] sm:$0xff]
          %v2247 = vld [vmem:[%s3 + $0xe0] sm:$0xff]
          %v2248 = vld [vmem:[%s3 + $0xe8] sm:$0xff]
          %v2249 = vld [vmem:[%s3 + $0xf0] sm:$0xff]
          %v2250 = vld [vmem:[%s3 + $0xf8] sm:$0xff]
          %v2251 = vld [vmem:[%s3 + $0x100] sm:$0xff]
          %v2252 = vld [vmem:[%s3 + $0x108] sm:$0xff]
          %v2253 = vld [vmem:[%s3 + $0x110] sm:$0xff]
          %v2254 = vld [vmem:[%s3 + $0x118] sm:$0xff]
          %v2255 = vld [vmem:[%s3 + $0x120] sm:$0xff]
          %v2256 = vld [vmem:[%s3 + $0x128] sm:$0xff]
          %v2257 = vld [vmem:[%s3 + $0x130] sm:$0xff]
          %v2258 = vld [vmem:[%s3 + $0x138] sm:$0xff]
          %v2260 = vsel %vm276, %v2175, 0
          %v2263 = vsel %vm276, %v2176, 0
          %v2266 = vsel %vm276, %v2177, 0
          %v2269 = vsel %vm276, %v2178, 0
          %2271 = vmatprep.subr.mxu0 0.0
          %2272 = vmatpush1.msra.mxu0 %v2219
          %2273 = vmatprep.subr.mxu0 0.0
          %2274 = vmatpush1.msra.mxu0 %v2220
          %2275 = vmatprep.subr.mxu0 0.0
          %2276 = vmatpush1.msra.mxu0 %v2221
          %2277 = vmatprep.subr.mxu0 0.0
          %2278 = vmatpush1.msra.mxu0 %v2222
          %2279 = vmatprep.subr.mxu0 0.0
          %2280 = vmatpush1.msra.mxu0 %v2223
          %2281 = vmatprep.subr.mxu0 0.0
          %2282 = vmatpush1.msra.mxu0 %v2224
          %2283 = vmatprep.subr.mxu0 0.0
          %2284 = vmatpush1.msra.mxu0 %v2225
          %2285 = vmatprep.subr.mxu0 0.0
          %2286 = vmatpush1.msra.mxu0 %v2226
          %2287 = vmatprep.subr.mxu0 0.0
          %2288 = vmatpush1.msra.mxu0 %v2227
          %2289 = vmatprep.subr.mxu0 0.0
          %2290 = vmatpush1.msra.mxu0 %v2228
          %2291 = vmatprep.subr.mxu0 0.0
          %2292 = vmatpush1.msra.mxu0 %v2229
          %2293 = vmatprep.subr.mxu0 0.0
          %2294 = vmatpush1.msra.mxu0 %v2230
          %2295 = vmatprep.subr.mxu0 0.0
          %2296 = vmatpush1.msra.mxu0 %v2231
          %2297 = vmatprep.subr.mxu0 0.0
          %2298 = vmatpush1.msra.mxu0 %v2232
          %2299 = vmatprep.subr.mxu0 0.0
          %2300 = vmatpush1.msra.mxu0 %v2233
          %2301 = vmatprep.subr.mxu0 0.0
          %2302 = vmatpush1.msra.mxu0 %v2234
          %2303 = vmatprep.subr.mxu0 0.0
          %2304 = vmatpush1.msra.mxu0 %v2235
          %2305 = vmatprep.subr.mxu0 0.0
          %2306 = vmatpush1.msra.mxu0 %v2236
          %2307 = vmatprep.subr.mxu0 0.0
          %2308 = vmatpush1.msra.mxu0 %v2237
          %2309 = vmatprep.subr.mxu0 0.0
          %2310 = vmatpush1.msra.mxu0 %v2238
          %2311 = vmatprep.subr.mxu0 0.0
          %2312 = vmatpush1.msra.mxu0 %v2239
          %2313 = vmatprep.subr.mxu0 0.0
          %2314 = vmatpush1.msra.mxu0 %v2240
          %2315 = vmatprep.subr.mxu0 0.0
          %2316 = vmatpush1.msra.mxu0 %v2241
          %2317 = vmatprep.subr.mxu0 0.0
          %2318 = vmatpush1.msra.mxu0 %v2242
          %2319 = vmatprep.subr.mxu0 0.0
          %2320 = vmatpush1.msra.mxu0 %v2243
          %2321 = vmatprep.subr.mxu0 0.0
          %2322 = vmatpush1.msra.mxu0 %v2244
          %2323 = vmatprep.subr.mxu0 0.0
          %2324 = vmatpush1.msra.mxu0 %v2245
          %2325 = vmatprep.subr.mxu0 0.0
          %2326 = vmatpush1.msra.mxu0 %v2246
          %2327 = vmatprep.subr.mxu0 0.0
          %2328 = vmatpush1.msra.mxu0 %v2247
          %2329 = vmatprep.subr.mxu0 0.0
          %2330 = vmatpush1.msra.mxu0 %v2248
          %2331 = vmatprep.subr.mxu0 0.0
          %2332 = vmatpush1.msra.mxu0 %v2249
          %2333 = vmatprep.subr.mxu0 0.0
          %2334 = vmatpush1.msra.mxu0 %v2250
          %2335 = vmatprep.mubr.f32.mxu0 %v2215
          %2336 = vmatmul.mubr.f32.gmra.mrb[0].mxu0 %v2211
          %v2337 = vpop.f32.mrb[0].mxu0
          %v2338 = vadd.f32 0.0, %v2337
          %v2339 = vpop.f32.mrb[0].mxu0
          %2340 = vmatprep.mubr.f32.mxu0 %v2216
          %2341 = vmatmul.mubr.f32.gmra.mrb[0].mxu0 %v2212
          %v2342 = vpop.f32.mrb[0].mxu0
          %v2343 = vadd.f32 0.0, %v2342
          %v2344 = vpop.f32.mrb[0].mxu0
          %2345 = vmatprep.mubr.f32.mxu0 %v2217
          %2346 = vmatmul.mubr.f32.gmra.mrb[0].mxu0 %v2213
          %v2347 = vpop.f32.mrb[0].mxu0
          %v2348 = vadd.f32 0.0, %v2347
          %v2349 = vpop.f32.mrb[0].mxu0
          %2350 = vmatprep.mubr.f32.mxu0 %v2218
          %2351 = vmatmul.mubr.f32.gmra.mrb[0].mxu0 %v2214
          %v2352 = vpop.f32.mrb[0].mxu0
          %v2353 = vadd.f32 0.0, %v2352
          %v2354 = vpop.f32.mrb[0].mxu0
          %2355 = vdwg.mxu0
          %2356 = vmatprep.subr.mxu0 0.0
          %2357 = vmatpush1.msra.mxu0 %v2251
          %2358 = vmatprep.subr.mxu0 0.0
          %2359 = vmatpush1.msra.mxu0 %v2252
          %2360 = vmatprep.subr.mxu0 0.0
          %2361 = vmatpush1.msra.mxu0 %v2253
          %2362 = vmatprep.subr.mxu0 0.0
          %2363 = vmatpush1.msra.mxu0 %v2254
          %2364 = vmatprep.subr.mxu0 0.0
          %2365 = vmatpush1.msra.mxu0 %v2255
          %2366 = vmatprep.subr.mxu0 0.0
          %2367 = vmatpush1.msra.mxu0 %v2256
          %2368 = vmatprep.subr.mxu0 0.0
          %2369 = vmatpush1.msra.mxu0 %v2257
          %2370 = vmatprep.subr.mxu0 0.0
          %2371 = vmatpush1.msra.mxu0 %v2258
          %2372 = vmatprep.subr.mxu0 0.0
          %2373 = vmatpush1.msra.mxu0 0.0
          %2374 = vmatprep.subr.mxu0 0.0
          %2375 = vmatpush1.msra.mxu0 0.0
          %2376 = vmatprep.subr.mxu0 0.0
          %2377 = vmatpush1.msra.mxu0 0.0
          %2378 = vmatprep.subr.mxu0 0.0
          %2379 = vmatpush1.msra.mxu0 0.0
          %2380 = vmatprep.subr.mxu0 0.0
          %2381 = vmatpush1.msra.mxu0 0.0
          %2382 = vmatprep.subr.mxu0 0.0
          %2383 = vmatpush1.msra.mxu0 0.0
          %2384 = vmatprep.subr.mxu0 0.0
          %2385 = vmatpush1.msra.mxu0 0.0
          %2386 = vmatprep.subr.mxu0 0.0
          %2387 = vmatpush1.msra.mxu0 0.0
          %2388 = vmatprep.subr.mxu0 0.0
          %2389 = vmatpush1.msra.mxu0 0.0
          %2390 = vmatprep.subr.mxu0 0.0
          %2391 = vmatpush1.msra.mxu0 0.0
          %2392 = vmatprep.subr.mxu0 0.0
          %2393 = vmatpush1.msra.mxu0 0.0
          %2394 = vmatprep.subr.mxu0 0.0
          %2395 = vmatpush1.msra.mxu0 0.0
          %2396 = vmatprep.subr.mxu0 0.0
          %2397 = vmatpush1.msra.mxu0 0.0
          %2398 = vmatprep.subr.mxu0 0.0
          %2399 = vmatpush1.msra.mxu0 0.0
          %2400 = vmatprep.subr.mxu0 0.0
          %2401 = vmatpush1.msra.mxu0 0.0
          %2402 = vmatprep.subr.mxu0 0.0
          %2403 = vmatpush1.msra.mxu0 0.0
          %2404 = vmatprep.subr.mxu0 0.0
          %2405 = vmatpush1.msra.mxu0 0.0
          %2406 = vmatprep.subr.mxu0 0.0
          %2407 = vmatpush1.msra.mxu0 0.0
          %2408 = vmatprep.subr.mxu0 0.0
          %2409 = vmatpush1.msra.mxu0 0.0
          %2410 = vmatprep.subr.mxu0 0.0
          %2411 = vmatpush1.msra.mxu0 0.0
          %2412 = vmatprep.subr.mxu0 0.0
          %2413 = vmatpush1.msra.mxu0 0.0
          %2414 = vmatprep.subr.mxu0 0.0
          %2415 = vmatpush1.msra.mxu0 0.0
          %2416 = vmatprep.subr.mxu0 0.0
          %2417 = vmatpush1.msra.mxu0 0.0
          %2418 = vmatprep.subr.mxu0 0.0
          %2419 = vmatpush1.msra.mxu0 0.0
          %2420 = vmatprep.mubr.f32.mxu0 0.0
          %2421 = vmatmul.mubr.f32.gmra.mrb[0].mxu0 %v2260
          %v2422 = vpop.f32.mrb[0].mxu0
          %v2423 = vadd.f32 %v2338, %v2422
          %v2424 = vpop.f32.mrb[0].mxu0
          %2425 = vmatprep.mubr.f32.mxu0 0.0
          %2426 = vmatmul.mubr.f32.gmra.mrb[0].mxu0 %v2263
          %v2427 = vpop.f32.mrb[0].mxu0
          %v2428 = vadd.f32 %v2343, %v2427
          %v2429 = vpop.f32.mrb[0].mxu0
          %2430 = vmatprep.mubr.f32.mxu0 0.0
          %2431 = vmatmul.mubr.f32.gmra.mrb[0].mxu0 %v2266
          %v2432 = vpop.f32.mrb[0].mxu0
          %v2433 = vadd.f32 %v2348, %v2432
          %v2434 = vpop.f32.mrb[0].mxu0
          %2435 = vmatprep.mubr.f32.mxu0 0.0
          %2436 = vmatmul.mubr.f32.gmra.mrb[0].mxu0 %v2269
          %v2437 = vpop.f32.mrb[0].mxu0
          %v2438 = vadd.f32 %v2353, %v2437
          %v2439 = vpop.f32.mrb[0].mxu0
          %2440 = vdwg.mxu0
          %v2441 = vadd.f32 %v2423, 0.0
          %v2442 = vadd.f32 %v2428, 0.0
          %v2443 = vadd.f32 %v2433, 0.0
          %v2444 = vadd.f32 %v2438, 0.0
          %s2445 = sadd.s32 %s2156, 1
          %s2446 = smul.u32 %s2445, 32
          %s2447 = scalar_lea.vmem [#allocation2], %s2446
          %v2448 = vld [vmem:[%s2447 + $0x6] sm:$0xff]
          %v2449 = vld [vmem:[%s2447 + $0xe] sm:$0xff]
          %v2450 = vld [vmem:[%s2447 + $0x26] sm:$0xff]
          %v2451 = vld [vmem:[%s2447 + $0x2e] sm:$0xff]
          %v2452 = vld [vmem:[%s2447 + $0x7] sm:$0xff]
          %v2453 = vld [vmem:[%s2447 + $0xf] sm:$0xff]
          %v2454 = vld [vmem:[%s2447 + $0x27] sm:$0xff]
          %v2455 = vld [vmem:[%s2447 + $0x2f] sm:$0xff]
          %v2456 = vld [vmem:[%s2447 + $0x8] sm:$0xff]
          %v2457 = vld [vmem:[%s2447 + $0x10] sm:$0xff]
          %v2458 = vld [vmem:[%s2447 + $0x28] sm:$0xff]
          %v2459 = vld [vmem:[%s2447 + $0x30] sm:$0xff]
          %v2460 = vld [vmem:[%s2447 + $0x9] sm:$0xff]
          %v2461 = vld [vmem:[%s2447 + $0x11] sm:$0xff]
          %v2462 = vld [vmem:[%s2447 + $0x29] sm:$0xff]
          %v2463 = vld [vmem:[%s2447 + $0x31] sm:$0xff]
          %v2464 = vld [vmem:[%s2447 + $0xa] sm:$0xff]
          %v2465 = vld [vmem:[%s2447 + $0x12] sm:$0xff]
          %v2466 = vld [vmem:[%s2447 + $0x2a] sm:$0xff]
          %v2467 = vld [vmem:[%s2447 + $0x32] sm:$0xff]
          %2472 = vrot.lane.b32.xlu0 %v2452, 64
          %v2473 = vpop.permute.xlu0 %2472
          %2474 = vrot.lane.b32.xlu0 %v2453, 64
          %v2475 = vpop.permute.xlu0 %2474
          %2476 = vrot.lane.b32.xlu0 %v2454, 64
          %v2477 = vpop.permute.xlu0 %2476
          %2478 = vrot.lane.b32.xlu0 %v2455, 64
          %v2479 = vpop.permute.xlu0 %2478
          %2488 = vrot.lane.b32.xlu0 %v2460, 64
          %v2489 = vpop.permute.xlu0 %2488
          %2490 = vrot.lane.b32.xlu0 %v2461, 64
          %v2491 = vpop.permute.xlu0 %2490
          %2492 = vrot.lane.b32.xlu0 %v2462, 64
          %v2493 = vpop.permute.xlu0 %2492
          %2494 = vrot.lane.b32.xlu0 %v2463, 64
          %v2495 = vpop.permute.xlu0 %2494
          %v2500 = vsel %vm276, %v2448, %v2473
          %v2501 = vsel %vm276, %v2449, %v2475
          %v2502 = vsel %vm276, %v2450, %v2477
          %v2503 = vsel %vm276, %v2451, %v2479
          %v2504 = vsel %vm276, %v2456, %v2489
          %v2505 = vsel %vm276, %v2457, %v2491
          %v2506 = vsel %vm276, %v2458, %v2493
          %v2507 = vsel %vm276, %v2459, %v2495
          %s2508 = scalar_lea.vmem %s3, 320
          %v2509 = vld [vmem:[%s2508] sm:$0xff]
          %v2510 = vld [vmem:[%s2508 + $0x8] sm:$0xff]
          %v2511 = vld [vmem:[%s2508 + $0x10] sm:$0xff]
          %v2512 = vld [vmem:[%s2508 + $0x18] sm:$0xff]
          %v2513 = vld [vmem:[%s2508 + $0x20] sm:$0xff]
          %v2514 = vld [vmem:[%s2508 + $0x28] sm:$0xff]
          %v2515 = vld [vmem:[%s2508 + $0x30] sm:$0xff]
          %v2516 = vld [vmem:[%s2508 + $0x38] sm:$0xff]
          %v2517 = vld [vmem:[%s2508 + $0x40] sm:$0xff]
          %v2518 = vld [vmem:[%s2508 + $0x48] sm:$0xff]
          %v2519 = vld [vmem:[%s2508 + $0x50] sm:$0xff]
          %v2520 = vld [vmem:[%s2508 + $0x58] sm:$0xff]
          %v2521 = vld [vmem:[%s2508 + $0x60] sm:$0xff]
          %v2522 = vld [vmem:[%s2508 + $0x68] sm:$0xff]
          %v2523 = vld [vmem:[%s2508 + $0x70] sm:$0xff]
          %v2524 = vld [vmem:[%s2508 + $0x78] sm:$0xff]
          %v2525 = vld [vmem:[%s2508 + $0x80] sm:$0xff]
          %v2526 = vld [vmem:[%s2508 + $0x88] sm:$0xff]
          %v2527 = vld [vmem:[%s2508 + $0x90] sm:$0xff]
          %v2528 = vld [vmem:[%s2508 + $0x98] sm:$0xff]
          %v2529 = vld [vmem:[%s2508 + $0xa0] sm:$0xff]
          %v2530 = vld [vmem:[%s2508 + $0xa8] sm:$0xff]
          %v2531 = vld [vmem:[%s2508 + $0xb0] sm:$0xff]
          %v2532 = vld [vmem:[%s2508 + $0xb8] sm:$0xff]
          %v2533 = vld [vmem:[%s2508 + $0xc0] sm:$0xff]
          %v2534 = vld [vmem:[%s2508 + $0xc8] sm:$0xff]
          %v2535 = vld [vmem:[%s2508 + $0xd0] sm:$0xff]
          %v2536 = vld [vmem:[%s2508 + $0xd8] sm:$0xff]
          %v2537 = vld [vmem:[%s2508 + $0xe0] sm:$0xff]
          %v2538 = vld [vmem:[%s2508 + $0xe8] sm:$0xff]
          %v2539 = vld [vmem:[%s2508 + $0xf0] sm:$0xff]
          %v2540 = vld [vmem:[%s2508 + $0xf8] sm:$0xff]
          %v2541 = vld [vmem:[%s2508 + $0x100] sm:$0xff]
          %v2542 = vld [vmem:[%s2508 + $0x108] sm:$0xff]
          %v2543 = vld [vmem:[%s2508 + $0x110] sm:$0xff]
          %v2544 = vld [vmem:[%s2508 + $0x118] sm:$0xff]
          %v2545 = vld [vmem:[%s2508 + $0x120] sm:$0xff]
          %v2546 = vld [vmem:[%s2508 + $0x128] sm:$0xff]
          %v2547 = vld [vmem:[%s2508 + $0x130] sm:$0xff]
          %v2548 = vld [vmem:[%s2508 + $0x138] sm:$0xff]
          %v2550 = vsel %vm276, %v2464, 0
          %v2553 = vsel %vm276, %v2465, 0
          %v2556 = vsel %vm276, %v2466, 0
          %v2559 = vsel %vm276, %v2467, 0
          %2561 = vmatprep.subr.mxu0 0.0
          %2562 = vmatpush1.msra.mxu0 %v2509
          %2563 = vmatprep.subr.mxu0 0.0
          %2564 = vmatpush1.msra.mxu0 %v2510
          %2565 = vmatprep.subr.mxu0 0.0
          %2566 = vmatpush1.msra.mxu0 %v2511
          %2567 = vmatprep.subr.mxu0 0.0
          %2568 = vmatpush1.msra.mxu0 %v2512
          %2569 = vmatprep.subr.mxu0 0.0
          %2570 = vmatpush1.msra.mxu0 %v2513
          %2571 = vmatprep.subr.mxu0 0.0
          %2572 = vmatpush1.msra.mxu0 %v2514
          %2573 = vmatprep.subr.mxu0 0.0
          %2574 = vmatpush1.msra.mxu0 %v2515
          %2575 = vmatprep.subr.mxu0 0.0
          %2576 = vmatpush1.msra.mxu0 %v2516
          %2577 = vmatprep.subr.mxu0 0.0
          %2578 = vmatpush1.msra.mxu0 %v2517
          %2579 = vmatprep.subr.mxu0 0.0
          %2580 = vmatpush1.msra.mxu0 %v2518
          %2581 = vmatprep.subr.mxu0 0.0
          %2582 = vmatpush1.msra.mxu0 %v2519
          %2583 = vmatprep.subr.mxu0 0.0
          %2584 = vmatpush1.msra.mxu0 %v2520
          %2585 = vmatprep.subr.mxu0 0.0
          %2586 = vmatpush1.msra.mxu0 %v2521
          %2587 = vmatprep.subr.mxu0 0.0
          %2588 = vmatpush1.msra.mxu0 %v2522
          %2589 = vmatprep.subr.mxu0 0.0
          %2590 = vmatpush1.msra.mxu0 %v2523
          %2591 = vmatprep.subr.mxu0 0.0
          %2592 = vmatpush1.msra.mxu0 %v2524
          %2593 = vmatprep.subr.mxu0 0.0
          %2594 = vmatpush1.msra.mxu0 %v2525
          %2595 = vmatprep.subr.mxu0 0.0
          %2596 = vmatpush1.msra.mxu0 %v2526
          %2597 = vmatprep.subr.mxu0 0.0
          %2598 = vmatpush1.msra.mxu0 %v2527
          %2599 = vmatprep.subr.mxu0 0.0
          %2600 = vmatpush1.msra.mxu0 %v2528
          %2601 = vmatprep.subr.mxu0 0.0
          %2602 = vmatpush1.msra.mxu0 %v2529
          %2603 = vmatprep.subr.mxu0 0.0
          %2604 = vmatpush1.msra.mxu0 %v2530
          %2605 = vmatprep.subr.mxu0 0.0
          %2606 = vmatpush1.msra.mxu0 %v2531
          %2607 = vmatprep.subr.mxu0 0.0
          %2608 = vmatpush1.msra.mxu0 %v2532
          %2609 = vmatprep.subr.mxu0 0.0
          %2610 = vmatpush1.msra.mxu0 %v2533
          %2611 = vmatprep.subr.mxu0 0.0
          %2612 = vmatpush1.msra.mxu0 %v2534
          %2613 = vmatprep.subr.mxu0 0.0
          %2614 = vmatpush1.msra.mxu0 %v2535
          %2615 = vmatprep.subr.mxu0 0.0
          %2616 = vmatpush1.msra.mxu0 %v2536
          %2617 = vmatprep.subr.mxu0 0.0
          %2618 = vmatpush1.msra.mxu0 %v2537
          %2619 = vmatprep.subr.mxu0 0.0
          %2620 = vmatpush1.msra.mxu0 %v2538
          %2621 = vmatprep.subr.mxu0 0.0
          %2622 = vmatpush1.msra.mxu0 %v2539
          %2623 = vmatprep.subr.mxu0 0.0
          %2624 = vmatpush1.msra.mxu0 %v2540
          %2625 = vmatprep.mubr.f32.mxu0 %v2504
          %2626 = vmatmul.mubr.f32.gmra.mrb[0].mxu0 %v2500
          %v2627 = vpop.f32.mrb[0].mxu0
          %v2628 = vadd.f32 0.0, %v2627
          %v2629 = vpop.f32.mrb[0].mxu0
          %2630 = vmatprep.mubr.f32.mxu0 %v2505
          %2631 = vmatmul.mubr.f32.gmra.mrb[0].mxu0 %v2501
          %v2632 = vpop.f32.mrb[0].mxu0
          %v2633 = vadd.f32 0.0, %v2632
          %v2634 = vpop.f32.mrb[0].mxu0
          %2635 = vmatprep.mubr.f32.mxu0 %v2506
          %2636 = vmatmul.mubr.f32.gmra.mrb[0].mxu0 %v2502
          %v2637 = vpop.f32.mrb[0].mxu0
          %v2638 = vadd.f32 0.0, %v2637
          %v2639 = vpop.f32.mrb[0].mxu0
          %2640 = vmatprep.mubr.f32.mxu0 %v2507
          %2641 = vmatmul.mubr.f32.gmra.mrb[0].mxu0 %v2503
          %v2642 = vpop.f32.mrb[0].mxu0
          %v2643 = vadd.f32 0.0, %v2642
          %v2644 = vpop.f32.mrb[0].mxu0
          %2645 = vdwg.mxu0
          %2646 = vmatprep.subr.mxu0 0.0
          %2647 = vmatpush1.msra.mxu0 %v2541
          %2648 = vmatprep.subr.mxu0 0.0
          %2649 = vmatpush1.msra.mxu0 %v2542
          %2650 = vmatprep.subr.mxu0 0.0
          %2651 = vmatpush1.msra.mxu0 %v2543
          %2652 = vmatprep.subr.mxu0 0.0
          %2653 = vmatpush1.msra.mxu0 %v2544
          %2654 = vmatprep.subr.mxu0 0.0
          %2655 = vmatpush1.msra.mxu0 %v2545
          %2656 = vmatprep.subr.mxu0 0.0
          %2657 = vmatpush1.msra.mxu0 %v2546
          %2658 = vmatprep.subr.mxu0 0.0
          %2659 = vmatpush1.msra.mxu0 %v2547
          %2660 = vmatprep.subr.mxu0 0.0
          %2661 = vmatpush1.msra.mxu0 %v2548
          %2662 = vmatprep.subr.mxu0 0.0
          %2663 = vmatpush1.msra.mxu0 0.0
          %2664 = vmatprep.subr.mxu0 0.0
          %2665 = vmatpush1.msra.mxu0 0.0
          %2666 = vmatprep.subr.mxu0 0.0
          %2667 = vmatpush1.msra.mxu0 0.0
          %2668 = vmatprep.subr.mxu0 0.0
          %2669 = vmatpush1.msra.mxu0 0.0
          %2670 = vmatprep.subr.mxu0 0.0
          %2671 = vmatpush1.msra.mxu0 0.0
          %2672 = vmatprep.subr.mxu0 0.0
          %2673 = vmatpush1.msra.mxu0 0.0
          %2674 = vmatprep.subr.mxu0 0.0
          %2675 = vmatpush1.msra.mxu0 0.0
          %2676 = vmatprep.subr.mxu0 0.0
          %2677 = vmatpush1.msra.mxu0 0.0
          %2678 = vmatprep.subr.mxu0 0.0
          %2679 = vmatpush1.msra.mxu0 0.0
          %2680 = vmatprep.subr.mxu0 0.0
          %2681 = vmatpush1.msra.mxu0 0.0
          %2682 = vmatprep.subr.mxu0 0.0
          %2683 = vmatpush1.msra.mxu0 0.0
          %2684 = vmatprep.subr.mxu0 0.0
          %2685 = vmatpush1.msra.mxu0 0.0
          %2686 = vmatprep.subr.mxu0 0.0
          %2687 = vmatpush1.msra.mxu0 0.0
          %2688 = vmatprep.subr.mxu0 0.0
          %2689 = vmatpush1.msra.mxu0 0.0
          %2690 = vmatprep.subr.mxu0 0.0
          %2691 = vmatpush1.msra.mxu0 0.0
          %2692 = vmatprep.subr.mxu0 0.0
          %2693 = vmatpush1.msra.mxu0 0.0
          %2694 = vmatprep.subr.mxu0 0.0
          %2695 = vmatpush1.msra.mxu0 0.0
          %2696 = vmatprep.subr.mxu0 0.0
          %2697 = vmatpush1.msra.mxu0 0.0
          %2698 = vmatprep.subr.mxu0 0.0
          %2699 = vmatpush1.msra.mxu0 0.0
          %2700 = vmatprep.subr.mxu0 0.0
          %2701 = vmatpush1.msra.mxu0 0.0
          %2702 = vmatprep.subr.mxu0 0.0
          %2703 = vmatpush1.msra.mxu0 0.0
          %2704 = vmatprep.subr.mxu0 0.0
          %2705 = vmatpush1.msra.mxu0 0.0
          %2706 = vmatprep.subr.mxu0 0.0
          %2707 = vmatpush1.msra.mxu0 0.0
          %2708 = vmatprep.subr.mxu0 0.0
          %2709 = vmatpush1.msra.mxu0 0.0
          %2710 = vmatprep.mubr.f32.mxu0 0.0
          %2711 = vmatmul.mubr.f32.gmra.mrb[0].mxu0 %v2550
          %v2712 = vpop.f32.mrb[0].mxu0
          %v2713 = vadd.f32 %v2628, %v2712
          %v2714 = vpop.f32.mrb[0].mxu0
          %2715 = vmatprep.mubr.f32.mxu0 0.0
          %2716 = vmatmul.mubr.f32.gmra.mrb[0].mxu0 %v2553
          %v2717 = vpop.f32.mrb[0].mxu0
          %v2718 = vadd.f32 %v2633, %v2717
          %v2719 = vpop.f32.mrb[0].mxu0
          %2720 = vmatprep.mubr.f32.mxu0 0.0
          %2721 = vmatmul.mubr.f32.gmra.mrb[0].mxu0 %v2556
          %v2722 = vpop.f32.mrb[0].mxu0
          %v2723 = vadd.f32 %v2638, %v2722
          %v2724 = vpop.f32.mrb[0].mxu0
          %2725 = vmatprep.mubr.f32.mxu0 0.0
          %2726 = vmatmul.mubr.f32.gmra.mrb[0].mxu0 %v2559
          %v2727 = vpop.f32.mrb[0].mxu0
          %v2728 = vadd.f32 %v2643, %v2727
          %v2729 = vpop.f32.mrb[0].mxu0
          %2730 = vdwg.mxu0
          %v2731 = vadd.f32 %v2441, %v2713
          %v2732 = vadd.f32 %v2442, %v2718
          %v2733 = vadd.f32 %v2443, %v2723
          %v2734 = vadd.f32 %v2444, %v2728
          %s2735 = sadd.s32 %s2156, 2
          %s2736 = smul.u32 %s2735, 32
          %s2737 = scalar_lea.vmem [#allocation2], %s2736
          %v2738 = vld [vmem:[%s2737 + $0x6] sm:$0xff]
          %v2739 = vld [vmem:[%s2737 + $0xe] sm:$0xff]
          %v2740 = vld [vmem:[%s2737 + $0x26] sm:$0xff]
          %v2741 = vld [vmem:[%s2737 + $0x2e] sm:$0xff]
          %v2742 = vld [vmem:[%s2737 + $0x7] sm:$0xff]
          %v2743 = vld [vmem:[%s2737 + $0xf] sm:$0xff]
          %v2744 = vld [vmem:[%s2737 + $0x27] sm:$0xff]
          %v2745 = vld [vmem:[%s2737 + $0x2f] sm:$0xff]
          %v2746 = vld [vmem:[%s2737 + $0x8] sm:$0xff]
          %v2747 = vld [vmem:[%s2737 + $0x10] sm:$0xff]
          %v2748 = vld [vmem:[%s2737 + $0x28] sm:$0xff]
          %v2749 = vld [vmem:[%s2737 + $0x30] sm:$0xff]
          %v2750 = vld [vmem:[%s2737 + $0x9] sm:$0xff]
          %v2751 = vld [vmem:[%s2737 + $0x11] sm:$0xff]
          %v2752 = vld [vmem:[%s2737 + $0x29] sm:$0xff]
          %v2753 = vld [vmem:[%s2737 + $0x31] sm:$0xff]
          %v2754 = vld [vmem:[%s2737 + $0xa] sm:$0xff]
          %v2755 = vld [vmem:[%s2737 + $0x12] sm:$0xff]
          %v2756 = vld [vmem:[%s2737 + $0x2a] sm:$0xff]
          %v2757 = vld [vmem:[%s2737 + $0x32] sm:$0xff]
          %2762 = vrot.lane.b32.xlu0 %v2742, 64
          %v2763 = vpop.permute.xlu0 %2762
          %2764 = vrot.lane.b32.xlu0 %v2743, 64
          %v2765 = vpop.permute.xlu0 %2764
          %2766 = vrot.lane.b32.xlu0 %v2744, 64
          %v2767 = vpop.permute.xlu0 %2766
          %2768 = vrot.lane.b32.xlu0 %v2745, 64
          %v2769 = vpop.permute.xlu0 %2768
          %2778 = vrot.lane.b32.xlu0 %v2750, 64
          %v2779 = vpop.permute.xlu0 %2778
          %2780 = vrot.lane.b32.xlu0 %v2751, 64
          %v2781 = vpop.permute.xlu0 %2780
          %2782 = vrot.lane.b32.xlu0 %v2752, 64
          %v2783 = vpop.permute.xlu0 %2782
          %2784 = vrot.lane.b32.xlu0 %v2753, 64
          %v2785 = vpop.permute.xlu0 %2784
          %v2790 = vsel %vm276, %v2738, %v2763
          %v2791 = vsel %vm276, %v2739, %v2765
          %v2792 = vsel %vm276, %v2740, %v2767
          %v2793 = vsel %vm276, %v2741, %v2769
          %v2794 = vsel %vm276, %v2746, %v2779
          %v2795 = vsel %vm276, %v2747, %v2781
          %v2796 = vsel %vm276, %v2748, %v2783
          %v2797 = vsel %vm276, %v2749, %v2785
          %s2798 = scalar_lea.vmem %s3, 640
          %v2799 = vld [vmem:[%s2798] sm:$0xff]
          %v2800 = vld [vmem:[%s2798 + $0x8] sm:$0xff]
          %v2801 = vld [vmem:[%s2798 + $0x10] sm:$0xff]
          %v2802 = vld [vmem:[%s2798 + $0x18] sm:$0xff]
          %v2803 = vld [vmem:[%s2798 + $0x20] sm:$0xff]
          %v2804 = vld [vmem:[%s2798 + $0x28] sm:$0xff]
          %v2805 = vld [vmem:[%s2798 + $0x30] sm:$0xff]
          %v2806 = vld [vmem:[%s2798 + $0x38] sm:$0xff]
          %v2807 = vld [vmem:[%s2798 + $0x40] sm:$0xff]
          %v2808 = vld [vmem:[%s2798 + $0x48] sm:$0xff]
          %v2809 = vld [vmem:[%s2798 + $0x50] sm:$0xff]
          %v2810 = vld [vmem:[%s2798 + $0x58] sm:$0xff]
          %v2811 = vld [vmem:[%s2798 + $0x60] sm:$0xff]
          %v2812 = vld [vmem:[%s2798 + $0x68] sm:$0xff]
          %v2813 = vld [vmem:[%s2798 + $0x70] sm:$0xff]
          %v2814 = vld [vmem:[%s2798 + $0x78] sm:$0xff]
          %v2815 = vld [vmem:[%s2798 + $0x80] sm:$0xff]
          %v2816 = vld [vmem:[%s2798 + $0x88] sm:$0xff]
          %v2817 = vld [vmem:[%s2798 + $0x90] sm:$0xff]
          %v2818 = vld [vmem:[%s2798 + $0x98] sm:$0xff]
          %v2819 = vld [vmem:[%s2798 + $0xa0] sm:$0xff]
          %v2820 = vld [vmem:[%s2798 + $0xa8] sm:$0xff]
          %v2821 = vld [vmem:[%s2798 + $0xb0] sm:$0xff]
          %v2822 = vld [vmem:[%s2798 + $0xb8] sm:$0xff]
          %v2823 = vld [vmem:[%s2798 + $0xc0] sm:$0xff]
          %v2824 = vld [vmem:[%s2798 + $0xc8] sm:$0xff]
          %v2825 = vld [vmem:[%s2798 + $0xd0] sm:$0xff]
          %v2826 = vld [vmem:[%s2798 + $0xd8] sm:$0xff]
          %v2827 = vld [vmem:[%s2798 + $0xe0] sm:$0xff]
          %v2828 = vld [vmem:[%s2798 + $0xe8] sm:$0xff]
          %v2829 = vld [vmem:[%s2798 + $0xf0] sm:$0xff]
          %v2830 = vld [vmem:[%s2798 + $0xf8] sm:$0xff]
          %v2831 = vld [vmem:[%s2798 + $0x100] sm:$0xff]
          %v2832 = vld [vmem:[%s2798 + $0x108] sm:$0xff]
          %v2833 = vld [vmem:[%s2798 + $0x110] sm:$0xff]
          %v2834 = vld [vmem:[%s2798 + $0x118] sm:$0xff]
          %v2835 = vld [vmem:[%s2798 + $0x120] sm:$0xff]
          %v2836 = vld [vmem:[%s2798 + $0x128] sm:$0xff]
          %v2837 = vld [vmem:[%s2798 + $0x130] sm:$0xff]
          %v2838 = vld [vmem:[%s2798 + $0x138] sm:$0xff]
          %v2840 = vsel %vm276, %v2754, 0
          %v2843 = vsel %vm276, %v2755, 0
          %v2846 = vsel %vm276, %v2756, 0
          %v2849 = vsel %vm276, %v2757, 0
          %2851 = vmatprep.subr.mxu0 0.0
          %2852 = vmatpush1.msra.mxu0 %v2799
          %2853 = vmatprep.subr.mxu0 0.0
          %2854 = vmatpush1.msra.mxu0 %v2800
          %2855 = vmatprep.subr.mxu0 0.0
          %2856 = vmatpush1.msra.mxu0 %v2801
          %2857 = vmatprep.subr.mxu0 0.0
          %2858 = vmatpush1.msra.mxu0 %v2802
          %2859 = vmatprep.subr.mxu0 0.0
          %2860 = vmatpush1.msra.mxu0 %v2803
          %2861 = vmatprep.subr.mxu0 0.0
          %2862 = vmatpush1.msra.mxu0 %v2804
          %2863 = vmatprep.subr.mxu0 0.0
          %2864 = vmatpush1.msra.mxu0 %v2805
          %2865 = vmatprep.subr.mxu0 0.0
          %2866 = vmatpush1.msra.mxu0 %v2806
          %2867 = vmatprep.subr.mxu0 0.0
          %2868 = vmatpush1.msra.mxu0 %v2807
          %2869 = vmatprep.subr.mxu0 0.0
          %2870 = vmatpush1.msra.mxu0 %v2808
          %2871 = vmatprep.subr.mxu0 0.0
          %2872 = vmatpush1.msra.mxu0 %v2809
          %2873 = vmatprep.subr.mxu0 0.0
          %2874 = vmatpush1.msra.mxu0 %v2810
          %2875 = vmatprep.subr.mxu0 0.0
          %2876 = vmatpush1.msra.mxu0 %v2811
          %2877 = vmatprep.subr.mxu0 0.0
          %2878 = vmatpush1.msra.mxu0 %v2812
          %2879 = vmatprep.subr.mxu0 0.0
          %2880 = vmatpush1.msra.mxu0 %v2813
          %2881 = vmatprep.subr.mxu0 0.0
          %2882 = vmatpush1.msra.mxu0 %v2814
          %2883 = vmatprep.subr.mxu0 0.0
          %2884 = vmatpush1.msra.mxu0 %v2815
          %2885 = vmatprep.subr.mxu0 0.0
          %2886 = vmatpush1.msra.mxu0 %v2816
          %2887 = vmatprep.subr.mxu0 0.0
          %2888 = vmatpush1.msra.mxu0 %v2817
          %2889 = vmatprep.subr.mxu0 0.0
          %2890 = vmatpush1.msra.mxu0 %v2818
          %2891 = vmatprep.subr.mxu0 0.0
          %2892 = vmatpush1.msra.mxu0 %v2819
          %2893 = vmatprep.subr.mxu0 0.0
          %2894 = vmatpush1.msra.mxu0 %v2820
          %2895 = vmatprep.subr.mxu0 0.0
          %2896 = vmatpush1.msra.mxu0 %v2821
          %2897 = vmatprep.subr.mxu0 0.0
          %2898 = vmatpush1.msra.mxu0 %v2822
          %2899 = vmatprep.subr.mxu0 0.0
          %2900 = vmatpush1.msra.mxu0 %v2823
          %2901 = vmatprep.subr.mxu0 0.0
          %2902 = vmatpush1.msra.mxu0 %v2824
          %2903 = vmatprep.subr.mxu0 0.0
          %2904 = vmatpush1.msra.mxu0 %v2825
          %2905 = vmatprep.subr.mxu0 0.0
          %2906 = vmatpush1.msra.mxu0 %v2826
          %2907 = vmatprep.subr.mxu0 0.0
          %2908 = vmatpush1.msra.mxu0 %v2827
          %2909 = vmatprep.subr.mxu0 0.0
          %2910 = vmatpush1.msra.mxu0 %v2828
          %2911 = vmatprep.subr.mxu0 0.0
          %2912 = vmatpush1.msra.mxu0 %v2829
          %2913 = vmatprep.subr.mxu0 0.0
          %2914 = vmatpush1.msra.mxu0 %v2830
          %2915 = vmatprep.mubr.f32.mxu0 %v2794
          %2916 = vmatmul.mubr.f32.gmra.mrb[0].mxu0 %v2790
          %v2917 = vpop.f32.mrb[0].mxu0
          %v2918 = vadd.f32 0.0, %v2917
          %v2919 = vpop.f32.mrb[0].mxu0
          %2920 = vmatprep.mubr.f32.mxu0 %v2795
          %2921 = vmatmul.mubr.f32.gmra.mrb[0].mxu0 %v2791
          %v2922 = vpop.f32.mrb[0].mxu0
          %v2923 = vadd.f32 0.0, %v2922
          %v2924 = vpop.f32.mrb[0].mxu0
          %2925 = vmatprep.mubr.f32.mxu0 %v2796
          %2926 = vmatmul.mubr.f32.gmra.mrb[0].mxu0 %v2792
          %v2927 = vpop.f32.mrb[0].mxu0
          %v2928 = vadd.f32 0.0, %v2927
          %v2929 = vpop.f32.mrb[0].mxu0
          %2930 = vmatprep.mubr.f32.mxu0 %v2797
          %2931 = vmatmul.mubr.f32.gmra.mrb[0].mxu0 %v2793
          %v2932 = vpop.f32.mrb[0].mxu0
          %v2933 = vadd.f32 0.0, %v2932
          %v2934 = vpop.f32.mrb[0].mxu0
          %2935 = vdwg.mxu0
          %2936 = vmatprep.subr.mxu0 0.0
          %2937 = vmatpush1.msra.mxu0 %v2831
          %2938 = vmatprep.subr.mxu0 0.0
          %2939 = vmatpush1.msra.mxu0 %v2832
          %2940 = vmatprep.subr.mxu0 0.0
          %2941 = vmatpush1.msra.mxu0 %v2833
          %2942 = vmatprep.subr.mxu0 0.0
          %2943 = vmatpush1.msra.mxu0 %v2834
          %2944 = vmatprep.subr.mxu0 0.0
          %2945 = vmatpush1.msra.mxu0 %v2835
          %2946 = vmatprep.subr.mxu0 0.0
          %2947 = vmatpush1.msra.mxu0 %v2836
          %2948 = vmatprep.subr.mxu0 0.0
          %2949 = vmatpush1.msra.mxu0 %v2837
          %2950 = vmatprep.subr.mxu0 0.0
          %2951 = vmatpush1.msra.mxu0 %v2838
          %2952 = vmatprep.subr.mxu0 0.0
          %2953 = vmatpush1.msra.mxu0 0.0
          %2954 = vmatprep.subr.mxu0 0.0
          %2955 = vmatpush1.msra.mxu0 0.0
          %2956 = vmatprep.subr.mxu0 0.0
          %2957 = vmatpush1.msra.mxu0 0.0
          %2958 = vmatprep.subr.mxu0 0.0
          %2959 = vmatpush1.msra.mxu0 0.0
          %2960 = vmatprep.subr.mxu0 0.0
          %2961 = vmatpush1.msra.mxu0 0.0
          %2962 = vmatprep.subr.mxu0 0.0
          %2963 = vmatpush1.msra.mxu0 0.0
          %2964 = vmatprep.subr.mxu0 0.0
          %2965 = vmatpush1.msra.mxu0 0.0
          %2966 = vmatprep.subr.mxu0 0.0
          %2967 = vmatpush1.msra.mxu0 0.0
          %2968 = vmatprep.subr.mxu0 0.0
          %2969 = vmatpush1.msra.mxu0 0.0
          %2970 = vmatprep.subr.mxu0 0.0
          %2971 = vmatpush1.msra.mxu0 0.0
          %2972 = vmatprep.subr.mxu0 0.0
          %2973 = vmatpush1.msra.mxu0 0.0
          %2974 = vmatprep.subr.mxu0 0.0
          %2975 = vmatpush1.msra.mxu0 0.0
          %2976 = vmatprep.subr.mxu0 0.0
          %2977 = vmatpush1.msra.mxu0 0.0
          %2978 = vmatprep.subr.mxu0 0.0
          %2979 = vmatpush1.msra.mxu0 0.0
          %2980 = vmatprep.subr.mxu0 0.0
          %2981 = vmatpush1.msra.mxu0 0.0
          %2982 = vmatprep.subr.mxu0 0.0
          %2983 = vmatpush1.msra.mxu0 0.0
          %2984 = vmatprep.subr.mxu0 0.0
          %2985 = vmatpush1.msra.mxu0 0.0
          %2986 = vmatprep.subr.mxu0 0.0
          %2987 = vmatpush1.msra.mxu0 0.0
          %2988 = vmatprep.subr.mxu0 0.0
          %2989 = vmatpush1.msra.mxu0 0.0
          %2990 = vmatprep.subr.mxu0 0.0
          %2991 = vmatpush1.msra.mxu0 0.0
          %2992 = vmatprep.subr.mxu0 0.0
          %2993 = vmatpush1.msra.mxu0 0.0
          %2994 = vmatprep.subr.mxu0 0.0
          %2995 = vmatpush1.msra.mxu0 0.0
          %2996 = vmatprep.subr.mxu0 0.0
          %2997 = vmatpush1.msra.mxu0 0.0
          %2998 = vmatprep.subr.mxu0 0.0
          %2999 = vmatpush1.msra.mxu0 0.0
          %3000 = vmatprep.mubr.f32.mxu0 0.0
          %3001 = vmatmul.mubr.f32.gmra.mrb[0].mxu0 %v2840
          %v3002 = vpop.f32.mrb[0].mxu0
          %v3003 = vadd.f32 %v2918, %v3002
          %v3004 = vpop.f32.mrb[0].mxu0
          %3005 = vmatprep.mubr.f32.mxu0 0.0
          %3006 = vmatmul.mubr.f32.gmra.mrb[0].mxu0 %v2843
          %v3007 = vpop.f32.mrb[0].mxu0
          %v3008 = vadd.f32 %v2923, %v3007
          %v3009 = vpop.f32.mrb[0].mxu0
          %3010 = vmatprep.mubr.f32.mxu0 0.0
          %3011 = vmatmul.mubr.f32.gmra.mrb[0].mxu0 %v2846
          %v3012 = vpop.f32.mrb[0].mxu0
          %v3013 = vadd.f32 %v2928, %v3012
          %v3014 = vpop.f32.mrb[0].mxu0
          %3015 = vmatprep.mubr.f32.mxu0 0.0
          %3016 = vmatmul.mubr.f32.gmra.mrb[0].mxu0 %v2849
          %v3017 = vpop.f32.mrb[0].mxu0
          %v3018 = vadd.f32 %v2933, %v3017
          %v3019 = vpop.f32.mrb[0].mxu0
          %3020 = vdwg.mxu0
          %v3021 = vadd.f32 %v2731, %v3003
          %v3022 = vadd.f32 %v2732, %v3008
          %v3023 = vadd.f32 %v2733, %v3013
          %v3024 = vadd.f32 %v2734, %v3018
          %s3025 = sadd.s32 %s2156, 3
          %s3026 = smul.u32 %s3025, 32
          %s3027 = scalar_lea.vmem [#allocation2], %s3026
          %v3028 = vld [vmem:[%s3027 + $0x6] sm:$0xff]
          %v3029 = vld [vmem:[%s3027 + $0xe] sm:$0xff]
          %v3030 = vld [vmem:[%s3027 + $0x26] sm:$0xff]
          %v3031 = vld [vmem:[%s3027 + $0x2e] sm:$0xff]
          %v3032 = vld [vmem:[%s3027 + $0x7] sm:$0xff]
          %v3033 = vld [vmem:[%s3027 + $0xf] sm:$0xff]
          %v3034 = vld [vmem:[%s3027 + $0x27] sm:$0xff]
          %v3035 = vld [vmem:[%s3027 + $0x2f] sm:$0xff]
          %v3036 = vld [vmem:[%s3027 + $0x8] sm:$0xff]
          %v3037 = vld [vmem:[%s3027 + $0x10] sm:$0xff]
          %v3038 = vld [vmem:[%s3027 + $0x28] sm:$0xff]
          %v3039 = vld [vmem:[%s3027 + $0x30] sm:$0xff]
          %v3040 = vld [vmem:[%s3027 + $0x9] sm:$0xff]
          %v3041 = vld [vmem:[%s3027 + $0x11] sm:$0xff]
          %v3042 = vld [vmem:[%s3027 + $0x29] sm:$0xff]
          %v3043 = vld [vmem:[%s3027 + $0x31] sm:$0xff]
          %v3044 = vld [vmem:[%s3027 + $0xa] sm:$0xff]
          %v3045 = vld [vmem:[%s3027 + $0x12] sm:$0xff]
          %v3046 = vld [vmem:[%s3027 + $0x2a] sm:$0xff]
          %v3047 = vld [vmem:[%s3027 + $0x32] sm:$0xff]
          %3052 = vrot.lane.b32.xlu0 %v3032, 64
          %v3053 = vpop.permute.xlu0 %3052
          %3054 = vrot.lane.b32.xlu0 %v3033, 64
          %v3055 = vpop.permute.xlu0 %3054
          %3056 = vrot.lane.b32.xlu0 %v3034, 64
          %v3057 = vpop.permute.xlu0 %3056
          %3058 = vrot.lane.b32.xlu0 %v3035, 64
          %v3059 = vpop.permute.xlu0 %3058
          %3068 = vrot.lane.b32.xlu0 %v3040, 64
          %v3069 = vpop.permute.xlu0 %3068
          %3070 = vrot.lane.b32.xlu0 %v3041, 64
          %v3071 = vpop.permute.xlu0 %3070
          %3072 = vrot.lane.b32.xlu0 %v3042, 64
          %v3073 = vpop.permute.xlu0 %3072
          %3074 = vrot.lane.b32.xlu0 %v3043, 64
          %v3075 = vpop.permute.xlu0 %3074
          %v3080 = vsel %vm276, %v3028, %v3053
          %v3081 = vsel %vm276, %v3029, %v3055
          %v3082 = vsel %vm276, %v3030, %v3057
          %v3083 = vsel %vm276, %v3031, %v3059
          %v3084 = vsel %vm276, %v3036, %v3069
          %v3085 = vsel %vm276, %v3037, %v3071
          %v3086 = vsel %vm276, %v3038, %v3073
          %v3087 = vsel %vm276, %v3039, %v3075
          %s3088 = scalar_lea.vmem %s3, 960
          %v3089 = vld [vmem:[%s3088] sm:$0xff]
          %v3090 = vld [vmem:[%s3088 + $0x8] sm:$0xff]
          %v3091 = vld [vmem:[%s3088 + $0x10] sm:$0xff]
          %v3092 = vld [vmem:[%s3088 + $0x18] sm:$0xff]
          %v3093 = vld [vmem:[%s3088 + $0x20] sm:$0xff]
          %v3094 = vld [vmem:[%s3088 + $0x28] sm:$0xff]
          %v3095 = vld [vmem:[%s3088 + $0x30] sm:$0xff]
          %v3096 = vld [vmem:[%s3088 + $0x38] sm:$0xff]
          %v3097 = vld [vmem:[%s3088 + $0x40] sm:$0xff]
          %v3098 = vld [vmem:[%s3088 + $0x48] sm:$0xff]
          %v3099 = vld [vmem:[%s3088 + $0x50] sm:$0xff]
          %v3100 = vld [vmem:[%s3088 + $0x58] sm:$0xff]
          %v3101 = vld [vmem:[%s3088 + $0x60] sm:$0xff]
          %v3102 = vld [vmem:[%s3088 + $0x68] sm:$0xff]
          %v3103 = vld [vmem:[%s3088 + $0x70] sm:$0xff]
          %v3104 = vld [vmem:[%s3088 + $0x78] sm:$0xff]
          %v3105 = vld [vmem:[%s3088 + $0x80] sm:$0xff]
          %v3106 = vld [vmem:[%s3088 + $0x88] sm:$0xff]
          %v3107 = vld [vmem:[%s3088 + $0x90] sm:$0xff]
          %v3108 = vld [vmem:[%s3088 + $0x98] sm:$0xff]
          %v3109 = vld [vmem:[%s3088 + $0xa0] sm:$0xff]
          %v3110 = vld [vmem:[%s3088 + $0xa8] sm:$0xff]
          %v3111 = vld [vmem:[%s3088 + $0xb0] sm:$0xff]
          %v3112 = vld [vmem:[%s3088 + $0xb8] sm:$0xff]
          %v3113 = vld [vmem:[%s3088 + $0xc0] sm:$0xff]
          %v3114 = vld [vmem:[%s3088 + $0xc8] sm:$0xff]
          %v3115 = vld [vmem:[%s3088 + $0xd0] sm:$0xff]
          %v3116 = vld [vmem:[%s3088 + $0xd8] sm:$0xff]
          %v3117 = vld [vmem:[%s3088 + $0xe0] sm:$0xff]
          %v3118 = vld [vmem:[%s3088 + $0xe8] sm:$0xff]
          %v3119 = vld [vmem:[%s3088 + $0xf0] sm:$0xff]
          %v3120 = vld [vmem:[%s3088 + $0xf8] sm:$0xff]
          %v3121 = vld [vmem:[%s3088 + $0x100] sm:$0xff]
          %v3122 = vld [vmem:[%s3088 + $0x108] sm:$0xff]
          %v3123 = vld [vmem:[%s3088 + $0x110] sm:$0xff]
          %v3124 = vld [vmem:[%s3088 + $0x118] sm:$0xff]
          %v3125 = vld [vmem:[%s3088 + $0x120] sm:$0xff]
          %v3126 = vld [vmem:[%s3088 + $0x128] sm:$0xff]
          %v3127 = vld [vmem:[%s3088 + $0x130] sm:$0xff]
          %v3128 = vld [vmem:[%s3088 + $0x138] sm:$0xff]
          %v3130 = vsel %vm276, %v3044, 0
          %v3133 = vsel %vm276, %v3045, 0
          %v3136 = vsel %vm276, %v3046, 0
          %v3139 = vsel %vm276, %v3047, 0
          %3141 = vmatprep.subr.mxu0 0.0
          %3142 = vmatpush1.msra.mxu0 %v3089
          %3143 = vmatprep.subr.mxu0 0.0
          %3144 = vmatpush1.msra.mxu0 %v3090
          %3145 = vmatprep.subr.mxu0 0.0
          %3146 = vmatpush1.msra.mxu0 %v3091
          %3147 = vmatprep.subr.mxu0 0.0
          %3148 = vmatpush1.msra.mxu0 %v3092
          %3149 = vmatprep.subr.mxu0 0.0
          %3150 = vmatpush1.msra.mxu0 %v3093
          %3151 = vmatprep.subr.mxu0 0.0
          %3152 = vmatpush1.msra.mxu0 %v3094
          %3153 = vmatprep.subr.mxu0 0.0
          %3154 = vmatpush1.msra.mxu0 %v3095
          %3155 = vmatprep.subr.mxu0 0.0
          %3156 = vmatpush1.msra.mxu0 %v3096
          %3157 = vmatprep.subr.mxu0 0.0
          %3158 = vmatpush1.msra.mxu0 %v3097
          %3159 = vmatprep.subr.mxu0 0.0
          %3160 = vmatpush1.msra.mxu0 %v3098
          %3161 = vmatprep.subr.mxu0 0.0
          %3162 = vmatpush1.msra.mxu0 %v3099
          %3163 = vmatprep.subr.mxu0 0.0
          %3164 = vmatpush1.msra.mxu0 %v3100
          %3165 = vmatprep.subr.mxu0 0.0
          %3166 = vmatpush1.msra.mxu0 %v3101
          %3167 = vmatprep.subr.mxu0 0.0
          %3168 = vmatpush1.msra.mxu0 %v3102
          %3169 = vmatprep.subr.mxu0 0.0
          %3170 = vmatpush1.msra.mxu0 %v3103
          %3171 = vmatprep.subr.mxu0 0.0
          %3172 = vmatpush1.msra.mxu0 %v3104
          %3173 = vmatprep.subr.mxu0 0.0
          %3174 = vmatpush1.msra.mxu0 %v3105
          %3175 = vmatprep.subr.mxu0 0.0
          %3176 = vmatpush1.msra.mxu0 %v3106
          %3177 = vmatprep.subr.mxu0 0.0
          %3178 = vmatpush1.msra.mxu0 %v3107
          %3179 = vmatprep.subr.mxu0 0.0
          %3180 = vmatpush1.msra.mxu0 %v3108
          %3181 = vmatprep.subr.mxu0 0.0
          %3182 = vmatpush1.msra.mxu0 %v3109
          %3183 = vmatprep.subr.mxu0 0.0
          %3184 = vmatpush1.msra.mxu0 %v3110
          %3185 = vmatprep.subr.mxu0 0.0
          %3186 = vmatpush1.msra.mxu0 %v3111
          %3187 = vmatprep.subr.mxu0 0.0
          %3188 = vmatpush1.msra.mxu0 %v3112
          %3189 = vmatprep.subr.mxu0 0.0
          %3190 = vmatpush1.msra.mxu0 %v3113
          %3191 = vmatprep.subr.mxu0 0.0
          %3192 = vmatpush1.msra.mxu0 %v3114
          %3193 = vmatprep.subr.mxu0 0.0
          %3194 = vmatpush1.msra.mxu0 %v3115
          %3195 = vmatprep.subr.mxu0 0.0
          %3196 = vmatpush1.msra.mxu0 %v3116
          %3197 = vmatprep.subr.mxu0 0.0
          %3198 = vmatpush1.msra.mxu0 %v3117
          %3199 = vmatprep.subr.mxu0 0.0
          %3200 = vmatpush1.msra.mxu0 %v3118
          %3201 = vmatprep.subr.mxu0 0.0
          %3202 = vmatpush1.msra.mxu0 %v3119
          %3203 = vmatprep.subr.mxu0 0.0
          %3204 = vmatpush1.msra.mxu0 %v3120
          %3205 = vmatprep.mubr.f32.mxu0 %v3084
          %3206 = vmatmul.mubr.f32.gmra.mrb[0].mxu0 %v3080
          %v3207 = vpop.f32.mrb[0].mxu0
          %v3208 = vadd.f32 0.0, %v3207
          %v3209 = vpop.f32.mrb[0].mxu0
          %3210 = vmatprep.mubr.f32.mxu0 %v3085
          %3211 = vmatmul.mubr.f32.gmra.mrb[0].mxu0 %v3081
          %v3212 = vpop.f32.mrb[0].mxu0
          %v3213 = vadd.f32 0.0, %v3212
          %v3214 = vpop.f32.mrb[0].mxu0
          %3215 = vmatprep.mubr.f32.mxu0 %v3086
          %3216 = vmatmul.mubr.f32.gmra.mrb[0].mxu0 %v3082
          %v3217 = vpop.f32.mrb[0].mxu0
          %v3218 = vadd.f32 0.0, %v3217
          %v3219 = vpop.f32.mrb[0].mxu0
          %3220 = vmatprep.mubr.f32.mxu0 %v3087
          %3221 = vmatmul.mubr.f32.gmra.mrb[0].mxu0 %v3083
          %v3222 = vpop.f32.mrb[0].mxu0
          %v3223 = vadd.f32 0.0, %v3222
          %v3224 = vpop.f32.mrb[0].mxu0
          %3225 = vdwg.mxu0
          %3226 = vmatprep.subr.mxu0 0.0
          %3227 = vmatpush1.msra.mxu0 %v3121
          %3228 = vmatprep.subr.mxu0 0.0
          %3229 = vmatpush1.msra.mxu0 %v3122
          %3230 = vmatprep.subr.mxu0 0.0
          %3231 = vmatpush1.msra.mxu0 %v3123
          %3232 = vmatprep.subr.mxu0 0.0
          %3233 = vmatpush1.msra.mxu0 %v3124
          %3234 = vmatprep.subr.mxu0 0.0
          %3235 = vmatpush1.msra.mxu0 %v3125
          %3236 = vmatprep.subr.mxu0 0.0
          %3237 = vmatpush1.msra.mxu0 %v3126
          %3238 = vmatprep.subr.mxu0 0.0
          %3239 = vmatpush1.msra.mxu0 %v3127
          %3240 = vmatprep.subr.mxu0 0.0
          %3241 = vmatpush1.msra.mxu0 %v3128
          %3242 = vmatprep.subr.mxu0 0.0
          %3243 = vmatpush1.msra.mxu0 0.0
          %3244 = vmatprep.subr.mxu0 0.0
          %3245 = vmatpush1.msra.mxu0 0.0
          %3246 = vmatprep.subr.mxu0 0.0
          %3247 = vmatpush1.msra.mxu0 0.0
          %3248 = vmatprep.subr.mxu0 0.0
          %3249 = vmatpush1.msra.mxu0 0.0
          %3250 = vmatprep.subr.mxu0 0.0
          %3251 = vmatpush1.msra.mxu0 0.0
          %3252 = vmatprep.subr.mxu0 0.0
          %3253 = vmatpush1.msra.mxu0 0.0
          %3254 = vmatprep.subr.mxu0 0.0
          %3255 = vmatpush1.msra.mxu0 0.0
          %3256 = vmatprep.subr.mxu0 0.0
          %3257 = vmatpush1.msra.mxu0 0.0
          %3258 = vmatprep.subr.mxu0 0.0
          %3259 = vmatpush1.msra.mxu0 0.0
          %3260 = vmatprep.subr.mxu0 0.0
          %3261 = vmatpush1.msra.mxu0 0.0
          %3262 = vmatprep.subr.mxu0 0.0
          %3263 = vmatpush1.msra.mxu0 0.0
          %3264 = vmatprep.subr.mxu0 0.0
          %3265 = vmatpush1.msra.mxu0 0.0
          %3266 = vmatprep.subr.mxu0 0.0
          %3267 = vmatpush1.msra.mxu0 0.0
          %3268 = vmatprep.subr.mxu0 0.0
          %3269 = vmatpush1.msra.mxu0 0.0
          %3270 = vmatprep.subr.mxu0 0.0
          %3271 = vmatpush1.msra.mxu0 0.0
          %3272 = vmatprep.subr.mxu0 0.0
          %3273 = vmatpush1.msra.mxu0 0.0
          %3274 = vmatprep.subr.mxu0 0.0
          %3275 = vmatpush1.msra.mxu0 0.0
          %3276 = vmatprep.subr.mxu0 0.0
          %3277 = vmatpush1.msra.mxu0 0.0
          %3278 = vmatprep.subr.mxu0 0.0
          %3279 = vmatpush1.msra.mxu0 0.0
          %3280 = vmatprep.subr.mxu0 0.0
          %3281 = vmatpush1.msra.mxu0 0.0
          %3282 = vmatprep.subr.mxu0 0.0
          %3283 = vmatpush1.msra.mxu0 0.0
          %3284 = vmatprep.subr.mxu0 0.0
          %3285 = vmatpush1.msra.mxu0 0.0
          %3286 = vmatprep.subr.mxu0 0.0
          %3287 = vmatpush1.msra.mxu0 0.0
          %3288 = vmatprep.subr.mxu0 0.0
          %3289 = vmatpush1.msra.mxu0 0.0
          %3290 = vmatprep.mubr.f32.mxu0 0.0
          %3291 = vmatmul.mubr.f32.gmra.mrb[0].mxu0 %v3130
          %v3292 = vpop.f32.mrb[0].mxu0
          %v3293 = vadd.f32 %v3208, %v3292
          %v3294 = vpop.f32.mrb[0].mxu0
          %3295 = vmatprep.mubr.f32.mxu0 0.0
          %3296 = vmatmul.mubr.f32.gmra.mrb[0].mxu0 %v3133
          %v3297 = vpop.f32.mrb[0].mxu0
          %v3298 = vadd.f32 %v3213, %v3297
          %v3299 = vpop.f32.mrb[0].mxu0
          %3300 = vmatprep.mubr.f32.mxu0 0.0
          %3301 = vmatmul.mubr.f32.gmra.mrb[0].mxu0 %v3136
          %v3302 = vpop.f32.mrb[0].mxu0
          %v3303 = vadd.f32 %v3218, %v3302
          %v3304 = vpop.f32.mrb[0].mxu0
          %3305 = vmatprep.mubr.f32.mxu0 0.0
          %3306 = vmatmul.mubr.f32.gmra.mrb[0].mxu0 %v3139
          %v3307 = vpop.f32.mrb[0].mxu0
          %v3308 = vadd.f32 %v3223, %v3307
          %v3309 = vpop.f32.mrb[0].mxu0
          %3310 = vdwg.mxu0
          %v3311 = vadd.f32 %v3021, %v3293
          %v3312 = vadd.f32 %v3022, %v3298
          %v3313 = vadd.f32 %v3023, %v3303
          %v3314 = vadd.f32 %v3024, %v3308
          %s3315 = sadd.s32 %s2156, 4
          %s3316 = smul.u32 %s3315, 32
          %s3317 = scalar_lea.vmem [#allocation2], %s3316
          %v3318 = vld [vmem:[%s3317 + $0x6] sm:$0xff]
          %v3319 = vld [vmem:[%s3317 + $0xe] sm:$0xff]
          %v3320 = vld [vmem:[%s3317 + $0x26] sm:$0xff]
          %v3321 = vld [vmem:[%s3317 + $0x2e] sm:$0xff]
          %v3322 = vld [vmem:[%s3317 + $0x7] sm:$0xff]
          %v3323 = vld [vmem:[%s3317 + $0xf] sm:$0xff]
          %v3324 = vld [vmem:[%s3317 + $0x27] sm:$0xff]
          %v3325 = vld [vmem:[%s3317 + $0x2f] sm:$0xff]
          %v3326 = vld [vmem:[%s3317 + $0x8] sm:$0xff]
          %v3327 = vld [vmem:[%s3317 + $0x10] sm:$0xff]
          %v3328 = vld [vmem:[%s3317 + $0x28] sm:$0xff]
          %v3329 = vld [vmem:[%s3317 + $0x30] sm:$0xff]
          %v3330 = vld [vmem:[%s3317 + $0x9] sm:$0xff]
          %v3331 = vld [vmem:[%s3317 + $0x11] sm:$0xff]
          %v3332 = vld [vmem:[%s3317 + $0x29] sm:$0xff]
          %v3333 = vld [vmem:[%s3317 + $0x31] sm:$0xff]
          %v3334 = vld [vmem:[%s3317 + $0xa] sm:$0xff]
          %v3335 = vld [vmem:[%s3317 + $0x12] sm:$0xff]
          %v3336 = vld [vmem:[%s3317 + $0x2a] sm:$0xff]
          %v3337 = vld [vmem:[%s3317 + $0x32] sm:$0xff]
          %3342 = vrot.lane.b32.xlu0 %v3322, 64
          %v3343 = vpop.permute.xlu0 %3342
          %3344 = vrot.lane.b32.xlu0 %v3323, 64
          %v3345 = vpop.permute.xlu0 %3344
          %3346 = vrot.lane.b32.xlu0 %v3324, 64
          %v3347 = vpop.permute.xlu0 %3346
          %3348 = vrot.lane.b32.xlu0 %v3325, 64
          %v3349 = vpop.permute.xlu0 %3348
          %3358 = vrot.lane.b32.xlu0 %v3330, 64
          %v3359 = vpop.permute.xlu0 %3358
          %3360 = vrot.lane.b32.xlu0 %v3331, 64
          %v3361 = vpop.permute.xlu0 %3360
          %3362 = vrot.lane.b32.xlu0 %v3332, 64
          %v3363 = vpop.permute.xlu0 %3362
          %3364 = vrot.lane.b32.xlu0 %v3333, 64
          %v3365 = vpop.permute.xlu0 %3364
          %v3370 = vsel %vm276, %v3318, %v3343
          %v3371 = vsel %vm276, %v3319, %v3345
          %v3372 = vsel %vm276, %v3320, %v3347
          %v3373 = vsel %vm276, %v3321, %v3349
          %v3374 = vsel %vm276, %v3326, %v3359
          %v3375 = vsel %vm276, %v3327, %v3361
          %v3376 = vsel %vm276, %v3328, %v3363
          %v3377 = vsel %vm276, %v3329, %v3365
          %s3378 = scalar_lea.vmem %s3, 1280
          %v3379 = vld [vmem:[%s3378] sm:$0xff]
          %v3380 = vld [vmem:[%s3378 + $0x8] sm:$0xff]
          %v3381 = vld [vmem:[%s3378 + $0x10] sm:$0xff]
          %v3382 = vld [vmem:[%s3378 + $0x18] sm:$0xff]
          %v3383 = vld [vmem:[%s3378 + $0x20] sm:$0xff]
          %v3384 = vld [vmem:[%s3378 + $0x28] sm:$0xff]
          %v3385 = vld [vmem:[%s3378 + $0x30] sm:$0xff]
          %v3386 = vld [vmem:[%s3378 + $0x38] sm:$0xff]
          %v3387 = vld [vmem:[%s3378 + $0x40] sm:$0xff]
          %v3388 = vld [vmem:[%s3378 + $0x48] sm:$0xff]
          %v3389 = vld [vmem:[%s3378 + $0x50] sm:$0xff]
          %v3390 = vld [vmem:[%s3378 + $0x58] sm:$0xff]
          %v3391 = vld [vmem:[%s3378 + $0x60] sm:$0xff]
          %v3392 = vld [vmem:[%s3378 + $0x68] sm:$0xff]
          %v3393 = vld [vmem:[%s3378 + $0x70] sm:$0xff]
          %v3394 = vld [vmem:[%s3378 + $0x78] sm:$0xff]
          %v3395 = vld [vmem:[%s3378 + $0x80] sm:$0xff]
          %v3396 = vld [vmem:[%s3378 + $0x88] sm:$0xff]
          %v3397 = vld [vmem:[%s3378 + $0x90] sm:$0xff]
          %v3398 = vld [vmem:[%s3378 + $0x98] sm:$0xff]
          %v3399 = vld [vmem:[%s3378 + $0xa0] sm:$0xff]
          %v3400 = vld [vmem:[%s3378 + $0xa8] sm:$0xff]
          %v3401 = vld [vmem:[%s3378 + $0xb0] sm:$0xff]
          %v3402 = vld [vmem:[%s3378 + $0xb8] sm:$0xff]
          %v3403 = vld [vmem:[%s3378 + $0xc0] sm:$0xff]
          %v3404 = vld [vmem:[%s3378 + $0xc8] sm:$0xff]
          %v3405 = vld [vmem:[%s3378 + $0xd0] sm:$0xff]
          %v3406 = vld [vmem:[%s3378 + $0xd8] sm:$0xff]
          %v3407 = vld [vmem:[%s3378 + $0xe0] sm:$0xff]
          %v3408 = vld [vmem:[%s3378 + $0xe8] sm:$0xff]
          %v3409 = vld [vmem:[%s3378 + $0xf0] sm:$0xff]
          %v3410 = vld [vmem:[%s3378 + $0xf8] sm:$0xff]
          %v3411 = vld [vmem:[%s3378 + $0x100] sm:$0xff]
          %v3412 = vld [vmem:[%s3378 + $0x108] sm:$0xff]
          %v3413 = vld [vmem:[%s3378 + $0x110] sm:$0xff]
          %v3414 = vld [vmem:[%s3378 + $0x118] sm:$0xff]
          %v3415 = vld [vmem:[%s3378 + $0x120] sm:$0xff]
          %v3416 = vld [vmem:[%s3378 + $0x128] sm:$0xff]
          %v3417 = vld [vmem:[%s3378 + $0x130] sm:$0xff]
          %v3418 = vld [vmem:[%s3378 + $0x138] sm:$0xff]
          %v3420 = vsel %vm276, %v3334, 0
          %v3423 = vsel %vm276, %v3335, 0
          %v3426 = vsel %vm276, %v3336, 0
          %v3429 = vsel %vm276, %v3337, 0
          %3431 = vmatprep.subr.mxu0 0.0
          %3432 = vmatpush1.msra.mxu0 %v3379
          %3433 = vmatprep.subr.mxu0 0.0
          %3434 = vmatpush1.msra.mxu0 %v3380
          %3435 = vmatprep.subr.mxu0 0.0
          %3436 = vmatpush1.msra.mxu0 %v3381
          %3437 = vmatprep.subr.mxu0 0.0
          %3438 = vmatpush1.msra.mxu0 %v3382
          %3439 = vmatprep.subr.mxu0 0.0
          %3440 = vmatpush1.msra.mxu0 %v3383
          %3441 = vmatprep.subr.mxu0 0.0
          %3442 = vmatpush1.msra.mxu0 %v3384
          %3443 = vmatprep.subr.mxu0 0.0
          %3444 = vmatpush1.msra.mxu0 %v3385
          %3445 = vmatprep.subr.mxu0 0.0
          %3446 = vmatpush1.msra.mxu0 %v3386
          %3447 = vmatprep.subr.mxu0 0.0
          %3448 = vmatpush1.msra.mxu0 %v3387
          %3449 = vmatprep.subr.mxu0 0.0
          %3450 = vmatpush1.msra.mxu0 %v3388
          %3451 = vmatprep.subr.mxu0 0.0
          %3452 = vmatpush1.msra.mxu0 %v3389
          %3453 = vmatprep.subr.mxu0 0.0
          %3454 = vmatpush1.msra.mxu0 %v3390
          %3455 = vmatprep.subr.mxu0 0.0
          %3456 = vmatpush1.msra.mxu0 %v3391
          %3457 = vmatprep.subr.mxu0 0.0
          %3458 = vmatpush1.msra.mxu0 %v3392
          %3459 = vmatprep.subr.mxu0 0.0
          %3460 = vmatpush1.msra.mxu0 %v3393
          %3461 = vmatprep.subr.mxu0 0.0
          %3462 = vmatpush1.msra.mxu0 %v3394
          %3463 = vmatprep.subr.mxu0 0.0
          %3464 = vmatpush1.msra.mxu0 %v3395
          %3465 = vmatprep.subr.mxu0 0.0
          %3466 = vmatpush1.msra.mxu0 %v3396
          %3467 = vmatprep.subr.mxu0 0.0
          %3468 = vmatpush1.msra.mxu0 %v3397
          %3469 = vmatprep.subr.mxu0 0.0
          %3470 = vmatpush1.msra.mxu0 %v3398
          %3471 = vmatprep.subr.mxu0 0.0
          %3472 = vmatpush1.msra.mxu0 %v3399
          %3473 = vmatprep.subr.mxu0 0.0
          %3474 = vmatpush1.msra.mxu0 %v3400
          %3475 = vmatprep.subr.mxu0 0.0
          %3476 = vmatpush1.msra.mxu0 %v3401
          %3477 = vmatprep.subr.mxu0 0.0
          %3478 = vmatpush1.msra.mxu0 %v3402
          %3479 = vmatprep.subr.mxu0 0.0
          %3480 = vmatpush1.msra.mxu0 %v3403
          %3481 = vmatprep.subr.mxu0 0.0
          %3482 = vmatpush1.msra.mxu0 %v3404
          %3483 = vmatprep.subr.mxu0 0.0
          %3484 = vmatpush1.msra.mxu0 %v3405
          %3485 = vmatprep.subr.mxu0 0.0
          %3486 = vmatpush1.msra.mxu0 %v3406
          %3487 = vmatprep.subr.mxu0 0.0
          %3488 = vmatpush1.msra.mxu0 %v3407
          %3489 = vmatprep.subr.mxu0 0.0
          %3490 = vmatpush1.msra.mxu0 %v3408
          %3491 = vmatprep.subr.mxu0 0.0
          %3492 = vmatpush1.msra.mxu0 %v3409
          %3493 = vmatprep.subr.mxu0 0.0
          %3494 = vmatpush1.msra.mxu0 %v3410
          %3495 = vmatprep.mubr.f32.mxu0 %v3374
          %3496 = vmatmul.mubr.f32.gmra.mrb[0].mxu0 %v3370
          %v3497 = vpop.f32.mrb[0].mxu0
          %v3498 = vadd.f32 0.0, %v3497
          %v3499 = vpop.f32.mrb[0].mxu0
          %3500 = vmatprep.mubr.f32.mxu0 %v3375
          %3501 = vmatmul.mubr.f32.gmra.mrb[0].mxu0 %v3371
          %v3502 = vpop.f32.mrb[0].mxu0
          %v3503 = vadd.f32 0.0, %v3502
          %v3504 = vpop.f32.mrb[0].mxu0
          %3505 = vmatprep.mubr.f32.mxu0 %v3376
          %3506 = vmatmul.mubr.f32.gmra.mrb[0].mxu0 %v3372
          %v3507 = vpop.f32.mrb[0].mxu0
          %v3508 = vadd.f32 0.0, %v3507
          %v3509 = vpop.f32.mrb[0].mxu0
          %3510 = vmatprep.mubr.f32.mxu0 %v3377
          %3511 = vmatmul.mubr.f32.gmra.mrb[0].mxu0 %v3373
          %v3512 = vpop.f32.mrb[0].mxu0
          %v3513 = vadd.f32 0.0, %v3512
          %v3514 = vpop.f32.mrb[0].mxu0
          %3515 = vdwg.mxu0
          %3516 = vmatprep.subr.mxu0 0.0
          %3517 = vmatpush1.msra.mxu0 %v3411
          %3518 = vmatprep.subr.mxu0 0.0
          %3519 = vmatpush1.msra.mxu0 %v3412
          %3520 = vmatprep.subr.mxu0 0.0
          %3521 = vmatpush1.msra.mxu0 %v3413
          %3522 = vmatprep.subr.mxu0 0.0
          %3523 = vmatpush1.msra.mxu0 %v3414
          %3524 = vmatprep.subr.mxu0 0.0
          %3525 = vmatpush1.msra.mxu0 %v3415
          %3526 = vmatprep.subr.mxu0 0.0
          %3527 = vmatpush1.msra.mxu0 %v3416
          %3528 = vmatprep.subr.mxu0 0.0
          %3529 = vmatpush1.msra.mxu0 %v3417
          %3530 = vmatprep.subr.mxu0 0.0
          %3531 = vmatpush1.msra.mxu0 %v3418
          %3532 = vmatprep.subr.mxu0 0.0
          %3533 = vmatpush1.msra.mxu0 0.0
          %3534 = vmatprep.subr.mxu0 0.0
          %3535 = vmatpush1.msra.mxu0 0.0
          %3536 = vmatprep.subr.mxu0 0.0
          %3537 = vmatpush1.msra.mxu0 0.0
          %3538 = vmatprep.subr.mxu0 0.0
          %3539 = vmatpush1.msra.mxu0 0.0
          %3540 = vmatprep.subr.mxu0 0.0
          %3541 = vmatpush1.msra.mxu0 0.0
          %3542 = vmatprep.subr.mxu0 0.0
          %3543 = vmatpush1.msra.mxu0 0.0
          %3544 = vmatprep.subr.mxu0 0.0
          %3545 = vmatpush1.msra.mxu0 0.0
          %3546 = vmatprep.subr.mxu0 0.0
          %3547 = vmatpush1.msra.mxu0 0.0
          %3548 = vmatprep.subr.mxu0 0.0
          %3549 = vmatpush1.msra.mxu0 0.0
          %3550 = vmatprep.subr.mxu0 0.0
          %3551 = vmatpush1.msra.mxu0 0.0
          %3552 = vmatprep.subr.mxu0 0.0
          %3553 = vmatpush1.msra.mxu0 0.0
          %3554 = vmatprep.subr.mxu0 0.0
          %3555 = vmatpush1.msra.mxu0 0.0
          %3556 = vmatprep.subr.mxu0 0.0
          %3557 = vmatpush1.msra.mxu0 0.0
          %3558 = vmatprep.subr.mxu0 0.0
          %3559 = vmatpush1.msra.mxu0 0.0
          %3560 = vmatprep.subr.mxu0 0.0
          %3561 = vmatpush1.msra.mxu0 0.0
          %3562 = vmatprep.subr.mxu0 0.0
          %3563 = vmatpush1.msra.mxu0 0.0
          %3564 = vmatprep.subr.mxu0 0.0
          %3565 = vmatpush1.msra.mxu0 0.0
          %3566 = vmatprep.subr.mxu0 0.0
          %3567 = vmatpush1.msra.mxu0 0.0
          %3568 = vmatprep.subr.mxu0 0.0
          %3569 = vmatpush1.msra.mxu0 0.0
          %3570 = vmatprep.subr.mxu0 0.0
          %3571 = vmatpush1.msra.mxu0 0.0
          %3572 = vmatprep.subr.mxu0 0.0
          %3573 = vmatpush1.msra.mxu0 0.0
          %3574 = vmatprep.subr.mxu0 0.0
          %3575 = vmatpush1.msra.mxu0 0.0
          %3576 = vmatprep.subr.mxu0 0.0
          %3577 = vmatpush1.msra.mxu0 0.0
          %3578 = vmatprep.subr.mxu0 0.0
          %3579 = vmatpush1.msra.mxu0 0.0
          %3580 = vmatprep.mubr.f32.mxu0 0.0
          %3581 = vmatmul.mubr.f32.gmra.mrb[0].mxu0 %v3420
          %v3582 = vpop.f32.mrb[0].mxu0
          %v3583 = vadd.f32 %v3498, %v3582
          %v3584 = vpop.f32.mrb[0].mxu0
          %3585 = vmatprep.mubr.f32.mxu0 0.0
          %3586 = vmatmul.mubr.f32.gmra.mrb[0].mxu0 %v3423
          %v3587 = vpop.f32.mrb[0].mxu0
          %v3588 = vadd.f32 %v3503, %v3587
          %v3589 = vpop.f32.mrb[0].mxu0
          %3590 = vmatprep.mubr.f32.mxu0 0.0
          %3591 = vmatmul.mubr.f32.gmra.mrb[0].mxu0 %v3426
          %v3592 = vpop.f32.mrb[0].mxu0
          %v3593 = vadd.f32 %v3508, %v3592
          %v3594 = vpop.f32.mrb[0].mxu0
          %3595 = vmatprep.mubr.f32.mxu0 0.0
          %3596 = vmatmul.mubr.f32.gmra.mrb[0].mxu0 %v3429
          %v3597 = vpop.f32.mrb[0].mxu0
          %v3598 = vadd.f32 %v3513, %v3597
          %v3599 = vpop.f32.mrb[0].mxu0
          %3600 = vdwg.mxu0
          %v3601 = vadd.f32 %v3311, %v3583
          %v3602 = vadd.f32 %v3312, %v3588
          %v3603 = vadd.f32 %v3313, %v3593
          %v3604 = vadd.f32 %v3314, %v3598
          %v3605 = vld [vmem:[%s4] sm:$0x1]
          %v3607 = vlaneseq
          %v3608 = vshrl.u32 %v3607, 7
          %v3609 = vsub.s32 0, %v3608
          %v3610 = vrot.slane %v3605, %v3609
          %v3612 = vadd.f32 %v3601, %v3610
          %v3613 = vadd.f32 %v3602, %v3610
          %v3614 = vadd.f32 %v3603, %v3610
          %v3615 = vadd.f32 %v3604, %v3610
          %v3616 = vmax.f32 %v3612, 0.0
          %v3617 = vmax.f32 %v3613, 0.0
          %v3618 = vmax.f32 %v3614, 0.0
          %v3619 = vmax.f32 %v3615, 0.0
          %v3620 = vmax.f32 %v3616, %v3618
          %v3621 = vmax.f32 %v3617, %v3619
          %vm3622 = vcmask 261120
          %3623 = vst.msk [vmem:[#allocation4] sm:$0xff] %vm3622, %v3620
          %3624 = vst.msk [vmem:[#allocation4 + $0x8] sm:$0xff] %vm3622, %v3621
          %v3625 = vld [vmem:[#allocation4] ss:$2 sm:$0xff]
          %s3626 = scalar_lea.vmem [#allocation4], 1
          %v3627 = vld [vmem:[%s3626] ss:$2 sm:$0xff]
          %v3628 = vmax.f32 %v3625, %v3627
          %v3630 = vrot.slane %v3628, 1
          %3631 = vrot.lane.b32.xlu0 %v3630, 32
          %v3632 = vpop.permute.xlu0 %3631
          %v3634 = vrot.slane %v3628, 2
          %3635 = vrot.lane.b32.xlu0 %v3634, 64
          %v3636 = vpop.permute.xlu0 %3635
          %v3638 = vrot.slane %v3628, 3
          %3639 = vrot.lane.b32.xlu0 %v3638, 96
          %v3640 = vpop.permute.xlu0 %3639
          %v3642 = vrot.slane %v3628, 4
          %v3644 = vrot.slane %v3628, 5
          %3645 = vrot.lane.b32.xlu0 %v3644, 32
          %v3646 = vpop.permute.xlu0 %3645
          %v3648 = vrot.slane %v3628, 6
          %3649 = vrot.lane.b32.xlu0 %v3648, 64
          %v3650 = vpop.permute.xlu0 %3649
          %v3652 = vrot.slane %v3628, 7
          %3653 = vrot.lane.b32.xlu0 %v3652, 96
          %v3654 = vpop.permute.xlu0 %3653
          %v3656 = vsel %vm3622, %v3628, %v3632
          %v3657 = vsel %vm276, %v3656, %v3636
          %vm3658 = vcmask 785408
          %v3659 = vsel %vm3658, %v3657, %v3640
          %v3660 = vsel %vm3622, %v3642, %v3646
          %v3661 = vsel %vm276, %v3660, %v3650
          %v3662 = vsel %vm3658, %v3661, %v3654
          %s3663 = smul.u32 %s2150, 256
          %s3664 = scalar_lea.vmem %s5, %s3663
          %v3665 = vld [vmem:[%s3664] sm:$0xff]
          %v3666 = vld [vmem:[%s3664 + $0x8] sm:$0xff]
          %v3667 = vld [vmem:[%s3664 + $0x10] sm:$0xff]
          %v3668 = vld [vmem:[%s3664 + $0x18] sm:$0xff]
          %v3669 = vld [vmem:[%s3664 + $0x20] sm:$0xff]
          %v3670 = vld [vmem:[%s3664 + $0x28] sm:$0xff]
          %v3671 = vld [vmem:[%s3664 + $0x30] sm:$0xff]
          %v3672 = vld [vmem:[%s3664 + $0x38] sm:$0xff]
          %v3673 = vld [vmem:[%s3664 + $0x40] sm:$0xff]
          %v3674 = vld [vmem:[%s3664 + $0x48] sm:$0xff]
          %v3675 = vld [vmem:[%s3664 + $0x50] sm:$0xff]
          %v3676 = vld [vmem:[%s3664 + $0x58] sm:$0xff]
          %v3677 = vld [vmem:[%s3664 + $0x60] sm:$0xff]
          %v3678 = vld [vmem:[%s3664 + $0x68] sm:$0xff]
          %v3679 = vld [vmem:[%s3664 + $0x70] sm:$0xff]
          %v3680 = vld [vmem:[%s3664 + $0x78] sm:$0xff]
          %v3681 = vld [vmem:[%s3664 + $0x80] sm:$0xff]
          %v3682 = vld [vmem:[%s3664 + $0x88] sm:$0xff]
          %v3683 = vld [vmem:[%s3664 + $0x90] sm:$0xff]
          %v3684 = vld [vmem:[%s3664 + $0x98] sm:$0xff]
          %v3685 = vld [vmem:[%s3664 + $0xa0] sm:$0xff]
          %v3686 = vld [vmem:[%s3664 + $0xa8] sm:$0xff]
          %v3687 = vld [vmem:[%s3664 + $0xb0] sm:$0xff]
          %v3688 = vld [vmem:[%s3664 + $0xb8] sm:$0xff]
          %v3689 = vld [vmem:[%s3664 + $0xc0] sm:$0xff]
          %v3690 = vld [vmem:[%s3664 + $0xc8] sm:$0xff]
          %v3691 = vld [vmem:[%s3664 + $0xd0] sm:$0xff]
          %v3692 = vld [vmem:[%s3664 + $0xd8] sm:$0xff]
          %v3693 = vld [vmem:[%s3664 + $0xe0] sm:$0xff]
          %v3694 = vld [vmem:[%s3664 + $0xe8] sm:$0xff]
          %v3695 = vld [vmem:[%s3664 + $0xf0] sm:$0xff]
          %v3696 = vld [vmem:[%s3664 + $0xf8] sm:$0xff]
          %3697 = vmatprep.subr.mxu0 0.0
          %3698 = vmatpush1.msra.mxu0 %v3665
          %3699 = vmatprep.subr.mxu0 0.0
          %3700 = vmatpush1.msra.mxu0 %v3666
          %3701 = vmatprep.subr.mxu0 0.0
          %3702 = vmatpush1.msra.mxu0 %v3667
          %3703 = vmatprep.subr.mxu0 0.0
          %3704 = vmatpush1.msra.mxu0 %v3668
          %3705 = vmatprep.subr.mxu0 0.0
          %3706 = vmatpush1.msra.mxu0 %v3669
          %3707 = vmatprep.subr.mxu0 0.0
          %3708 = vmatpush1.msra.mxu0 %v3670
          %3709 = vmatprep.subr.mxu0 0.0
          %3710 = vmatpush1.msra.mxu0 %v3671
          %3711 = vmatprep.subr.mxu0 0.0
          %3712 = vmatpush1.msra.mxu0 %v3672
          %3713 = vmatprep.subr.mxu0 0.0
          %3714 = vmatpush1.msra.mxu0 %v3673
          %3715 = vmatprep.subr.mxu0 0.0
          %3716 = vmatpush1.msra.mxu0 %v3674
          %3717 = vmatprep.subr.mxu0 0.0
          %3718 = vmatpush1.msra.mxu0 %v3675
          %3719 = vmatprep.subr.mxu0 0.0
          %3720 = vmatpush1.msra.mxu0 %v3676
          %3721 = vmatprep.subr.mxu0 0.0
          %3722 = vmatpush1.msra.mxu0 %v3677
          %3723 = vmatprep.subr.mxu0 0.0
          %3724 = vmatpush1.msra.mxu0 %v3678
          %3725 = vmatprep.subr.mxu0 0.0
          %3726 = vmatpush1.msra.mxu0 %v3679
          %3727 = vmatprep.subr.mxu0 0.0
          %3728 = vmatpush1.msra.mxu0 %v3680
          %3729 = vmatprep.subr.mxu0 0.0
          %3730 = vmatpush1.msra.mxu0 %v3681
          %3731 = vmatprep.subr.mxu0 0.0
          %3732 = vmatpush1.msra.mxu0 %v3682
          %3733 = vmatprep.subr.mxu0 0.0
          %3734 = vmatpush1.msra.mxu0 %v3683
          %3735 = vmatprep.subr.mxu0 0.0
          %3736 = vmatpush1.msra.mxu0 %v3684
          %3737 = vmatprep.subr.mxu0 0.0
          %3738 = vmatpush1.msra.mxu0 %v3685
          %3739 = vmatprep.subr.mxu0 0.0
          %3740 = vmatpush1.msra.mxu0 %v3686
          %3741 = vmatprep.subr.mxu0 0.0
          %3742 = vmatpush1.msra.mxu0 %v3687
          %3743 = vmatprep.subr.mxu0 0.0
          %3744 = vmatpush1.msra.mxu0 %v3688
          %3745 = vmatprep.subr.mxu0 0.0
          %3746 = vmatpush1.msra.mxu0 %v3689
          %3747 = vmatprep.subr.mxu0 0.0
          %3748 = vmatpush1.msra.mxu0 %v3690
          %3749 = vmatprep.subr.mxu0 0.0
          %3750 = vmatpush1.msra.mxu0 %v3691
          %3751 = vmatprep.subr.mxu0 0.0
          %3752 = vmatpush1.msra.mxu0 %v3692
          %3753 = vmatprep.subr.mxu0 0.0
          %3754 = vmatpush1.msra.mxu0 %v3693
          %3755 = vmatprep.subr.mxu0 0.0
          %3756 = vmatpush1.msra.mxu0 %v3694
          %3757 = vmatprep.subr.mxu0 0.0
          %3758 = vmatpush1.msra.mxu0 %v3695
          %3759 = vmatprep.subr.mxu0 0.0
          %3760 = vmatpush1.msra.mxu0 %v3696
          %3761 = vmatprep.mubr.f32.mxu0 %v3662
          %3762 = vmatmul.mubr.f32.gmra.mrb[0].mxu0 %v3659
          %v3763 = vpop.f32.mrb[0].mxu0
          %v3764 = vadd.f32 0.0, %v3763
          %v3765 = vpop.f32.mrb[0].mxu0
          %3766 = vdwg.mxu0
          %v3767 = vadd.f32 %v2155, %v3764
        $region60: #{cnn_forward.1} parent=47 // loop_footer
          %s2154 = sadd.s32 1, %s2150
        $region61: #{cnn_forward.1} parent=47 // loop_footer_branch
          %2149 = sbr.rel target = $region57
        $region62: #{cnn_forward.1} parent=47 // loop_exit
          _
        %vm3768 = vcmask 286720
        %v3769 = vsel %vm3768, %v2155, -inf
        %3770 = vmax.xlane.f32.xlu0 %v3769
        %v3771 = vpop.xlane.xlu0 %3770
        %v3772 = vsub.f32 %v2155, %v3771
        %v3773 = vmul.f32 %v3772, 1.442695
        %v3774 = vpow.pop %v3773
        %v3775 = vsel %vm3768, %v3774, 0.0
        %3776 = vadd.xlane.f32.xlu0 %v3775
        %v3777 = vpop.xlane.xlu0 %3776
        %v3778 = vrcp.pop %v3777
        %v3779 = vmul.f32 %v3774, %v3778
        %3780 = vst.msk [vmem:[%s270] sm:$0x1] %vm3768, %v3779
        %s3781 = sand.u32 %s181, 1
        %s3782 = scalar_lea.sflag [#allocation6], %s3781
        %s3783 = sand.u32 %s181, 1
        %s3784 = scalar_lea.vmem [#allocation5], %s3783
        // Predicated region
        $region63: #{cnn_forward.1} parent=47 // pred_check
          %p3785 = pneg %p191
        $region64: #{cnn_forward.1} parent=47 // pred_check_branch
          %3787 = sbr.rel (%p3785) target = $region66
        $region65: #{cnn_forward.1} parent=47 // pred_region
          %s3789 = ssub.s32 16, 16
          %3790 = vsyncadd %s3782, %s3789
          %s3791 = smul.addr %s21, 16
          %s3792 = scalar_lea.hbm %s7, %s3791
          %s3794 = sshll.u32 %s3784, 4
          %s3795 = int_to_ptr.vmem [resolvable:$true] %s3794
          %3797 = dma.vmem_to_hbm [thread:$0]  %s3795, 16, %s3792, %s3782
        $region66: #{cnn_forward.1} parent=47 // pred_fallthru
          _
      $region48: #{cnn_forward.1} parent=5 // pred_fallthru
        _
      %p3798 = scmp.le.s32.totalorder 2, %s16
      // Predicated region
      $region67: #{cnn_forward.1} parent=5 // pred_check
        %p3799 = pneg %p3798
      $region68: #{cnn_forward.1} parent=5 // pred_check_branch
        %3801 = sbr.rel (%p3799) target = $region70
      $region69: #{cnn_forward.1} parent=5 // pred_region
        %s3802 = ssub.s32 %s16, 2
        // Predicated region
        $region71: #{cnn_forward.1} parent=69 // pred_check
          %p3803 = pneg %p197
        $region72: #{cnn_forward.1} parent=69 // pred_check_branch
          %3805 = sbr.rel (%p3803) target = $region74
        $region73: #{cnn_forward.1} parent=69 // pred_region
          %s3806 = sand.u32 %s182, 1
          %s3807 = scalar_lea.sflag [#allocation6], %s3806
          %s3808 = sand.u32 %s182, 1
          %s3809 = scalar_lea.vmem [#allocation5], %s3808
          %3810 = dma.done %s3807, 16
        $region74: #{cnn_forward.1} parent=69 // pred_fallthru
          _
      $region70: #{cnn_forward.1} parent=5 // pred_fallthru
        _
    $region6: #{cnn_forward.1} parent=1 // loop_footer
      %s20 = sadd.s32 1, %s16
    $region7: #{cnn_forward.1} parent=1 // loop_footer_branch
      %15 = sbr.rel target = $region3
    $region8: #{cnn_forward.1} parent=1 // loop_exit
      _
    %3811 = vsyncpa [#allocation6], 1
    %s3812 = scalar_lea.sflag [#allocation6], 1
    %3813 = vsyncpa %s3812, 1

</llo_original>
